<compile_context>
chip_gen: v6e
topology: v6e:2x2x1
jax: 0.10.0
libtpu: 0.0.40
codegen_flags: <defaults>
</compile_context>

<pallas_src>
import jax
import jax.numpy as jnp
from jax.experimental import pallas as pl
from jax.experimental.pallas import tpu as pltpu


# Matmul operand dtype; accumulation is always f32 (preferred_element_type).
COMPUTE_DTYPE = jnp.float32


def _mm(a, b):
    return jnp.dot(a.astype(COMPUTE_DTYPE), b.astype(COMPUTE_DTYPE),
                   preferred_element_type=jnp.float32)


def _layer_norm(h, gamma, beta, eps=1e-5):
    # Single-pass statistics (sum & sum-of-squares).  Slightly less robust than
    # the two-pass reference if activation magnitudes grow, but exact enough
    # here (ReLU inputs, eps=1e-5) and one dependent reduction cheaper on the
    # serial per-step path.
    n = h.shape[-1]
    s = jnp.sum(h, axis=-1, keepdims=True)
    ss = jnp.sum(h * h, axis=-1, keepdims=True)
    mean = s * (1.0 / n)
    var = ss * (1.0 / n) - mean * mean
    return (h - mean) * jax.lax.rsqrt(var + eps) * gamma + beta


# ----------------------------- fused kernel -------------------------------- #

def _fused_delayed_mlp_kernel(
        x_ref,                                                     # (T, Bt, D)
        wgi1_ref, bgi1_ref, wgb1_ref, bgb1_ref, wl1_ref, bl1_ref, g1_ref, be1_ref,
        wgi2_ref, bgi2_ref, wgb2_ref, bgb2_ref, wl2_ref, bl2_ref, g2_ref, be2_ref,
        wf_ref, bf_ref,
        out_ref,                                                   # (T, Bt, O)
        imm_ref,                                                   # (T, Bt, D) scratch
        h2_ref):                                                   # (T, Bt, H) scratch
    T, Bt, D = x_ref.shape
    H = wl1_ref.shape[1]
    O = wf_ref.shape[1]

    # ---- Hoist all weight/bias loads and their broadcasts out of the unrolled
    #      time loop (one vld + one broadcast each, reused by every iteration).
    wgb1 = wgb1_ref[...]
    wl1 = wl1_ref[...]
    wgi2 = wgi2_ref[...]
    wgb2 = wgb2_ref[...]
    wl2 = wl2_ref[...]
    bgb1 = jnp.broadcast_to(bgb1_ref[...], (Bt, D))
    bl1 = jnp.broadcast_to(bl1_ref[...], (Bt, H))
    g1 = jnp.broadcast_to(g1_ref[...], (Bt, H))
    be1 = jnp.broadcast_to(be1_ref[...], (Bt, H))
    bgi2 = jnp.broadcast_to(bgi2_ref[...], (Bt, H))
    bgb2 = jnp.broadcast_to(bgb2_ref[...], (Bt, H))
    bl2 = jnp.broadcast_to(bl2_ref[...], (Bt, H))
    g2 = jnp.broadcast_to(g2_ref[...], (Bt, H))
    be2 = jnp.broadcast_to(be2_ref[...], (Bt, H))

    # ---- Layer-1 input gate depends only on x: ONE batched (T*Bt, D) matmul
    #      hoisted out of the recurrence.  delayed = x - immediate, so only the
    #      immediate contribution is kept (small VMEM scratch, ref-indexed per
    #      step to stay on proven lowering paths).
    x2d = x_ref[...].reshape(T * Bt, D)
    dw1 = jax.nn.sigmoid(_mm(x2d, wgi1_ref[...]) + bgi1_ref[...])
    imm_ref[...] = (x2d * dw1).reshape(T, Bt, D)

    def step(t, carry):
        buf1, buf2 = carry
        x_t = x_ref[t]                       # (Bt, D)
        imm1 = imm_ref[t]                    # (Bt, D)

        # ---- layer 1 recurrence
        buf1 = buf1 + (x_t - imm1)           # buffer += (1 - dw) * x
        bdw1 = jax.nn.sigmoid(_mm(buf1, wgb1) + bgb1)
        rel1 = buf1 * bdw1
        buf1 = buf1 * (1.0 - bdw1)
        h1 = jnp.maximum(_mm(imm1 + rel1, wl1) + bl1, 0.0)
        h1 = _layer_norm(h1, g1, be1)

        # ---- layer 2 (its input gate consumes the recurrent h1 -> stays in-loop)
        dw2 = jax.nn.sigmoid(_mm(h1, wgi2) + bgi2)
        imm2 = h1 * dw2
        buf2 = buf2 + (h1 - imm2)
        bdw2 = jax.nn.sigmoid(_mm(buf2, wgb2) + bgb2)
        rel2 = buf2 * bdw2
        buf2 = buf2 * (1.0 - bdw2)
        h2 = jnp.maximum(_mm(imm2 + rel2, wl2) + bl2, 0.0)
        h2_ref[t] = _layer_norm(h2, g2, be2)   # final Linear deferred
        return buf1, buf2

    buf1_0 = jnp.zeros((Bt, D), jnp.float32)
    buf2_0 = jnp.zeros((Bt, H), jnp.float32)
    # unroll=True only because T is small; use partial unroll + a T-chunk grid
    # axis (buf1/buf2 in persistent VMEM scratch) once T grows.
    jax.lax.fori_loop(0, T, step, (buf1_0, buf2_0), unroll=True)

    # ---- Final Linear hoisted out of the recurrence: one (T*Bt, H) @ (H, O)
    #      matmul, then a single dense time-major block store (no per-b copies).
    h2_all = h2_ref[...].reshape(T * Bt, H)
    y = _mm(h2_all, wf_ref[...]) + bf_ref[...]
    out_ref[...] = y.reshape(T, Bt, O)


# ----------------------------- wrapper -------------------------------------- #

def delayed_mlp_forward(x_btd, params):
    """x_btd: (B, T, input_size) -> (B, T, output_size)."""
    B, T, D = x_btd.shape
    H = params["l1"]["wl"].shape[1]
    O = params["wf"].shape[1]

    def _rup(a, m):
        return ((a + m - 1) // m) * m

    # Batch tile: multiple of 8 (f32 sublanes).  Grow Bt with B to fill the MXU
    # M-dim, but keep >= 2 grid tiles when B permits so v7x megacore can shard
    # the batch across both TensorCores (near-zero effect on v5e/v6e).
    Bp8 = _rup(B, 8)
    if Bp8 <= 8:
        Bt = Bp8
    elif Bp8 <= 256:
        Bt = min(128, _rup(pl.cdiv(Bp8, 2), 8))
    else:
        Bt = 128
    Bp = _rup(Bp8, Bt)

    x_tbd = jnp.transpose(x_btd, (1, 0, 2))     # time-major for x_ref[t] reads
    if Bp != B:
        x_tbd = jnp.pad(x_tbd, ((0, 0), (0, Bp - B), (0, 0)))

    p1, p2 = params["l1"], params["l2"]

    def w(shape):
        # Grid-invariant weight operands (block index never changes).  At these
        # sizes they are tiny; for large H on v7x (64 MiB VMEM) single-buffer
        # them via pipeline_mode and chunk T to re-derive the VMEM budget.
        return pl.BlockSpec(shape, lambda b: (0,) * len(shape))

    out_tbo = pl.pallas_call(
        _fused_delayed_mlp_kernel,
        out_shape=jax.ShapeDtypeStruct((T, Bp, O), jnp.float32),
        grid_spec=pltpu.PrefetchScalarGridSpec(
            num_scalar_prefetch=0,
            grid=(Bp // Bt,),                   # independent batch tiles
            in_specs=[
                pl.BlockSpec((T, Bt, D), lambda b: (0, b, 0)),      # x slab
                w((D, D)), w((1, D)), w((D, D)), w((1, D)),         # l1 gates
                w((D, H)), w((1, H)), w((1, H)), w((1, H)),         # l1 linear + LN
                w((H, H)), w((1, H)), w((H, H)), w((1, H)),         # l2 gates
                w((H, H)), w((1, H)), w((1, H)), w((1, H)),         # l2 linear + LN
                w((H, O)), w((1, O)),                               # final linear
            ],
            out_specs=pl.BlockSpec((T, Bt, O), lambda b: (0, b, 0)),
            scratch_shapes=[
                pltpu.VMEM((T, Bt, D), jnp.float32),   # hoisted immediate contribution
                pltpu.VMEM((T, Bt, H), jnp.float32),   # per-step h2 (final Linear deferred)
            ],
        ),
        compiler_params=pltpu.CompilerParams(
            dimension_semantics=("parallel",),          # batch tiles independent
            vmem_limit_bytes=32 * 1024 * 1024,
        ),
    )(x_tbd,
      p1["wgi"], p1["bgi"], p1["wgb"], p1["bgb"], p1["wl"], p1["bl"], p1["gamma"], p1["beta"],
      p2["wgi"], p2["bgi"], p2["wgb"], p2["bgb"], p2["wl"], p2["bl"], p2["gamma"], p2["beta"],
      params["wf"], params["bf"])

    # One XLA transpose in the wrapper instead of a strided in-kernel epilogue.
    return jnp.transpose(out_tbo, (1, 0, 2))[:B]


# ----------------------------- params / reference -------------------------- #

def _linear_init(key, fan_in, fan_out):
    k = 1.0 / jnp.sqrt(jnp.float32(fan_in))
    kw, kb = jax.random.split(key)
    w = jax.random.uniform(kw, (fan_in, fan_out), jnp.float32, -k, k)   # (in, out)
    b = jax.random.uniform(kb, (1, fan_out), jnp.float32, -k, k)
    return w, b


def make_params(key, input_size, hidden_size, output_size):
    keys = jax.random.split(key, 8)

    def dl_params(ks, d_in, d_out):
        wgi, bgi = _linear_init(ks[0], d_in, d_in)
        wgb, bgb = _linear_init(ks[1], d_in, d_in)
        wl, bl = _linear_init(ks[2], d_in, d_out)
        return dict(wgi=wgi, bgi=bgi, wgb=wgb, bgb=bgb, wl=wl, bl=bl,
                    gamma=jnp.ones((1, d_out), jnp.float32),
                    beta=jnp.zeros((1, d_out), jnp.float32))

    params = {
        "l1": dl_params(keys[0:3], input_size, hidden_size),
        "l2": dl_params(keys[3:6], hidden_size, hidden_size),
    }
    wf, bf = _linear_init(keys[6], hidden_size, output_size)
    params["wf"], params["bf"] = wf, bf
    return params


def ref_delayed_linear(x_btd, p):
    B, T, D = x_btd.shape
    buf = jnp.zeros((B, D), jnp.float32)
    outs = []
    for t in range(T):
        cur = x_btd[:, t, :]
        dw = jax.nn.sigmoid(cur @ p["wgi"] + p["bgi"][0])
        buf = buf + (1.0 - dw) * cur
        bdw = jax.nn.sigmoid(buf @ p["wgb"] + p["bgb"][0])
        rel = buf * bdw
        buf = buf * (1.0 - bdw)
        comb = cur * dw + rel
        h = jnp.maximum(comb @ p["wl"] + p["bl"][0], 0.0)
        mean = h.mean(-1, keepdims=True)
        var = ((h - mean) ** 2).mean(-1, keepdims=True)
        outs.append((h - mean) / jnp.sqrt(var + 1e-5) * p["gamma"][0] + p["beta"][0])
    return jnp.stack(outs, axis=1)


def ref_forward(x_btd, params):
    h = ref_delayed_linear(x_btd, params["l1"])
    h = ref_delayed_linear(h, params["l2"])
    return h @ params["wf"] + params["bf"][0]


# ----------------------------- main ---------------------------------------- #

if __name__ == "__main__":
    B, T, INPUT, HIDDEN, OUTPUT = 2, 8, 16, 32, 8

    key = jax.random.PRNGKey(0)
    k_params, k_x = jax.random.split(key)
    params = make_params(k_params, INPUT, HIDDEN, OUTPUT)
    x = jax.random.normal(k_x, (B, T, INPUT), jnp.float32)

    out = jax.jit(delayed_mlp_forward)(x, params)
    out = jax.block_until_ready(out)

    ref = ref_forward(x, params)
    assert out.shape == (B, T, OUTPUT), out.shape
    assert jnp.allclose(out, ref, atol=1e-3, rtol=1e-3), float(
        jnp.max(jnp.abs(out - ref)))

    print("KERNEL_OK")
</pallas_src>

<mosaic_0001>
module attributes {stable_mosaic.version = 11 : i64} {
  func.func @_fused_delayed_mlp_kernel(%arg0: i32, %arg1: memref<8x8x16xf32, #tpu.memory_space<vmem>>, %arg2: memref<16x16xf32, #tpu.memory_space<vmem>>, %arg3: memref<1x16xf32, #tpu.memory_space<vmem>>, %arg4: memref<16x16xf32, #tpu.memory_space<vmem>>, %arg5: memref<1x16xf32, #tpu.memory_space<vmem>>, %arg6: memref<16x32xf32, #tpu.memory_space<vmem>>, %arg7: memref<1x32xf32, #tpu.memory_space<vmem>>, %arg8: memref<1x32xf32, #tpu.memory_space<vmem>>, %arg9: memref<1x32xf32, #tpu.memory_space<vmem>>, %arg10: memref<32x32xf32, #tpu.memory_space<vmem>>, %arg11: memref<1x32xf32, #tpu.memory_space<vmem>>, %arg12: memref<32x32xf32, #tpu.memory_space<vmem>>, %arg13: memref<1x32xf32, #tpu.memory_space<vmem>>, %arg14: memref<32x32xf32, #tpu.memory_space<vmem>>, %arg15: memref<1x32xf32, #tpu.memory_space<vmem>>, %arg16: memref<1x32xf32, #tpu.memory_space<vmem>>, %arg17: memref<1x32xf32, #tpu.memory_space<vmem>>, %arg18: memref<32x8xf32, #tpu.memory_space<vmem>>, %arg19: memref<1x8xf32, #tpu.memory_space<vmem>>, %arg20: memref<8x8x8xf32, #tpu.memory_space<vmem>>, %arg21: memref<8x8x16xf32, #tpu.memory_space<vmem>>, %arg22: memref<8x8x32xf32, #tpu.memory_space<vmem>>) attributes {dimension_semantics = [#tpu.dimension_semantics<parallel>], iteration_bounds = array<i64: 1>, scalar_prefetch = 0 : i64, scratch_operands = 2 : i64, tpu.core_type = #tpu.core_type<tc>, window_params = [{transform_indices = @transform_0, window_bounds = array<i64: 8, 8, 16>}, {pipeline_mode = #tpu.pipeline_mode<synchronous>, transform_indices = @transform_1, window_bounds = array<i64: 16, 16>}, {pipeline_mode = #tpu.pipeline_mode<synchronous>, transform_indices = @transform_2, window_bounds = array<i64: 1, 16>}, {pipeline_mode = #tpu.pipeline_mode<synchronous>, transform_indices = @transform_3, window_bounds = array<i64: 16, 16>}, {pipeline_mode = #tpu.pipeline_mode<synchronous>, transform_indices = @transform_4, window_bounds = array<i64: 1, 16>}, {pipeline_mode = #tpu.pipeline_mode<synchronous>, transform_indices = @transform_5, window_bounds = array<i64: 16, 32>}, {pipeline_mode = #tpu.pipeline_mode<synchronous>, transform_indices = @transform_6, window_bounds = array<i64: 1, 32>}, {pipeline_mode = #tpu.pipeline_mode<synchronous>, transform_indices = @transform_7, window_bounds = array<i64: 1, 32>}, {pipeline_mode = #tpu.pipeline_mode<synchronous>, transform_indices = @transform_8, window_bounds = array<i64: 1, 32>}, {pipeline_mode = #tpu.pipeline_mode<synchronous>, transform_indices = @transform_9, window_bounds = array<i64: 32, 32>}, {pipeline_mode = #tpu.pipeline_mode<synchronous>, transform_indices = @transform_10, window_bounds = array<i64: 1, 32>}, {pipeline_mode = #tpu.pipeline_mode<synchronous>, transform_indices = @transform_11, window_bounds = array<i64: 32, 32>}, {pipeline_mode = #tpu.pipeline_mode<synchronous>, transform_indices = @transform_12, window_bounds = array<i64: 1, 32>}, {pipeline_mode = #tpu.pipeline_mode<synchronous>, transform_indices = @transform_13, window_bounds = array<i64: 32, 32>}, {pipeline_mode = #tpu.pipeline_mode<synchronous>, transform_indices = @transform_14, window_bounds = array<i64: 1, 32>}, {pipeline_mode = #tpu.pipeline_mode<synchronous>, transform_indices = @transform_15, window_bounds = array<i64: 1, 32>}, {pipeline_mode = #tpu.pipeline_mode<synchronous>, transform_indices = @transform_16, window_bounds = array<i64: 1, 32>}, {pipeline_mode = #tpu.pipeline_mode<synchronous>, transform_indices = @transform_17, window_bounds = array<i64: 32, 8>}, {pipeline_mode = #tpu.pipeline_mode<synchronous>, transform_indices = @transform_18, window_bounds = array<i64: 1, 8>}, {transform_indices = @transform_19, window_bounds = array<i64: 8, 8, 8>}]} {
    %c0 = arith.constant 0 : index
    %c0_0 = arith.constant 0 : index
    %0 = vector.load %arg4[%c0, %c0_0] : memref<16x16xf32, #tpu.memory_space<vmem>>, vector<16x16xf32>
    %c0_1 = arith.constant 0 : index
    %c0_2 = arith.constant 0 : index
    %1 = vector.load %arg6[%c0_1, %c0_2] : memref<16x32xf32, #tpu.memory_space<vmem>>, vector<16x32xf32>
    %c0_3 = arith.constant 0 : index
    %c0_4 = arith.constant 0 : index
    %2 = vector.load %arg10[%c0_3, %c0_4] : memref<32x32xf32, #tpu.memory_space<vmem>>, vector<32x32xf32>
    %c0_5 = arith.constant 0 : index
    %c0_6 = arith.constant 0 : index
    %3 = vector.load %arg12[%c0_5, %c0_6] : memref<32x32xf32, #tpu.memory_space<vmem>>, vector<32x32xf32>
    %c0_7 = arith.constant 0 : index
    %c0_8 = arith.constant 0 : index
    %4 = vector.load %arg14[%c0_7, %c0_8] : memref<32x32xf32, #tpu.memory_space<vmem>>, vector<32x32xf32>
    %c0_9 = arith.constant 0 : index
    %c0_10 = arith.constant 0 : index
    %5 = vector.load %arg5[%c0_9, %c0_10] : memref<1x16xf32, #tpu.memory_space<vmem>>, vector<1x16xf32>
    %6 = vector.shape_cast %5 : vector<1x16xf32> to vector<1x16xf32>
    %7 = vector.broadcast %6 : vector<1x16xf32> to vector<8x16xf32>
    %c0_11 = arith.constant 0 : index
    %c0_12 = arith.constant 0 : index
    %8 = vector.load %arg7[%c0_11, %c0_12] : memref<1x32xf32, #tpu.memory_space<vmem>>, vector<1x32xf32>
    %9 = vector.shape_cast %8 : vector<1x32xf32> to vector<1x32xf32>
    %10 = vector.broadcast %9 : vector<1x32xf32> to vector<8x32xf32>
    %c0_13 = arith.constant 0 : index
    %c0_14 = arith.constant 0 : index
    %11 = vector.load %arg8[%c0_13, %c0_14] : memref<1x32xf32, #tpu.memory_space<vmem>>, vector<1x32xf32>
    %12 = vector.shape_cast %11 : vector<1x32xf32> to vector<1x32xf32>
    %13 = vector.broadcast %12 : vector<1x32xf32> to vector<8x32xf32>
    %c0_15 = arith.constant 0 : index
    %c0_16 = arith.constant 0 : index
    %14 = vector.load %arg9[%c0_15, %c0_16] : memref<1x32xf32, #tpu.memory_space<vmem>>, vector<1x32xf32>
    %15 = vector.shape_cast %14 : vector<1x32xf32> to vector<1x32xf32>
    %16 = vector.broadcast %15 : vector<1x32xf32> to vector<8x32xf32>
    %c0_17 = arith.constant 0 : index
    %c0_18 = arith.constant 0 : index
    %17 = vector.load %arg11[%c0_17, %c0_18] : memref<1x32xf32, #tpu.memory_space<vmem>>, vector<1x32xf32>
    %18 = vector.shape_cast %17 : vector<1x32xf32> to vector<1x32xf32>
    %19 = vector.broadcast %18 : vector<1x32xf32> to vector<8x32xf32>
    %c0_19 = arith.constant 0 : index
    %c0_20 = arith.constant 0 : index
    %20 = vector.load %arg13[%c0_19, %c0_20] : memref<1x32xf32, #tpu.memory_space<vmem>>, vector<1x32xf32>
    %21 = vector.shape_cast %20 : vector<1x32xf32> to vector<1x32xf32>
    %22 = vector.broadcast %21 : vector<1x32xf32> to vector<8x32xf32>
    %c0_21 = arith.constant 0 : index
    %c0_22 = arith.constant 0 : index
    %23 = vector.load %arg15[%c0_21, %c0_22] : memref<1x32xf32, #tpu.memory_space<vmem>>, vector<1x32xf32>
    %24 = vector.shape_cast %23 : vector<1x32xf32> to vector<1x32xf32>
    %25 = vector.broadcast %24 : vector<1x32xf32> to vector<8x32xf32>
    %c0_23 = arith.constant 0 : index
    %c0_24 = arith.constant 0 : index
    %26 = vector.load %arg16[%c0_23, %c0_24] : memref<1x32xf32, #tpu.memory_space<vmem>>, vector<1x32xf32>
    %27 = vector.shape_cast %26 : vector<1x32xf32> to vector<1x32xf32>
    %28 = vector.broadcast %27 : vector<1x32xf32> to vector<8x32xf32>
    %c0_25 = arith.constant 0 : index
    %c0_26 = arith.constant 0 : index
    %29 = vector.load %arg17[%c0_25, %c0_26] : memref<1x32xf32, #tpu.memory_space<vmem>>, vector<1x32xf32>
    %30 = vector.shape_cast %29 : vector<1x32xf32> to vector<1x32xf32>
    %31 = vector.broadcast %30 : vector<1x32xf32> to vector<8x32xf32>
    %c0_27 = arith.constant 0 : index
    %c0_28 = arith.constant 0 : index
    %c0_29 = arith.constant 0 : index
    %32 = vector.load %arg1[%c0_27, %c0_28, %c0_29] : memref<8x8x16xf32, #tpu.memory_space<vmem>>, vector<8x8x16xf32>
    %33 = vector.shape_cast %32 : vector<8x8x16xf32> to vector<64x16xf32>
    %c0_30 = arith.constant 0 : index
    %c0_31 = arith.constant 0 : index
    %34 = vector.load %arg2[%c0_30, %c0_31] : memref<16x16xf32, #tpu.memory_space<vmem>>, vector<16x16xf32>
    %cst = arith.constant dense<0.000000e+00> : vector<64x16xf32>
    %35 = tpu.matmul %33, %34, %cst {dimension_numbers = #tpu.dot_dimension_numbers<[1], [0], [0], [1], [0, 0, 1, 1], [], []>} : vector<64x16xf32>, vector<16x16xf32>, vector<64x16xf32> -> vector<64x16xf32>
    %c0_32 = arith.constant 0 : index
    %c0_33 = arith.constant 0 : index
    %36 = vector.load %arg3[%c0_32, %c0_33] : memref<1x16xf32, #tpu.memory_space<vmem>>, vector<1x16xf32>
    %37 = vector.broadcast %36 : vector<1x16xf32> to vector<64x16xf32>
    %38 = arith.addf %35, %37 : vector<64x16xf32>
    %39 = arith.negf %38 : vector<64x16xf32>
    %40 = math.exp %39 : vector<64x16xf32>
    %cst_34 = arith.constant 1.000000e+00 : f32
    %41 = vector.broadcast %cst_34 : f32 to vector<64x16xf32>
    %42 = arith.addf %41, %40 : vector<64x16xf32>
    %43 = arith.divf %41, %42 : vector<64x16xf32>
    %44 = arith.mulf %33, %43 : vector<64x16xf32>
    %45 = vector.shape_cast %44 : vector<64x16xf32> to vector<8x8x16xf32>
    %c0_35 = arith.constant 0 : index
    %c0_36 = arith.constant 0 : index
    %c0_37 = arith.constant 0 : index
    %46 = vector.load %arg21[%c0_35, %c0_36, %c0_37] : memref<8x8x16xf32, #tpu.memory_space<vmem>>, vector<8x8x16xf32>
    tpu.vector_store %arg21[%c0_35, %c0_36, %c0_37], %45 {strides = array<i32>} : memref<8x8x16xf32, #tpu.memory_space<vmem>>, vector<8x8x16xf32>,
    %cst_38 = arith.constant 0.000000e+00 : f32
    %47 = vector.broadcast %cst_38 : f32 to vector<8x16xf32>
    %cst_39 = arith.constant 0.000000e+00 : f32
    %48 = vector.broadcast %cst_39 : f32 to vector<8x32xf32>
    %c0_i32 = arith.constant 0 : i32
    %49 = arith.index_cast %c0_i32 : i32 to index
    %c0_40 = arith.constant 0 : index
    %c0_41 = arith.constant 0 : index
    %50 = vector.load %arg1[%49, %c0_40, %c0_41] : memref<8x8x16xf32, #tpu.memory_space<vmem>>, vector<1x8x16xf32>
    %51 = vector.shape_cast %50 : vector<1x8x16xf32> to vector<8x16xf32>
    %52 = arith.index_cast %c0_i32 : i32 to index
    %c0_42 = arith.constant 0 : index
    %c0_43 = arith.constant 0 : index
    %53 = vector.load %arg21[%52, %c0_42, %c0_43] : memref<8x8x16xf32, #tpu.memory_space<vmem>>, vector<1x8x16xf32>
    %54 = vector.shape_cast %53 : vector<1x8x16xf32> to vector<8x16xf32>
    %55 = arith.subf %51, %54 : vector<8x16xf32>
    %56 = arith.addf %47, %55 : vector<8x16xf32>
    %cst_44 = arith.constant dense<0.000000e+00> : vector<8x16xf32>
    %57 = tpu.matmul %56, %0, %cst_44 {dimension_numbers = #tpu.dot_dimension_numbers<[1], [0], [0], [1], [0, 0, 1, 1], [], []>} : vector<8x16xf32>, vector<16x16xf32>, vector<8x16xf32> -> vector<8x16xf32>
    %58 = arith.addf %57, %7 : vector<8x16xf32>
    %59 = arith.negf %58 : vector<8x16xf32>
    %60 = math.exp %59 : vector<8x16xf32>
    %cst_45 = arith.constant 1.000000e+00 : f32
    %61 = vector.broadcast %cst_45 : f32 to vector<8x16xf32>
    %62 = arith.addf %61, %60 : vector<8x16xf32>
    %63 = arith.divf %61, %62 : vector<8x16xf32>
    %64 = arith.mulf %56, %63 : vector<8x16xf32>
    %cst_46 = arith.constant 1.000000e+00 : f32
    %65 = vector.broadcast %cst_46 : f32 to vector<8x16xf32>
    %66 = arith.subf %65, %63 : vector<8x16xf32>
    %67 = arith.mulf %56, %66 : vector<8x16xf32>
    %68 = arith.addf %54, %64 : vector<8x16xf32>
    %cst_47 = arith.constant dense<0.000000e+00> : vector<8x32xf32>
    %69 = tpu.matmul %68, %1, %cst_47 {dimension_numbers = #tpu.dot_dimension_numbers<[1], [0], [0], [1], [0, 0, 1, 1], [], []>} : vector<8x16xf32>, vector<16x32xf32>, vector<8x32xf32> -> vector<8x32xf32>
    %70 = arith.addf %69, %10 : vector<8x32xf32>
    %cst_48 = arith.constant 0.000000e+00 : f32
    %71 = vector.broadcast %cst_48 : f32 to vector<8x32xf32>
    %72 = arith.maximumf %70, %71 : vector<8x32xf32>
    %cst_49 = arith.constant dense<0.000000e+00> : vector<8xf32>
    %73 = vector.multi_reduction <add>, %72, %cst_49 [1] : vector<8x32xf32> to vector<8xf32>
    %74 = vector.shape_cast %73 : vector<8xf32> to vector<8x1xf32>
    %75 = arith.mulf %72, %72 : vector<8x32xf32>
    %cst_50 = arith.constant dense<0.000000e+00> : vector<8xf32>
    %76 = vector.multi_reduction <add>, %75, %cst_50 [1] : vector<8x32xf32> to vector<8xf32>
    %77 = vector.shape_cast %76 : vector<8xf32> to vector<8x1xf32>
    %cst_51 = arith.constant 3.125000e-02 : f32
    %78 = vector.broadcast %cst_51 : f32 to vector<8x1xf32>
    %79 = arith.mulf %74, %78 : vector<8x1xf32>
    %cst_52 = arith.constant 3.125000e-02 : f32
    %80 = vector.broadcast %cst_52 : f32 to vector<8x1xf32>
    %81 = arith.mulf %77, %80 : vector<8x1xf32>
    %82 = arith.mulf %79, %79 : vector<8x1xf32>
    %83 = arith.subf %81, %82 : vector<8x1xf32>
    %84 = vector.broadcast %79 : vector<8x1xf32> to vector<8x32xf32>
    %85 = arith.subf %72, %84 : vector<8x32xf32>
    %cst_53 = arith.constant 9.99999974E-6 : f32
    %86 = vector.broadcast %cst_53 : f32 to vector<8x1xf32>
    %87 = arith.addf %83, %86 : vector<8x1xf32>
    %88 = math.rsqrt %87 : vector<8x1xf32>
    %89 = vector.broadcast %88 : vector<8x1xf32> to vector<8x32xf32>
    %90 = arith.mulf %85, %89 : vector<8x32xf32>
    %91 = arith.mulf %90, %13 : vector<8x32xf32>
    %92 = arith.addf %91, %16 : vector<8x32xf32>
    %cst_54 = arith.constant dense<0.000000e+00> : vector<8x32xf32>
    %93 = tpu.matmul %92, %2, %cst_54 {dimension_numbers = #tpu.dot_dimension_numbers<[1], [0], [0], [1], [0, 0, 1, 1], [], []>} : vector<8x32xf32>, vector<32x32xf32>, vector<8x32xf32> -> vector<8x32xf32>
    %94 = arith.addf %93, %19 : vector<8x32xf32>
    %95 = arith.negf %94 : vector<8x32xf32>
    %96 = math.exp %95 : vector<8x32xf32>
    %cst_55 = arith.constant 1.000000e+00 : f32
    %97 = vector.broadcast %cst_55 : f32 to vector<8x32xf32>
    %98 = arith.addf %97, %96 : vector<8x32xf32>
    %99 = arith.divf %97, %98 : vector<8x32xf32>
    %100 = arith.mulf %92, %99 : vector<8x32xf32>
    %101 = arith.subf %92, %100 : vector<8x32xf32>
    %102 = arith.addf %48, %101 : vector<8x32xf32>
    %cst_56 = arith.constant dense<0.000000e+00> : vector<8x32xf32>
    %103 = tpu.matmul %102, %3, %cst_56 {dimension_numbers = #tpu.dot_dimension_numbers<[1], [0], [0], [1], [0, 0, 1, 1], [], []>} : vector<8x32xf32>, vector<32x32xf32>, vector<8x32xf32> -> vector<8x32xf32>
    %104 = arith.addf %103, %22 : vector<8x32xf32>
    %105 = arith.negf %104 : vector<8x32xf32>
    %106 = math.exp %105 : vector<8x32xf32>
    %cst_57 = arith.constant 1.000000e+00 : f32
    %107 = vector.broadcast %cst_57 : f32 to vector<8x32xf32>
    %108 = arith.addf %107, %106 : vector<8x32xf32>
    %109 = arith.divf %107, %108 : vector<8x32xf32>
    %110 = arith.mulf %102, %109 : vector<8x32xf32>
    %cst_58 = arith.constant 1.000000e+00 : f32
    %111 = vector.broadcast %cst_58 : f32 to vector<8x32xf32>
    %112 = arith.subf %111, %109 : vector<8x32xf32>
    %113 = arith.mulf %102, %112 : vector<8x32xf32>
    %114 = arith.addf %100, %110 : vector<8x32xf32>
    %cst_59 = arith.constant dense<0.000000e+00> : vector<8x32xf32>
    %115 = tpu.matmul %114, %4, %cst_59 {dimension_numbers = #tpu.dot_dimension_numbers<[1], [0], [0], [1], [0, 0, 1, 1], [], []>} : vector<8x32xf32>, vector<32x32xf32>, vector<8x32xf32> -> vector<8x32xf32>
    %116 = arith.addf %115, %25 : vector<8x32xf32>
    %cst_60 = arith.constant 0.000000e+00 : f32
    %117 = vector.broadcast %cst_60 : f32 to vector<8x32xf32>
    %118 = arith.maximumf %116, %117 : vector<8x32xf32>
    %cst_61 = arith.constant dense<0.000000e+00> : vector<8xf32>
    %119 = vector.multi_reduction <add>, %118, %cst_61 [1] : vector<8x32xf32> to vector<8xf32>
    %120 = vector.shape_cast %119 : vector<8xf32> to vector<8x1xf32>
    %121 = arith.mulf %118, %118 : vector<8x32xf32>
    %cst_62 = arith.constant dense<0.000000e+00> : vector<8xf32>
    %122 = vector.multi_reduction <add>, %121, %cst_62 [1] : vector<8x32xf32> to vector<8xf32>
    %123 = vector.shape_cast %122 : vector<8xf32> to vector<8x1xf32>
    %cst_63 = arith.constant 3.125000e-02 : f32
    %124 = vector.broadcast %cst_63 : f32 to vector<8x1xf32>
    %125 = arith.mulf %120, %124 : vector<8x1xf32>
    %cst_64 = arith.constant 3.125000e-02 : f32
    %126 = vector.broadcast %cst_64 : f32 to vector<8x1xf32>
    %127 = arith.mulf %123, %126 : vector<8x1xf32>
    %128 = arith.mulf %125, %125 : vector<8x1xf32>
    %129 = arith.subf %127, %128 : vector<8x1xf32>
    %130 = vector.broadcast %125 : vector<8x1xf32> to vector<8x32xf32>
    %131 = arith.subf %118, %130 : vector<8x32xf32>
    %cst_65 = arith.constant 9.99999974E-6 : f32
    %132 = vector.broadcast %cst_65 : f32 to vector<8x1xf32>
    %133 = arith.addf %129, %132 : vector<8x1xf32>
    %134 = math.rsqrt %133 : vector<8x1xf32>
    %135 = vector.broadcast %134 : vector<8x1xf32> to vector<8x32xf32>
    %136 = arith.mulf %131, %135 : vector<8x32xf32>
    %137 = arith.mulf %136, %28 : vector<8x32xf32>
    %138 = arith.addf %137, %31 : vector<8x32xf32>
    %139 = arith.index_cast %c0_i32 : i32 to index
    %c0_66 = arith.constant 0 : index
    %c0_67 = arith.constant 0 : index
    %140 = vector.load %arg22[%139, %c0_66, %c0_67] : memref<8x8x32xf32, #tpu.memory_space<vmem>>, vector<1x8x32xf32>
    %141 = vector.shape_cast %140 : vector<1x8x32xf32> to vector<8x32xf32>
    %142 = vector.shape_cast %138 : vector<8x32xf32> to vector<1x8x32xf32>
    tpu.vector_store %arg22[%139, %c0_66, %c0_67], %142 {strides = array<i32>} : memref<8x8x32xf32, #tpu.memory_space<vmem>>, vector<1x8x32xf32>,
    %c1_i32 = arith.constant 1 : i32
    %143 = arith.index_cast %c1_i32 : i32 to index
    %c0_68 = arith.constant 0 : index
    %c0_69 = arith.constant 0 : index
    %144 = vector.load %arg1[%143, %c0_68, %c0_69] : memref<8x8x16xf32, #tpu.memory_space<vmem>>, vector<1x8x16xf32>
    %145 = vector.shape_cast %144 : vector<1x8x16xf32> to vector<8x16xf32>
    %146 = arith.index_cast %c1_i32 : i32 to index
    %c0_70 = arith.constant 0 : index
    %c0_71 = arith.constant 0 : index
    %147 = vector.load %arg21[%146, %c0_70, %c0_71] : memref<8x8x16xf32, #tpu.memory_space<vmem>>, vector<1x8x16xf32>
    %148 = vector.shape_cast %147 : vector<1x8x16xf32> to vector<8x16xf32>
    %149 = arith.subf %145, %148 : vector<8x16xf32>
    %150 = arith.addf %67, %149 : vector<8x16xf32>
    %cst_72 = arith.constant dense<0.000000e+00> : vector<8x16xf32>
    %151 = tpu.matmul %150, %0, %cst_72 {dimension_numbers = #tpu.dot_dimension_numbers<[1], [0], [0], [1], [0, 0, 1, 1], [], []>} : vector<8x16xf32>, vector<16x16xf32>, vector<8x16xf32> -> vector<8x16xf32>
    %152 = arith.addf %151, %7 : vector<8x16xf32>
    %153 = arith.negf %152 : vector<8x16xf32>
    %154 = math.exp %153 : vector<8x16xf32>
    %cst_73 = arith.constant 1.000000e+00 : f32
    %155 = vector.broadcast %cst_73 : f32 to vector<8x16xf32>
    %156 = arith.addf %155, %154 : vector<8x16xf32>
    %157 = arith.divf %155, %156 : vector<8x16xf32>
    %158 = arith.mulf %150, %157 : vector<8x16xf32>
    %cst_74 = arith.constant 1.000000e+00 : f32
    %159 = vector.broadcast %cst_74 : f32 to vector<8x16xf32>
    %160 = arith.subf %159, %157 : vector<8x16xf32>
    %161 = arith.mulf %150, %160 : vector<8x16xf32>
    %162 = arith.addf %148, %158 : vector<8x16xf32>
    %cst_75 = arith.constant dense<0.000000e+00> : vector<8x32xf32>
    %163 = tpu.matmul %162, %1, %cst_75 {dimension_numbers = #tpu.dot_dimension_numbers<[1], [0], [0], [1], [0, 0, 1, 1], [], []>} : vector<8x16xf32>, vector<16x32xf32>, vector<8x32xf32> -> vector<8x32xf32>
    %164 = arith.addf %163, %10 : vector<8x32xf32>
    %cst_76 = arith.constant 0.000000e+00 : f32
    %165 = vector.broadcast %cst_76 : f32 to vector<8x32xf32>
    %166 = arith.maximumf %164, %165 : vector<8x32xf32>
    %cst_77 = arith.constant dense<0.000000e+00> : vector<8xf32>
    %167 = vector.multi_reduction <add>, %166, %cst_77 [1] : vector<8x32xf32> to vector<8xf32>
    %168 = vector.shape_cast %167 : vector<8xf32> to vector<8x1xf32>
    %169 = arith.mulf %166, %166 : vector<8x32xf32>
    %cst_78 = arith.constant dense<0.000000e+00> : vector<8xf32>
    %170 = vector.multi_reduction <add>, %169, %cst_78 [1] : vector<8x32xf32> to vector<8xf32>
    %171 = vector.shape_cast %170 : vector<8xf32> to vector<8x1xf32>
    %cst_79 = arith.constant 3.125000e-02 : f32
    %172 = vector.broadcast %cst_79 : f32 to vector<8x1xf32>
    %173 = arith.mulf %168, %172 : vector<8x1xf32>
    %cst_80 = arith.constant 3.125000e-02 : f32
    %174 = vector.broadcast %cst_80 : f32 to vector<8x1xf32>
    %175 = arith.mulf %171, %174 : vector<8x1xf32>
    %176 = arith.mulf %173, %173 : vector<8x1xf32>
    %177 = arith.subf %175, %176 : vector<8x1xf32>
    %178 = vector.broadcast %173 : vector<8x1xf32> to vector<8x32xf32>
    %179 = arith.subf %166, %178 : vector<8x32xf32>
    %cst_81 = arith.constant 9.99999974E-6 : f32
    %180 = vector.broadcast %cst_81 : f32 to vector<8x1xf32>
    %181 = arith.addf %177, %180 : vector<8x1xf32>
    %182 = math.rsqrt %181 : vector<8x1xf32>
    %183 = vector.broadcast %182 : vector<8x1xf32> to vector<8x32xf32>
    %184 = arith.mulf %179, %183 : vector<8x32xf32>
    %185 = arith.mulf %184, %13 : vector<8x32xf32>
    %186 = arith.addf %185, %16 : vector<8x32xf32>
    %cst_82 = arith.constant dense<0.000000e+00> : vector<8x32xf32>
    %187 = tpu.matmul %186, %2, %cst_82 {dimension_numbers = #tpu.dot_dimension_numbers<[1], [0], [0], [1], [0, 0, 1, 1], [], []>} : vector<8x32xf32>, vector<32x32xf32>, vector<8x32xf32> -> vector<8x32xf32>
    %188 = arith.addf %187, %19 : vector<8x32xf32>
    %189 = arith.negf %188 : vector<8x32xf32>
    %190 = math.exp %189 : vector<8x32xf32>
    %cst_83 = arith.constant 1.000000e+00 : f32
    %191 = vector.broadcast %cst_83 : f32 to vector<8x32xf32>
    %192 = arith.addf %191, %190 : vector<8x32xf32>
    %193 = arith.divf %191, %192 : vector<8x32xf32>
    %194 = arith.mulf %186, %193 : vector<8x32xf32>
    %195 = arith.subf %186, %194 : vector<8x32xf32>
    %196 = arith.addf %113, %195 : vector<8x32xf32>
    %cst_84 = arith.constant dense<0.000000e+00> : vector<8x32xf32>
    %197 = tpu.matmul %196, %3, %cst_84 {dimension_numbers = #tpu.dot_dimension_numbers<[1], [0], [0], [1], [0, 0, 1, 1], [], []>} : vector<8x32xf32>, vector<32x32xf32>, vector<8x32xf32> -> vector<8x32xf32>
    %198 = arith.addf %197, %22 : vector<8x32xf32>
    %199 = arith.negf %198 : vector<8x32xf32>
    %200 = math.exp %199 : vector<8x32xf32>
    %cst_85 = arith.constant 1.000000e+00 : f32
    %201 = vector.broadcast %cst_85 : f32 to vector<8x32xf32>
    %202 = arith.addf %201, %200 : vector<8x32xf32>
    %203 = arith.divf %201, %202 : vector<8x32xf32>
    %204 = arith.mulf %196, %203 : vector<8x32xf32>
    %cst_86 = arith.constant 1.000000e+00 : f32
    %205 = vector.broadcast %cst_86 : f32 to vector<8x32xf32>
    %206 = arith.subf %205, %203 : vector<8x32xf32>
    %207 = arith.mulf %196, %206 : vector<8x32xf32>
    %208 = arith.addf %194, %204 : vector<8x32xf32>
    %cst_87 = arith.constant dense<0.000000e+00> : vector<8x32xf32>
    %209 = tpu.matmul %208, %4, %cst_87 {dimension_numbers = #tpu.dot_dimension_numbers<[1], [0], [0], [1], [0, 0, 1, 1], [], []>} : vector<8x32xf32>, vector<32x32xf32>, vector<8x32xf32> -> vector<8x32xf32>
    %210 = arith.addf %209, %25 : vector<8x32xf32>
    %cst_88 = arith.constant 0.000000e+00 : f32
    %211 = vector.broadcast %cst_88 : f32 to vector<8x32xf32>
    %212 = arith.maximumf %210, %211 : vector<8x32xf32>
    %cst_89 = arith.constant dense<0.000000e+00> : vector<8xf32>
    %213 = vector.multi_reduction <add>, %212, %cst_89 [1] : vector<8x32xf32> to vector<8xf32>
    %214 = vector.shape_cast %213 : vector<8xf32> to vector<8x1xf32>
    %215 = arith.mulf %212, %212 : vector<8x32xf32>
    %cst_90 = arith.constant dense<0.000000e+00> : vector<8xf32>
    %216 = vector.multi_reduction <add>, %215, %cst_90 [1] : vector<8x32xf32> to vector<8xf32>
    %217 = vector.shape_cast %216 : vector<8xf32> to vector<8x1xf32>
    %cst_91 = arith.constant 3.125000e-02 : f32
    %218 = vector.broadcast %cst_91 : f32 to vector<8x1xf32>
    %219 = arith.mulf %214, %218 : vector<8x1xf32>
    %cst_92 = arith.constant 3.125000e-02 : f32
    %220 = vector.broadcast %cst_92 : f32 to vector<8x1xf32>
    %221 = arith.mulf %217, %220 : vector<8x1xf32>
    %222 = arith.mulf %219, %219 : vector<8x1xf32>
    %223 = arith.subf %221, %222 : vector<8x1xf32>
    %224 = vector.broadcast %219 : vector<8x1xf32> to vector<8x32xf32>
    %225 = arith.subf %212, %224 : vector<8x32xf32>
    %cst_93 = arith.constant 9.99999974E-6 : f32
    %226 = vector.broadcast %cst_93 : f32 to vector<8x1xf32>
    %227 = arith.addf %223, %226 : vector<8x1xf32>
    %228 = math.rsqrt %227 : vector<8x1xf32>
    %229 = vector.broadcast %228 : vector<8x1xf32> to vector<8x32xf32>
    %230 = arith.mulf %225, %229 : vector<8x32xf32>
    %231 = arith.mulf %230, %28 : vector<8x32xf32>
    %232 = arith.addf %231, %31 : vector<8x32xf32>
    %233 = arith.index_cast %c1_i32 : i32 to index
    %c0_94 = arith.constant 0 : index
    %c0_95 = arith.constant 0 : index
    %234 = vector.load %arg22[%233, %c0_94, %c0_95] : memref<8x8x32xf32, #tpu.memory_space<vmem>>, vector<1x8x32xf32>
    %235 = vector.shape_cast %234 : vector<1x8x32xf32> to vector<8x32xf32>
    %236 = vector.shape_cast %232 : vector<8x32xf32> to vector<1x8x32xf32>
    tpu.vector_store %arg22[%233, %c0_94, %c0_95], %236 {strides = array<i32>} : memref<8x8x32xf32, #tpu.memory_space<vmem>>, vector<1x8x32xf32>,
    %c2_i32 = arith.constant 2 : i32
    %237 = arith.index_cast %c2_i32 : i32 to index
    %c0_96 = arith.constant 0 : index
    %c0_97 = arith.constant 0 : index
    %238 = vector.load %arg1[%237, %c0_96, %c0_97] : memref<8x8x16xf32, #tpu.memory_space<vmem>>, vector<1x8x16xf32>
    %239 = vector.shape_cast %238 : vector<1x8x16xf32> to vector<8x16xf32>
    %240 = arith.index_cast %c2_i32 : i32 to index
    %c0_98 = arith.constant 0 : index
    %c0_99 = arith.constant 0 : index
    %241 = vector.load %arg21[%240, %c0_98, %c0_99] : memref<8x8x16xf32, #tpu.memory_space<vmem>>, vector<1x8x16xf32>
    %242 = vector.shape_cast %241 : vector<1x8x16xf32> to vector<8x16xf32>
    %243 = arith.subf %239, %242 : vector<8x16xf32>
    %244 = arith.addf %161, %243 : vector<8x16xf32>
    %cst_100 = arith.constant dense<0.000000e+00> : vector<8x16xf32>
    %245 = tpu.matmul %244, %0, %cst_100 {dimension_numbers = #tpu.dot_dimension_numbers<[1], [0], [0], [1], [0, 0, 1, 1], [], []>} : vector<8x16xf32>, vector<16x16xf32>, vector<8x16xf32> -> vector<8x16xf32>
    %246 = arith.addf %245, %7 : vector<8x16xf32>
    %247 = arith.negf %246 : vector<8x16xf32>
    %248 = math.exp %247 : vector<8x16xf32>
    %cst_101 = arith.constant 1.000000e+00 : f32
    %249 = vector.broadcast %cst_101 : f32 to vector<8x16xf32>
    %250 = arith.addf %249, %248 : vector<8x16xf32>
    %251 = arith.divf %249, %250 : vector<8x16xf32>
    %252 = arith.mulf %244, %251 : vector<8x16xf32>
    %cst_102 = arith.constant 1.000000e+00 : f32
    %253 = vector.broadcast %cst_102 : f32 to vector<8x16xf32>
    %254 = arith.subf %253, %251 : vector<8x16xf32>
    %255 = arith.mulf %244, %254 : vector<8x16xf32>
    %256 = arith.addf %242, %252 : vector<8x16xf32>
    %cst_103 = arith.constant dense<0.000000e+00> : vector<8x32xf32>
    %257 = tpu.matmul %256, %1, %cst_103 {dimension_numbers = #tpu.dot_dimension_numbers<[1], [0], [0], [1], [0, 0, 1, 1], [], []>} : vector<8x16xf32>, vector<16x32xf32>, vector<8x32xf32> -> vector<8x32xf32>
    %258 = arith.addf %257, %10 : vector<8x32xf32>
    %cst_104 = arith.constant 0.000000e+00 : f32
    %259 = vector.broadcast %cst_104 : f32 to vector<8x32xf32>
    %260 = arith.maximumf %258, %259 : vector<8x32xf32>
    %cst_105 = arith.constant dense<0.000000e+00> : vector<8xf32>
    %261 = vector.multi_reduction <add>, %260, %cst_105 [1] : vector<8x32xf32> to vector<8xf32>
    %262 = vector.shape_cast %261 : vector<8xf32> to vector<8x1xf32>
    %263 = arith.mulf %260, %260 : vector<8x32xf32>
    %cst_106 = arith.constant dense<0.000000e+00> : vector<8xf32>
    %264 = vector.multi_reduction <add>, %263, %cst_106 [1] : vector<8x32xf32> to vector<8xf32>
    %265 = vector.shape_cast %264 : vector<8xf32> to vector<8x1xf32>
    %cst_107 = arith.constant 3.125000e-02 : f32
    %266 = vector.broadcast %cst_107 : f32 to vector<8x1xf32>
    %267 = arith.mulf %262, %266 : vector<8x1xf32>
    %cst_108 = arith.constant 3.125000e-02 : f32
    %268 = vector.broadcast %cst_108 : f32 to vector<8x1xf32>
    %269 = arith.mulf %265, %268 : vector<8x1xf32>
    %270 = arith.mulf %267, %267 : vector<8x1xf32>
    %271 = arith.subf %269, %270 : vector<8x1xf32>
    %272 = vector.broadcast %267 : vector<8x1xf32> to vector<8x32xf32>
    %273 = arith.subf %260, %272 : vector<8x32xf32>
    %cst_109 = arith.constant 9.99999974E-6 : f32
    %274 = vector.broadcast %cst_109 : f32 to vector<8x1xf32>
    %275 = arith.addf %271, %274 : vector<8x1xf32>
    %276 = math.rsqrt %275 : vector<8x1xf32>
    %277 = vector.broadcast %276 : vector<8x1xf32> to vector<8x32xf32>
    %278 = arith.mulf %273, %277 : vector<8x32xf32>
    %279 = arith.mulf %278, %13 : vector<8x32xf32>
    %280 = arith.addf %279, %16 : vector<8x32xf32>
    %cst_110 = arith.constant dense<0.000000e+00> : vector<8x32xf32>
    %281 = tpu.matmul %280, %2, %cst_110 {dimension_numbers = #tpu.dot_dimension_numbers<[1], [0], [0], [1], [0, 0, 1, 1], [], []>} : vector<8x32xf32>, vector<32x32xf32>, vector<8x32xf32> -> vector<8x32xf32>
    %282 = arith.addf %281, %19 : vector<8x32xf32>
    %283 = arith.negf %282 : vector<8x32xf32>
    %284 = math.exp %283 : vector<8x32xf32>
    %cst_111 = arith.constant 1.000000e+00 : f32
    %285 = vector.broadcast %cst_111 : f32 to vector<8x32xf32>
    %286 = arith.addf %285, %284 : vector<8x32xf32>
    %287 = arith.divf %285, %286 : vector<8x32xf32>
    %288 = arith.mulf %280, %287 : vector<8x32xf32>
    %289 = arith.subf %280, %288 : vector<8x32xf32>
    %290 = arith.addf %207, %289 : vector<8x32xf32>
    %cst_112 = arith.constant dense<0.000000e+00> : vector<8x32xf32>
    %291 = tpu.matmul %290, %3, %cst_112 {dimension_numbers = #tpu.dot_dimension_numbers<[1], [0], [0], [1], [0, 0, 1, 1], [], []>} : vector<8x32xf32>, vector<32x32xf32>, vector<8x32xf32> -> vector<8x32xf32>
    %292 = arith.addf %291, %22 : vector<8x32xf32>
    %293 = arith.negf %292 : vector<8x32xf32>
    %294 = math.exp %293 : vector<8x32xf32>
    %cst_113 = arith.constant 1.000000e+00 : f32
    %295 = vector.broadcast %cst_113 : f32 to vector<8x32xf32>
    %296 = arith.addf %295, %294 : vector<8x32xf32>
    %297 = arith.divf %295, %296 : vector<8x32xf32>
    %298 = arith.mulf %290, %297 : vector<8x32xf32>
    %cst_114 = arith.constant 1.000000e+00 : f32
    %299 = vector.broadcast %cst_114 : f32 to vector<8x32xf32>
    %300 = arith.subf %299, %297 : vector<8x32xf32>
    %301 = arith.mulf %290, %300 : vector<8x32xf32>
    %302 = arith.addf %288, %298 : vector<8x32xf32>
    %cst_115 = arith.constant dense<0.000000e+00> : vector<8x32xf32>
    %303 = tpu.matmul %302, %4, %cst_115 {dimension_numbers = #tpu.dot_dimension_numbers<[1], [0], [0], [1], [0, 0, 1, 1], [], []>} : vector<8x32xf32>, vector<32x32xf32>, vector<8x32xf32> -> vector<8x32xf32>
    %304 = arith.addf %303, %25 : vector<8x32xf32>
    %cst_116 = arith.constant 0.000000e+00 : f32
    %305 = vector.broadcast %cst_116 : f32 to vector<8x32xf32>
    %306 = arith.maximumf %304, %305 : vector<8x32xf32>
    %cst_117 = arith.constant dense<0.000000e+00> : vector<8xf32>
    %307 = vector.multi_reduction <add>, %306, %cst_117 [1] : vector<8x32xf32> to vector<8xf32>
    %308 = vector.shape_cast %307 : vector<8xf32> to vector<8x1xf32>
    %309 = arith.mulf %306, %306 : vector<8x32xf32>
    %cst_118 = arith.constant dense<0.000000e+00> : vector<8xf32>
    %310 = vector.multi_reduction <add>, %309, %cst_118 [1] : vector<8x32xf32> to vector<8xf32>
    %311 = vector.shape_cast %310 : vector<8xf32> to vector<8x1xf32>
    %cst_119 = arith.constant 3.125000e-02 : f32
    %312 = vector.broadcast %cst_119 : f32 to vector<8x1xf32>
    %313 = arith.mulf %308, %312 : vector<8x1xf32>
    %cst_120 = arith.constant 3.125000e-02 : f32
    %314 = vector.broadcast %cst_120 : f32 to vector<8x1xf32>
    %315 = arith.mulf %311, %314 : vector<8x1xf32>
    %316 = arith.mulf %313, %313 : vector<8x1xf32>
    %317 = arith.subf %315, %316 : vector<8x1xf32>
    %318 = vector.broadcast %313 : vector<8x1xf32> to vector<8x32xf32>
    %319 = arith.subf %306, %318 : vector<8x32xf32>
    %cst_121 = arith.constant 9.99999974E-6 : f32
    %320 = vector.broadcast %cst_121 : f32 to vector<8x1xf32>
    %321 = arith.addf %317, %320 : vector<8x1xf32>
    %322 = math.rsqrt %321 : vector<8x1xf32>
    %323 = vector.broadcast %322 : vector<8x1xf32> to vector<8x32xf32>
    %324 = arith.mulf %319, %323 : vector<8x32xf32>
    %325 = arith.mulf %324, %28 : vector<8x32xf32>
    %326 = arith.addf %325, %31 : vector<8x32xf32>
    %327 = arith.index_cast %c2_i32 : i32 to index
    %c0_122 = arith.constant 0 : index
    %c0_123 = arith.constant 0 : index
    %328 = vector.load %arg22[%327, %c0_122, %c0_123] : memref<8x8x32xf32, #tpu.memory_space<vmem>>, vector<1x8x32xf32>
    %329 = vector.shape_cast %328 : vector<1x8x32xf32> to vector<8x32xf32>
    %330 = vector.shape_cast %326 : vector<8x32xf32> to vector<1x8x32xf32>
    tpu.vector_store %arg22[%327, %c0_122, %c0_123], %330 {strides = array<i32>} : memref<8x8x32xf32, #tpu.memory_space<vmem>>, vector<1x8x32xf32>,
    %c3_i32 = arith.constant 3 : i32
    %331 = arith.index_cast %c3_i32 : i32 to index
    %c0_124 = arith.constant 0 : index
    %c0_125 = arith.constant 0 : index
    %332 = vector.load %arg1[%331, %c0_124, %c0_125] : memref<8x8x16xf32, #tpu.memory_space<vmem>>, vector<1x8x16xf32>
    %333 = vector.shape_cast %332 : vector<1x8x16xf32> to vector<8x16xf32>
    %334 = arith.index_cast %c3_i32 : i32 to index
    %c0_126 = arith.constant 0 : index
    %c0_127 = arith.constant 0 : index
    %335 = vector.load %arg21[%334, %c0_126, %c0_127] : memref<8x8x16xf32, #tpu.memory_space<vmem>>, vector<1x8x16xf32>
    %336 = vector.shape_cast %335 : vector<1x8x16xf32> to vector<8x16xf32>
    %337 = arith.subf %333, %336 : vector<8x16xf32>
    %338 = arith.addf %255, %337 : vector<8x16xf32>
    %cst_128 = arith.constant dense<0.000000e+00> : vector<8x16xf32>
    %339 = tpu.matmul %338, %0, %cst_128 {dimension_numbers = #tpu.dot_dimension_numbers<[1], [0], [0], [1], [0, 0, 1, 1], [], []>} : vector<8x16xf32>, vector<16x16xf32>, vector<8x16xf32> -> vector<8x16xf32>
    %340 = arith.addf %339, %7 : vector<8x16xf32>
    %341 = arith.negf %340 : vector<8x16xf32>
    %342 = math.exp %341 : vector<8x16xf32>
    %cst_129 = arith.constant 1.000000e+00 : f32
    %343 = vector.broadcast %cst_129 : f32 to vector<8x16xf32>
    %344 = arith.addf %343, %342 : vector<8x16xf32>
    %345 = arith.divf %343, %344 : vector<8x16xf32>
    %346 = arith.mulf %338, %345 : vector<8x16xf32>
    %cst_130 = arith.constant 1.000000e+00 : f32
    %347 = vector.broadcast %cst_130 : f32 to vector<8x16xf32>
    %348 = arith.subf %347, %345 : vector<8x16xf32>
    %349 = arith.mulf %338, %348 : vector<8x16xf32>
    %350 = arith.addf %336, %346 : vector<8x16xf32>
    %cst_131 = arith.constant dense<0.000000e+00> : vector<8x32xf32>
    %351 = tpu.matmul %350, %1, %cst_131 {dimension_numbers = #tpu.dot_dimension_numbers<[1], [0], [0], [1], [0, 0, 1, 1], [], []>} : vector<8x16xf32>, vector<16x32xf32>, vector<8x32xf32> -> vector<8x32xf32>
    %352 = arith.addf %351, %10 : vector<8x32xf32>
    %cst_132 = arith.constant 0.000000e+00 : f32
    %353 = vector.broadcast %cst_132 : f32 to vector<8x32xf32>
    %354 = arith.maximumf %352, %353 : vector<8x32xf32>
    %cst_133 = arith.constant dense<0.000000e+00> : vector<8xf32>
    %355 = vector.multi_reduction <add>, %354, %cst_133 [1] : vector<8x32xf32> to vector<8xf32>
    %356 = vector.shape_cast %355 : vector<8xf32> to vector<8x1xf32>
    %357 = arith.mulf %354, %354 : vector<8x32xf32>
    %cst_134 = arith.constant dense<0.000000e+00> : vector<8xf32>
    %358 = vector.multi_reduction <add>, %357, %cst_134 [1] : vector<8x32xf32> to vector<8xf32>
    %359 = vector.shape_cast %358 : vector<8xf32> to vector<8x1xf32>
    %cst_135 = arith.constant 3.125000e-02 : f32
    %360 = vector.broadcast %cst_135 : f32 to vector<8x1xf32>
    %361 = arith.mulf %356, %360 : vector<8x1xf32>
    %cst_136 = arith.constant 3.125000e-02 : f32
    %362 = vector.broadcast %cst_136 : f32 to vector<8x1xf32>
    %363 = arith.mulf %359, %362 : vector<8x1xf32>
    %364 = arith.mulf %361, %361 : vector<8x1xf32>
    %365 = arith.subf %363, %364 : vector<8x1xf32>
    %366 = vector.broadcast %361 : vector<8x1xf32> to vector<8x32xf32>
    %367 = arith.subf %354, %366 : vector<8x32xf32>
    %cst_137 = arith.constant 9.99999974E-6 : f32
    %368 = vector.broadcast %cst_137 : f32 to vector<8x1xf32>
    %369 = arith.addf %365, %368 : vector<8x1xf32>
    %370 = math.rsqrt %369 : vector<8x1xf32>
    %371 = vector.broadcast %370 : vector<8x1xf32> to vector<8x32xf32>
    %372 = arith.mulf %367, %371 : vector<8x32xf32>
    %373 = arith.mulf %372, %13 : vector<8x32xf32>
    %374 = arith.addf %373, %16 : vector<8x32xf32>
    %cst_138 = arith.constant dense<0.000000e+00> : vector<8x32xf32>
    %375 = tpu.matmul %374, %2, %cst_138 {dimension_numbers = #tpu.dot_dimension_numbers<[1], [0], [0], [1], [0, 0, 1, 1], [], []>} : vector<8x32xf32>, vector<32x32xf32>, vector<8x32xf32> -> vector<8x32xf32>
    %376 = arith.addf %375, %19 : vector<8x32xf32>
    %377 = arith.negf %376 : vector<8x32xf32>
    %378 = math.exp %377 : vector<8x32xf32>
    %cst_139 = arith.constant 1.000000e+00 : f32
    %379 = vector.broadcast %cst_139 : f32 to vector<8x32xf32>
    %380 = arith.addf %379, %378 : vector<8x32xf32>
    %381 = arith.divf %379, %380 : vector<8x32xf32>
    %382 = arith.mulf %374, %381 : vector<8x32xf32>
    %383 = arith.subf %374, %382 : vector<8x32xf32>
    %384 = arith.addf %301, %383 : vector<8x32xf32>
    %cst_140 = arith.constant dense<0.000000e+00> : vector<8x32xf32>
    %385 = tpu.matmul %384, %3, %cst_140 {dimension_numbers = #tpu.dot_dimension_numbers<[1], [0], [0], [1], [0, 0, 1, 1], [], []>} : vector<8x32xf32>, vector<32x32xf32>, vector<8x32xf32> -> vector<8x32xf32>
    %386 = arith.addf %385, %22 : vector<8x32xf32>
    %387 = arith.negf %386 : vector<8x32xf32>
    %388 = math.exp %387 : vector<8x32xf32>
    %cst_141 = arith.constant 1.000000e+00 : f32
    %389 = vector.broadcast %cst_141 : f32 to vector<8x32xf32>
    %390 = arith.addf %389, %388 : vector<8x32xf32>
    %391 = arith.divf %389, %390 : vector<8x32xf32>
    %392 = arith.mulf %384, %391 : vector<8x32xf32>
    %cst_142 = arith.constant 1.000000e+00 : f32
    %393 = vector.broadcast %cst_142 : f32 to vector<8x32xf32>
    %394 = arith.subf %393, %391 : vector<8x32xf32>
    %395 = arith.mulf %384, %394 : vector<8x32xf32>
    %396 = arith.addf %382, %392 : vector<8x32xf32>
    %cst_143 = arith.constant dense<0.000000e+00> : vector<8x32xf32>
    %397 = tpu.matmul %396, %4, %cst_143 {dimension_numbers = #tpu.dot_dimension_numbers<[1], [0], [0], [1], [0, 0, 1, 1], [], []>} : vector<8x32xf32>, vector<32x32xf32>, vector<8x32xf32> -> vector<8x32xf32>
    %398 = arith.addf %397, %25 : vector<8x32xf32>
    %cst_144 = arith.constant 0.000000e+00 : f32
    %399 = vector.broadcast %cst_144 : f32 to vector<8x32xf32>
    %400 = arith.maximumf %398, %399 : vector<8x32xf32>
    %cst_145 = arith.constant dense<0.000000e+00> : vector<8xf32>
    %401 = vector.multi_reduction <add>, %400, %cst_145 [1] : vector<8x32xf32> to vector<8xf32>
    %402 = vector.shape_cast %401 : vector<8xf32> to vector<8x1xf32>
    %403 = arith.mulf %400, %400 : vector<8x32xf32>
    %cst_146 = arith.constant dense<0.000000e+00> : vector<8xf32>
    %404 = vector.multi_reduction <add>, %403, %cst_146 [1] : vector<8x32xf32> to vector<8xf32>
    %405 = vector.shape_cast %404 : vector<8xf32> to vector<8x1xf32>
    %cst_147 = arith.constant 3.125000e-02 : f32
    %406 = vector.broadcast %cst_147 : f32 to vector<8x1xf32>
    %407 = arith.mulf %402, %406 : vector<8x1xf32>
    %cst_148 = arith.constant 3.125000e-02 : f32
    %408 = vector.broadcast %cst_148 : f32 to vector<8x1xf32>
    %409 = arith.mulf %405, %408 : vector<8x1xf32>
    %410 = arith.mulf %407, %407 : vector<8x1xf32>
    %411 = arith.subf %409, %410 : vector<8x1xf32>
    %412 = vector.broadcast %407 : vector<8x1xf32> to vector<8x32xf32>
    %413 = arith.subf %400, %412 : vector<8x32xf32>
    %cst_149 = arith.constant 9.99999974E-6 : f32
    %414 = vector.broadcast %cst_149 : f32 to vector<8x1xf32>
    %415 = arith.addf %411, %414 : vector<8x1xf32>
    %416 = math.rsqrt %415 : vector<8x1xf32>
    %417 = vector.broadcast %416 : vector<8x1xf32> to vector<8x32xf32>
    %418 = arith.mulf %413, %417 : vector<8x32xf32>
    %419 = arith.mulf %418, %28 : vector<8x32xf32>
    %420 = arith.addf %419, %31 : vector<8x32xf32>
    %421 = arith.index_cast %c3_i32 : i32 to index
    %c0_150 = arith.constant 0 : index
    %c0_151 = arith.constant 0 : index
    %422 = vector.load %arg22[%421, %c0_150, %c0_151] : memref<8x8x32xf32, #tpu.memory_space<vmem>>, vector<1x8x32xf32>
    %423 = vector.shape_cast %422 : vector<1x8x32xf32> to vector<8x32xf32>
    %424 = vector.shape_cast %420 : vector<8x32xf32> to vector<1x8x32xf32>
    tpu.vector_store %arg22[%421, %c0_150, %c0_151], %424 {strides = array<i32>} : memref<8x8x32xf32, #tpu.memory_space<vmem>>, vector<1x8x32xf32>,
    %c4_i32 = arith.constant 4 : i32
    %425 = arith.index_cast %c4_i32 : i32 to index
    %c0_152 = arith.constant 0 : index
    %c0_153 = arith.constant 0 : index
    %426 = vector.load %arg1[%425, %c0_152, %c0_153] : memref<8x8x16xf32, #tpu.memory_space<vmem>>, vector<1x8x16xf32>
    %427 = vector.shape_cast %426 : vector<1x8x16xf32> to vector<8x16xf32>
    %428 = arith.index_cast %c4_i32 : i32 to index
    %c0_154 = arith.constant 0 : index
    %c0_155 = arith.constant 0 : index
    %429 = vector.load %arg21[%428, %c0_154, %c0_155] : memref<8x8x16xf32, #tpu.memory_space<vmem>>, vector<1x8x16xf32>
    %430 = vector.shape_cast %429 : vector<1x8x16xf32> to vector<8x16xf32>
    %431 = arith.subf %427, %430 : vector<8x16xf32>
    %432 = arith.addf %349, %431 : vector<8x16xf32>
    %cst_156 = arith.constant dense<0.000000e+00> : vector<8x16xf32>
    %433 = tpu.matmul %432, %0, %cst_156 {dimension_numbers = #tpu.dot_dimension_numbers<[1], [0], [0], [1], [0, 0, 1, 1], [], []>} : vector<8x16xf32>, vector<16x16xf32>, vector<8x16xf32> -> vector<8x16xf32>
    %434 = arith.addf %433, %7 : vector<8x16xf32>
    %435 = arith.negf %434 : vector<8x16xf32>
    %436 = math.exp %435 : vector<8x16xf32>
    %cst_157 = arith.constant 1.000000e+00 : f32
    %437 = vector.broadcast %cst_157 : f32 to vector<8x16xf32>
    %438 = arith.addf %437, %436 : vector<8x16xf32>
    %439 = arith.divf %437, %438 : vector<8x16xf32>
    %440 = arith.mulf %432, %439 : vector<8x16xf32>
    %cst_158 = arith.constant 1.000000e+00 : f32
    %441 = vector.broadcast %cst_158 : f32 to vector<8x16xf32>
    %442 = arith.subf %441, %439 : vector<8x16xf32>
    %443 = arith.mulf %432, %442 : vector<8x16xf32>
    %444 = arith.addf %430, %440 : vector<8x16xf32>
    %cst_159 = arith.constant dense<0.000000e+00> : vector<8x32xf32>
    %445 = tpu.matmul %444, %1, %cst_159 {dimension_numbers = #tpu.dot_dimension_numbers<[1], [0], [0], [1], [0, 0, 1, 1], [], []>} : vector<8x16xf32>, vector<16x32xf32>, vector<8x32xf32> -> vector<8x32xf32>
    %446 = arith.addf %445, %10 : vector<8x32xf32>
    %cst_160 = arith.constant 0.000000e+00 : f32
    %447 = vector.broadcast %cst_160 : f32 to vector<8x32xf32>
    %448 = arith.maximumf %446, %447 : vector<8x32xf32>
    %cst_161 = arith.constant dense<0.000000e+00> : vector<8xf32>
    %449 = vector.multi_reduction <add>, %448, %cst_161 [1] : vector<8x32xf32> to vector<8xf32>
    %450 = vector.shape_cast %449 : vector<8xf32> to vector<8x1xf32>
    %451 = arith.mulf %448, %448 : vector<8x32xf32>
    %cst_162 = arith.constant dense<0.000000e+00> : vector<8xf32>
    %452 = vector.multi_reduction <add>, %451, %cst_162 [1] : vector<8x32xf32> to vector<8xf32>
    %453 = vector.shape_cast %452 : vector<8xf32> to vector<8x1xf32>
    %cst_163 = arith.constant 3.125000e-02 : f32
    %454 = vector.broadcast %cst_163 : f32 to vector<8x1xf32>
    %455 = arith.mulf %450, %454 : vector<8x1xf32>
    %cst_164 = arith.constant 3.125000e-02 : f32
    %456 = vector.broadcast %cst_164 : f32 to vector<8x1xf32>
    %457 = arith.mulf %453, %456 : vector<8x1xf32>
    %458 = arith.mulf %455, %455 : vector<8x1xf32>
    %459 = arith.subf %457, %458 : vector<8x1xf32>
    %460 = vector.broadcast %455 : vector<8x1xf32> to vector<8x32xf32>
    %461 = arith.subf %448, %460 : vector<8x32xf32>
    %cst_165 = arith.constant 9.99999974E-6 : f32
    %462 = vector.broadcast %cst_165 : f32 to vector<8x1xf32>
    %463 = arith.addf %459, %462 : vector<8x1xf32>
    %464 = math.rsqrt %463 : vector<8x1xf32>
    %465 = vector.broadcast %464 : vector<8x1xf32> to vector<8x32xf32>
    %466 = arith.mulf %461, %465 : vector<8x32xf32>
    %467 = arith.mulf %466, %13 : vector<8x32xf32>
    %468 = arith.addf %467, %16 : vector<8x32xf32>
    %cst_166 = arith.constant dense<0.000000e+00> : vector<8x32xf32>
    %469 = tpu.matmul %468, %2, %cst_166 {dimension_numbers = #tpu.dot_dimension_numbers<[1], [0], [0], [1], [0, 0, 1, 1], [], []>} : vector<8x32xf32>, vector<32x32xf32>, vector<8x32xf32> -> vector<8x32xf32>
    %470 = arith.addf %469, %19 : vector<8x32xf32>
    %471 = arith.negf %470 : vector<8x32xf32>
    %472 = math.exp %471 : vector<8x32xf32>
    %cst_167 = arith.constant 1.000000e+00 : f32
    %473 = vector.broadcast %cst_167 : f32 to vector<8x32xf32>
    %474 = arith.addf %473, %472 : vector<8x32xf32>
    %475 = arith.divf %473, %474 : vector<8x32xf32>
    %476 = arith.mulf %468, %475 : vector<8x32xf32>
    %477 = arith.subf %468, %476 : vector<8x32xf32>
    %478 = arith.addf %395, %477 : vector<8x32xf32>
    %cst_168 = arith.constant dense<0.000000e+00> : vector<8x32xf32>
    %479 = tpu.matmul %478, %3, %cst_168 {dimension_numbers = #tpu.dot_dimension_numbers<[1], [0], [0], [1], [0, 0, 1, 1], [], []>} : vector<8x32xf32>, vector<32x32xf32>, vector<8x32xf32> -> vector<8x32xf32>
    %480 = arith.addf %479, %22 : vector<8x32xf32>
    %481 = arith.negf %480 : vector<8x32xf32>
    %482 = math.exp %481 : vector<8x32xf32>
    %cst_169 = arith.constant 1.000000e+00 : f32
    %483 = vector.broadcast %cst_169 : f32 to vector<8x32xf32>
    %484 = arith.addf %483, %482 : vector<8x32xf32>
    %485 = arith.divf %483, %484 : vector<8x32xf32>
    %486 = arith.mulf %478, %485 : vector<8x32xf32>
    %cst_170 = arith.constant 1.000000e+00 : f32
    %487 = vector.broadcast %cst_170 : f32 to vector<8x32xf32>
    %488 = arith.subf %487, %485 : vector<8x32xf32>
    %489 = arith.mulf %478, %488 : vector<8x32xf32>
    %490 = arith.addf %476, %486 : vector<8x32xf32>
    %cst_171 = arith.constant dense<0.000000e+00> : vector<8x32xf32>
    %491 = tpu.matmul %490, %4, %cst_171 {dimension_numbers = #tpu.dot_dimension_numbers<[1], [0], [0], [1], [0, 0, 1, 1], [], []>} : vector<8x32xf32>, vector<32x32xf32>, vector<8x32xf32> -> vector<8x32xf32>
    %492 = arith.addf %491, %25 : vector<8x32xf32>
    %cst_172 = arith.constant 0.000000e+00 : f32
    %493 = vector.broadcast %cst_172 : f32 to vector<8x32xf32>
    %494 = arith.maximumf %492, %493 : vector<8x32xf32>
    %cst_173 = arith.constant dense<0.000000e+00> : vector<8xf32>
    %495 = vector.multi_reduction <add>, %494, %cst_173 [1] : vector<8x32xf32> to vector<8xf32>
    %496 = vector.shape_cast %495 : vector<8xf32> to vector<8x1xf32>
    %497 = arith.mulf %494, %494 : vector<8x32xf32>
    %cst_174 = arith.constant dense<0.000000e+00> : vector<8xf32>
    %498 = vector.multi_reduction <add>, %497, %cst_174 [1] : vector<8x32xf32> to vector<8xf32>
    %499 = vector.shape_cast %498 : vector<8xf32> to vector<8x1xf32>
    %cst_175 = arith.constant 3.125000e-02 : f32
    %500 = vector.broadcast %cst_175 : f32 to vector<8x1xf32>
    %501 = arith.mulf %496, %500 : vector<8x1xf32>
    %cst_176 = arith.constant 3.125000e-02 : f32
    %502 = vector.broadcast %cst_176 : f32 to vector<8x1xf32>
    %503 = arith.mulf %499, %502 : vector<8x1xf32>
    %504 = arith.mulf %501, %501 : vector<8x1xf32>
    %505 = arith.subf %503, %504 : vector<8x1xf32>
    %506 = vector.broadcast %501 : vector<8x1xf32> to vector<8x32xf32>
    %507 = arith.subf %494, %506 : vector<8x32xf32>
    %cst_177 = arith.constant 9.99999974E-6 : f32
    %508 = vector.broadcast %cst_177 : f32 to vector<8x1xf32>
    %509 = arith.addf %505, %508 : vector<8x1xf32>
    %510 = math.rsqrt %509 : vector<8x1xf32>
    %511 = vector.broadcast %510 : vector<8x1xf32> to vector<8x32xf32>
    %512 = arith.mulf %507, %511 : vector<8x32xf32>
    %513 = arith.mulf %512, %28 : vector<8x32xf32>
    %514 = arith.addf %513, %31 : vector<8x32xf32>
    %515 = arith.index_cast %c4_i32 : i32 to index
    %c0_178 = arith.constant 0 : index
    %c0_179 = arith.constant 0 : index
    %516 = vector.load %arg22[%515, %c0_178, %c0_179] : memref<8x8x32xf32, #tpu.memory_space<vmem>>, vector<1x8x32xf32>
    %517 = vector.shape_cast %516 : vector<1x8x32xf32> to vector<8x32xf32>
    %518 = vector.shape_cast %514 : vector<8x32xf32> to vector<1x8x32xf32>
    tpu.vector_store %arg22[%515, %c0_178, %c0_179], %518 {strides = array<i32>} : memref<8x8x32xf32, #tpu.memory_space<vmem>>, vector<1x8x32xf32>,
    %c5_i32 = arith.constant 5 : i32
    %519 = arith.index_cast %c5_i32 : i32 to index
    %c0_180 = arith.constant 0 : index
    %c0_181 = arith.constant 0 : index
    %520 = vector.load %arg1[%519, %c0_180, %c0_181] : memref<8x8x16xf32, #tpu.memory_space<vmem>>, vector<1x8x16xf32>
    %521 = vector.shape_cast %520 : vector<1x8x16xf32> to vector<8x16xf32>
    %522 = arith.index_cast %c5_i32 : i32 to index
    %c0_182 = arith.constant 0 : index
    %c0_183 = arith.constant 0 : index
    %523 = vector.load %arg21[%522, %c0_182, %c0_183] : memref<8x8x16xf32, #tpu.memory_space<vmem>>, vector<1x8x16xf32>
    %524 = vector.shape_cast %523 : vector<1x8x16xf32> to vector<8x16xf32>
    %525 = arith.subf %521, %524 : vector<8x16xf32>
    %526 = arith.addf %443, %525 : vector<8x16xf32>
    %cst_184 = arith.constant dense<0.000000e+00> : vector<8x16xf32>
    %527 = tpu.matmul %526, %0, %cst_184 {dimension_numbers = #tpu.dot_dimension_numbers<[1], [0], [0], [1], [0, 0, 1, 1], [], []>} : vector<8x16xf32>, vector<16x16xf32>, vector<8x16xf32> -> vector<8x16xf32>
    %528 = arith.addf %527, %7 : vector<8x16xf32>
    %529 = arith.negf %528 : vector<8x16xf32>
    %530 = math.exp %529 : vector<8x16xf32>
    %cst_185 = arith.constant 1.000000e+00 : f32
    %531 = vector.broadcast %cst_185 : f32 to vector<8x16xf32>
    %532 = arith.addf %531, %530 : vector<8x16xf32>
    %533 = arith.divf %531, %532 : vector<8x16xf32>
    %534 = arith.mulf %526, %533 : vector<8x16xf32>
    %cst_186 = arith.constant 1.000000e+00 : f32
    %535 = vector.broadcast %cst_186 : f32 to vector<8x16xf32>
    %536 = arith.subf %535, %533 : vector<8x16xf32>
    %537 = arith.mulf %526, %536 : vector<8x16xf32>
    %538 = arith.addf %524, %534 : vector<8x16xf32>
    %cst_187 = arith.constant dense<0.000000e+00> : vector<8x32xf32>
    %539 = tpu.matmul %538, %1, %cst_187 {dimension_numbers = #tpu.dot_dimension_numbers<[1], [0], [0], [1], [0, 0, 1, 1], [], []>} : vector<8x16xf32>, vector<16x32xf32>, vector<8x32xf32> -> vector<8x32xf32>
    %540 = arith.addf %539, %10 : vector<8x32xf32>
    %cst_188 = arith.constant 0.000000e+00 : f32
    %541 = vector.broadcast %cst_188 : f32 to vector<8x32xf32>
    %542 = arith.maximumf %540, %541 : vector<8x32xf32>
    %cst_189 = arith.constant dense<0.000000e+00> : vector<8xf32>
    %543 = vector.multi_reduction <add>, %542, %cst_189 [1] : vector<8x32xf32> to vector<8xf32>
    %544 = vector.shape_cast %543 : vector<8xf32> to vector<8x1xf32>
    %545 = arith.mulf %542, %542 : vector<8x32xf32>
    %cst_190 = arith.constant dense<0.000000e+00> : vector<8xf32>
    %546 = vector.multi_reduction <add>, %545, %cst_190 [1] : vector<8x32xf32> to vector<8xf32>
    %547 = vector.shape_cast %546 : vector<8xf32> to vector<8x1xf32>
    %cst_191 = arith.constant 3.125000e-02 : f32
    %548 = vector.broadcast %cst_191 : f32 to vector<8x1xf32>
    %549 = arith.mulf %544, %548 : vector<8x1xf32>
    %cst_192 = arith.constant 3.125000e-02 : f32
    %550 = vector.broadcast %cst_192 : f32 to vector<8x1xf32>
    %551 = arith.mulf %547, %550 : vector<8x1xf32>
    %552 = arith.mulf %549, %549 : vector<8x1xf32>
    %553 = arith.subf %551, %552 : vector<8x1xf32>
    %554 = vector.broadcast %549 : vector<8x1xf32> to vector<8x32xf32>
    %555 = arith.subf %542, %554 : vector<8x32xf32>
    %cst_193 = arith.constant 9.99999974E-6 : f32
    %556 = vector.broadcast %cst_193 : f32 to vector<8x1xf32>
    %557 = arith.addf %553, %556 : vector<8x1xf32>
    %558 = math.rsqrt %557 : vector<8x1xf32>
    %559 = vector.broadcast %558 : vector<8x1xf32> to vector<8x32xf32>
    %560 = arith.mulf %555, %559 : vector<8x32xf32>
    %561 = arith.mulf %560, %13 : vector<8x32xf32>
    %562 = arith.addf %561, %16 : vector<8x32xf32>
    %cst_194 = arith.constant dense<0.000000e+00> : vector<8x32xf32>
    %563 = tpu.matmul %562, %2, %cst_194 {dimension_numbers = #tpu.dot_dimension_numbers<[1], [0], [0], [1], [0, 0, 1, 1], [], []>} : vector<8x32xf32>, vector<32x32xf32>, vector<8x32xf32> -> vector<8x32xf32>
    %564 = arith.addf %563, %19 : vector<8x32xf32>
    %565 = arith.negf %564 : vector<8x32xf32>
    %566 = math.exp %565 : vector<8x32xf32>
    %cst_195 = arith.constant 1.000000e+00 : f32
    %567 = vector.broadcast %cst_195 : f32 to vector<8x32xf32>
    %568 = arith.addf %567, %566 : vector<8x32xf32>
    %569 = arith.divf %567, %568 : vector<8x32xf32>
    %570 = arith.mulf %562, %569 : vector<8x32xf32>
    %571 = arith.subf %562, %570 : vector<8x32xf32>
    %572 = arith.addf %489, %571 : vector<8x32xf32>
    %cst_196 = arith.constant dense<0.000000e+00> : vector<8x32xf32>
    %573 = tpu.matmul %572, %3, %cst_196 {dimension_numbers = #tpu.dot_dimension_numbers<[1], [0], [0], [1], [0, 0, 1, 1], [], []>} : vector<8x32xf32>, vector<32x32xf32>, vector<8x32xf32> -> vector<8x32xf32>
    %574 = arith.addf %573, %22 : vector<8x32xf32>
    %575 = arith.negf %574 : vector<8x32xf32>
    %576 = math.exp %575 : vector<8x32xf32>
    %cst_197 = arith.constant 1.000000e+00 : f32
    %577 = vector.broadcast %cst_197 : f32 to vector<8x32xf32>
    %578 = arith.addf %577, %576 : vector<8x32xf32>
    %579 = arith.divf %577, %578 : vector<8x32xf32>
    %580 = arith.mulf %572, %579 : vector<8x32xf32>
    %cst_198 = arith.constant 1.000000e+00 : f32
    %581 = vector.broadcast %cst_198 : f32 to vector<8x32xf32>
    %582 = arith.subf %581, %579 : vector<8x32xf32>
    %583 = arith.mulf %572, %582 : vector<8x32xf32>
    %584 = arith.addf %570, %580 : vector<8x32xf32>
    %cst_199 = arith.constant dense<0.000000e+00> : vector<8x32xf32>
    %585 = tpu.matmul %584, %4, %cst_199 {dimension_numbers = #tpu.dot_dimension_numbers<[1], [0], [0], [1], [0, 0, 1, 1], [], []>} : vector<8x32xf32>, vector<32x32xf32>, vector<8x32xf32> -> vector<8x32xf32>
    %586 = arith.addf %585, %25 : vector<8x32xf32>
    %cst_200 = arith.constant 0.000000e+00 : f32
    %587 = vector.broadcast %cst_200 : f32 to vector<8x32xf32>
    %588 = arith.maximumf %586, %587 : vector<8x32xf32>
    %cst_201 = arith.constant dense<0.000000e+00> : vector<8xf32>
    %589 = vector.multi_reduction <add>, %588, %cst_201 [1] : vector<8x32xf32> to vector<8xf32>
    %590 = vector.shape_cast %589 : vector<8xf32> to vector<8x1xf32>
    %591 = arith.mulf %588, %588 : vector<8x32xf32>
    %cst_202 = arith.constant dense<0.000000e+00> : vector<8xf32>
    %592 = vector.multi_reduction <add>, %591, %cst_202 [1] : vector<8x32xf32> to vector<8xf32>
    %593 = vector.shape_cast %592 : vector<8xf32> to vector<8x1xf32>
    %cst_203 = arith.constant 3.125000e-02 : f32
    %594 = vector.broadcast %cst_203 : f32 to vector<8x1xf32>
    %595 = arith.mulf %590, %594 : vector<8x1xf32>
    %cst_204 = arith.constant 3.125000e-02 : f32
    %596 = vector.broadcast %cst_204 : f32 to vector<8x1xf32>
    %597 = arith.mulf %593, %596 : vector<8x1xf32>
    %598 = arith.mulf %595, %595 : vector<8x1xf32>
    %599 = arith.subf %597, %598 : vector<8x1xf32>
    %600 = vector.broadcast %595 : vector<8x1xf32> to vector<8x32xf32>
    %601 = arith.subf %588, %600 : vector<8x32xf32>
    %cst_205 = arith.constant 9.99999974E-6 : f32
    %602 = vector.broadcast %cst_205 : f32 to vector<8x1xf32>
    %603 = arith.addf %599, %602 : vector<8x1xf32>
    %604 = math.rsqrt %603 : vector<8x1xf32>
    %605 = vector.broadcast %604 : vector<8x1xf32> to vector<8x32xf32>
    %606 = arith.mulf %601, %605 : vector<8x32xf32>
    %607 = arith.mulf %606, %28 : vector<8x32xf32>
    %608 = arith.addf %607, %31 : vector<8x32xf32>
    %609 = arith.index_cast %c5_i32 : i32 to index
    %c0_206 = arith.constant 0 : index
    %c0_207 = arith.constant 0 : index
    %610 = vector.load %arg22[%609, %c0_206, %c0_207] : memref<8x8x32xf32, #tpu.memory_space<vmem>>, vector<1x8x32xf32>
    %611 = vector.shape_cast %610 : vector<1x8x32xf32> to vector<8x32xf32>
    %612 = vector.shape_cast %608 : vector<8x32xf32> to vector<1x8x32xf32>
    tpu.vector_store %arg22[%609, %c0_206, %c0_207], %612 {strides = array<i32>} : memref<8x8x32xf32, #tpu.memory_space<vmem>>, vector<1x8x32xf32>,
    %c6_i32 = arith.constant 6 : i32
    %613 = arith.index_cast %c6_i32 : i32 to index
    %c0_208 = arith.constant 0 : index
    %c0_209 = arith.constant 0 : index
    %614 = vector.load %arg1[%613, %c0_208, %c0_209] : memref<8x8x16xf32, #tpu.memory_space<vmem>>, vector<1x8x16xf32>
    %615 = vector.shape_cast %614 : vector<1x8x16xf32> to vector<8x16xf32>
    %616 = arith.index_cast %c6_i32 : i32 to index
    %c0_210 = arith.constant 0 : index
    %c0_211 = arith.constant 0 : index
    %617 = vector.load %arg21[%616, %c0_210, %c0_211] : memref<8x8x16xf32, #tpu.memory_space<vmem>>, vector<1x8x16xf32>
    %618 = vector.shape_cast %617 : vector<1x8x16xf32> to vector<8x16xf32>
    %619 = arith.subf %615, %618 : vector<8x16xf32>
    %620 = arith.addf %537, %619 : vector<8x16xf32>
    %cst_212 = arith.constant dense<0.000000e+00> : vector<8x16xf32>
    %621 = tpu.matmul %620, %0, %cst_212 {dimension_numbers = #tpu.dot_dimension_numbers<[1], [0], [0], [1], [0, 0, 1, 1], [], []>} : vector<8x16xf32>, vector<16x16xf32>, vector<8x16xf32> -> vector<8x16xf32>
    %622 = arith.addf %621, %7 : vector<8x16xf32>
    %623 = arith.negf %622 : vector<8x16xf32>
    %624 = math.exp %623 : vector<8x16xf32>
    %cst_213 = arith.constant 1.000000e+00 : f32
    %625 = vector.broadcast %cst_213 : f32 to vector<8x16xf32>
    %626 = arith.addf %625, %624 : vector<8x16xf32>
    %627 = arith.divf %625, %626 : vector<8x16xf32>
    %628 = arith.mulf %620, %627 : vector<8x16xf32>
    %cst_214 = arith.constant 1.000000e+00 : f32
    %629 = vector.broadcast %cst_214 : f32 to vector<8x16xf32>
    %630 = arith.subf %629, %627 : vector<8x16xf32>
    %631 = arith.mulf %620, %630 : vector<8x16xf32>
    %632 = arith.addf %618, %628 : vector<8x16xf32>
    %cst_215 = arith.constant dense<0.000000e+00> : vector<8x32xf32>
    %633 = tpu.matmul %632, %1, %cst_215 {dimension_numbers = #tpu.dot_dimension_numbers<[1], [0], [0], [1], [0, 0, 1, 1], [], []>} : vector<8x16xf32>, vector<16x32xf32>, vector<8x32xf32> -> vector<8x32xf32>
    %634 = arith.addf %633, %10 : vector<8x32xf32>
    %cst_216 = arith.constant 0.000000e+00 : f32
    %635 = vector.broadcast %cst_216 : f32 to vector<8x32xf32>
    %636 = arith.maximumf %634, %635 : vector<8x32xf32>
    %cst_217 = arith.constant dense<0.000000e+00> : vector<8xf32>
    %637 = vector.multi_reduction <add>, %636, %cst_217 [1] : vector<8x32xf32> to vector<8xf32>
    %638 = vector.shape_cast %637 : vector<8xf32> to vector<8x1xf32>
    %639 = arith.mulf %636, %636 : vector<8x32xf32>
    %cst_218 = arith.constant dense<0.000000e+00> : vector<8xf32>
    %640 = vector.multi_reduction <add>, %639, %cst_218 [1] : vector<8x32xf32> to vector<8xf32>
    %641 = vector.shape_cast %640 : vector<8xf32> to vector<8x1xf32>
    %cst_219 = arith.constant 3.125000e-02 : f32
    %642 = vector.broadcast %cst_219 : f32 to vector<8x1xf32>
    %643 = arith.mulf %638, %642 : vector<8x1xf32>
    %cst_220 = arith.constant 3.125000e-02 : f32
    %644 = vector.broadcast %cst_220 : f32 to vector<8x1xf32>
    %645 = arith.mulf %641, %644 : vector<8x1xf32>
    %646 = arith.mulf %643, %643 : vector<8x1xf32>
    %647 = arith.subf %645, %646 : vector<8x1xf32>
    %648 = vector.broadcast %643 : vector<8x1xf32> to vector<8x32xf32>
    %649 = arith.subf %636, %648 : vector<8x32xf32>
    %cst_221 = arith.constant 9.99999974E-6 : f32
    %650 = vector.broadcast %cst_221 : f32 to vector<8x1xf32>
    %651 = arith.addf %647, %650 : vector<8x1xf32>
    %652 = math.rsqrt %651 : vector<8x1xf32>
    %653 = vector.broadcast %652 : vector<8x1xf32> to vector<8x32xf32>
    %654 = arith.mulf %649, %653 : vector<8x32xf32>
    %655 = arith.mulf %654, %13 : vector<8x32xf32>
    %656 = arith.addf %655, %16 : vector<8x32xf32>
    %cst_222 = arith.constant dense<0.000000e+00> : vector<8x32xf32>
    %657 = tpu.matmul %656, %2, %cst_222 {dimension_numbers = #tpu.dot_dimension_numbers<[1], [0], [0], [1], [0, 0, 1, 1], [], []>} : vector<8x32xf32>, vector<32x32xf32>, vector<8x32xf32> -> vector<8x32xf32>
    %658 = arith.addf %657, %19 : vector<8x32xf32>
    %659 = arith.negf %658 : vector<8x32xf32>
    %660 = math.exp %659 : vector<8x32xf32>
    %cst_223 = arith.constant 1.000000e+00 : f32
    %661 = vector.broadcast %cst_223 : f32 to vector<8x32xf32>
    %662 = arith.addf %661, %660 : vector<8x32xf32>
    %663 = arith.divf %661, %662 : vector<8x32xf32>
    %664 = arith.mulf %656, %663 : vector<8x32xf32>
    %665 = arith.subf %656, %664 : vector<8x32xf32>
    %666 = arith.addf %583, %665 : vector<8x32xf32>
    %cst_224 = arith.constant dense<0.000000e+00> : vector<8x32xf32>
    %667 = tpu.matmul %666, %3, %cst_224 {dimension_numbers = #tpu.dot_dimension_numbers<[1], [0], [0], [1], [0, 0, 1, 1], [], []>} : vector<8x32xf32>, vector<32x32xf32>, vector<8x32xf32> -> vector<8x32xf32>
    %668 = arith.addf %667, %22 : vector<8x32xf32>
    %669 = arith.negf %668 : vector<8x32xf32>
    %670 = math.exp %669 : vector<8x32xf32>
    %cst_225 = arith.constant 1.000000e+00 : f32
    %671 = vector.broadcast %cst_225 : f32 to vector<8x32xf32>
    %672 = arith.addf %671, %670 : vector<8x32xf32>
    %673 = arith.divf %671, %672 : vector<8x32xf32>
    %674 = arith.mulf %666, %673 : vector<8x32xf32>
    %cst_226 = arith.constant 1.000000e+00 : f32
    %675 = vector.broadcast %cst_226 : f32 to vector<8x32xf32>
    %676 = arith.subf %675, %673 : vector<8x32xf32>
    %677 = arith.mulf %666, %676 : vector<8x32xf32>
    %678 = arith.addf %664, %674 : vector<8x32xf32>
    %cst_227 = arith.constant dense<0.000000e+00> : vector<8x32xf32>
    %679 = tpu.matmul %678, %4, %cst_227 {dimension_numbers = #tpu.dot_dimension_numbers<[1], [0], [0], [1], [0, 0, 1, 1], [], []>} : vector<8x32xf32>, vector<32x32xf32>, vector<8x32xf32> -> vector<8x32xf32>
    %680 = arith.addf %679, %25 : vector<8x32xf32>
    %cst_228 = arith.constant 0.000000e+00 : f32
    %681 = vector.broadcast %cst_228 : f32 to vector<8x32xf32>
    %682 = arith.maximumf %680, %681 : vector<8x32xf32>
    %cst_229 = arith.constant dense<0.000000e+00> : vector<8xf32>
    %683 = vector.multi_reduction <add>, %682, %cst_229 [1] : vector<8x32xf32> to vector<8xf32>
    %684 = vector.shape_cast %683 : vector<8xf32> to vector<8x1xf32>
    %685 = arith.mulf %682, %682 : vector<8x32xf32>
    %cst_230 = arith.constant dense<0.000000e+00> : vector<8xf32>
    %686 = vector.multi_reduction <add>, %685, %cst_230 [1] : vector<8x32xf32> to vector<8xf32>
    %687 = vector.shape_cast %686 : vector<8xf32> to vector<8x1xf32>
    %cst_231 = arith.constant 3.125000e-02 : f32
    %688 = vector.broadcast %cst_231 : f32 to vector<8x1xf32>
    %689 = arith.mulf %684, %688 : vector<8x1xf32>
    %cst_232 = arith.constant 3.125000e-02 : f32
    %690 = vector.broadcast %cst_232 : f32 to vector<8x1xf32>
    %691 = arith.mulf %687, %690 : vector<8x1xf32>
    %692 = arith.mulf %689, %689 : vector<8x1xf32>
    %693 = arith.subf %691, %692 : vector<8x1xf32>
    %694 = vector.broadcast %689 : vector<8x1xf32> to vector<8x32xf32>
    %695 = arith.subf %682, %694 : vector<8x32xf32>
    %cst_233 = arith.constant 9.99999974E-6 : f32
    %696 = vector.broadcast %cst_233 : f32 to vector<8x1xf32>
    %697 = arith.addf %693, %696 : vector<8x1xf32>
    %698 = math.rsqrt %697 : vector<8x1xf32>
    %699 = vector.broadcast %698 : vector<8x1xf32> to vector<8x32xf32>
    %700 = arith.mulf %695, %699 : vector<8x32xf32>
    %701 = arith.mulf %700, %28 : vector<8x32xf32>
    %702 = arith.addf %701, %31 : vector<8x32xf32>
    %703 = arith.index_cast %c6_i32 : i32 to index
    %c0_234 = arith.constant 0 : index
    %c0_235 = arith.constant 0 : index
    %704 = vector.load %arg22[%703, %c0_234, %c0_235] : memref<8x8x32xf32, #tpu.memory_space<vmem>>, vector<1x8x32xf32>
    %705 = vector.shape_cast %704 : vector<1x8x32xf32> to vector<8x32xf32>
    %706 = vector.shape_cast %702 : vector<8x32xf32> to vector<1x8x32xf32>
    tpu.vector_store %arg22[%703, %c0_234, %c0_235], %706 {strides = array<i32>} : memref<8x8x32xf32, #tpu.memory_space<vmem>>, vector<1x8x32xf32>,
    %c7_i32 = arith.constant 7 : i32
    %707 = arith.index_cast %c7_i32 : i32 to index
    %c0_236 = arith.constant 0 : index
    %c0_237 = arith.constant 0 : index
    %708 = vector.load %arg1[%707, %c0_236, %c0_237] : memref<8x8x16xf32, #tpu.memory_space<vmem>>, vector<1x8x16xf32>
    %709 = vector.shape_cast %708 : vector<1x8x16xf32> to vector<8x16xf32>
    %710 = arith.index_cast %c7_i32 : i32 to index
    %c0_238 = arith.constant 0 : index
    %c0_239 = arith.constant 0 : index
    %711 = vector.load %arg21[%710, %c0_238, %c0_239] : memref<8x8x16xf32, #tpu.memory_space<vmem>>, vector<1x8x16xf32>
    %712 = vector.shape_cast %711 : vector<1x8x16xf32> to vector<8x16xf32>
    %713 = arith.subf %709, %712 : vector<8x16xf32>
    %714 = arith.addf %631, %713 : vector<8x16xf32>
    %cst_240 = arith.constant dense<0.000000e+00> : vector<8x16xf32>
    %715 = tpu.matmul %714, %0, %cst_240 {dimension_numbers = #tpu.dot_dimension_numbers<[1], [0], [0], [1], [0, 0, 1, 1], [], []>} : vector<8x16xf32>, vector<16x16xf32>, vector<8x16xf32> -> vector<8x16xf32>
    %716 = arith.addf %715, %7 : vector<8x16xf32>
    %717 = arith.negf %716 : vector<8x16xf32>
    %718 = math.exp %717 : vector<8x16xf32>
    %cst_241 = arith.constant 1.000000e+00 : f32
    %719 = vector.broadcast %cst_241 : f32 to vector<8x16xf32>
    %720 = arith.addf %719, %718 : vector<8x16xf32>
    %721 = arith.divf %719, %720 : vector<8x16xf32>
    %722 = arith.mulf %714, %721 : vector<8x16xf32>
    %cst_242 = arith.constant 1.000000e+00 : f32
    %723 = vector.broadcast %cst_242 : f32 to vector<8x16xf32>
    %724 = arith.subf %723, %721 : vector<8x16xf32>
    %725 = arith.mulf %714, %724 : vector<8x16xf32>
    %726 = arith.addf %712, %722 : vector<8x16xf32>
    %cst_243 = arith.constant dense<0.000000e+00> : vector<8x32xf32>
    %727 = tpu.matmul %726, %1, %cst_243 {dimension_numbers = #tpu.dot_dimension_numbers<[1], [0], [0], [1], [0, 0, 1, 1], [], []>} : vector<8x16xf32>, vector<16x32xf32>, vector<8x32xf32> -> vector<8x32xf32>
    %728 = arith.addf %727, %10 : vector<8x32xf32>
    %cst_244 = arith.constant 0.000000e+00 : f32
    %729 = vector.broadcast %cst_244 : f32 to vector<8x32xf32>
    %730 = arith.maximumf %728, %729 : vector<8x32xf32>
    %cst_245 = arith.constant dense<0.000000e+00> : vector<8xf32>
    %731 = vector.multi_reduction <add>, %730, %cst_245 [1] : vector<8x32xf32> to vector<8xf32>
    %732 = vector.shape_cast %731 : vector<8xf32> to vector<8x1xf32>
    %733 = arith.mulf %730, %730 : vector<8x32xf32>
    %cst_246 = arith.constant dense<0.000000e+00> : vector<8xf32>
    %734 = vector.multi_reduction <add>, %733, %cst_246 [1] : vector<8x32xf32> to vector<8xf32>
    %735 = vector.shape_cast %734 : vector<8xf32> to vector<8x1xf32>
    %cst_247 = arith.constant 3.125000e-02 : f32
    %736 = vector.broadcast %cst_247 : f32 to vector<8x1xf32>
    %737 = arith.mulf %732, %736 : vector<8x1xf32>
    %cst_248 = arith.constant 3.125000e-02 : f32
    %738 = vector.broadcast %cst_248 : f32 to vector<8x1xf32>
    %739 = arith.mulf %735, %738 : vector<8x1xf32>
    %740 = arith.mulf %737, %737 : vector<8x1xf32>
    %741 = arith.subf %739, %740 : vector<8x1xf32>
    %742 = vector.broadcast %737 : vector<8x1xf32> to vector<8x32xf32>
    %743 = arith.subf %730, %742 : vector<8x32xf32>
    %cst_249 = arith.constant 9.99999974E-6 : f32
    %744 = vector.broadcast %cst_249 : f32 to vector<8x1xf32>
    %745 = arith.addf %741, %744 : vector<8x1xf32>
    %746 = math.rsqrt %745 : vector<8x1xf32>
    %747 = vector.broadcast %746 : vector<8x1xf32> to vector<8x32xf32>
    %748 = arith.mulf %743, %747 : vector<8x32xf32>
    %749 = arith.mulf %748, %13 : vector<8x32xf32>
    %750 = arith.addf %749, %16 : vector<8x32xf32>
    %cst_250 = arith.constant dense<0.000000e+00> : vector<8x32xf32>
    %751 = tpu.matmul %750, %2, %cst_250 {dimension_numbers = #tpu.dot_dimension_numbers<[1], [0], [0], [1], [0, 0, 1, 1], [], []>} : vector<8x32xf32>, vector<32x32xf32>, vector<8x32xf32> -> vector<8x32xf32>
    %752 = arith.addf %751, %19 : vector<8x32xf32>
    %753 = arith.negf %752 : vector<8x32xf32>
    %754 = math.exp %753 : vector<8x32xf32>
    %cst_251 = arith.constant 1.000000e+00 : f32
    %755 = vector.broadcast %cst_251 : f32 to vector<8x32xf32>
    %756 = arith.addf %755, %754 : vector<8x32xf32>
    %757 = arith.divf %755, %756 : vector<8x32xf32>
    %758 = arith.mulf %750, %757 : vector<8x32xf32>
    %759 = arith.subf %750, %758 : vector<8x32xf32>
    %760 = arith.addf %677, %759 : vector<8x32xf32>
    %cst_252 = arith.constant dense<0.000000e+00> : vector<8x32xf32>
    %761 = tpu.matmul %760, %3, %cst_252 {dimension_numbers = #tpu.dot_dimension_numbers<[1], [0], [0], [1], [0, 0, 1, 1], [], []>} : vector<8x32xf32>, vector<32x32xf32>, vector<8x32xf32> -> vector<8x32xf32>
    %762 = arith.addf %761, %22 : vector<8x32xf32>
    %763 = arith.negf %762 : vector<8x32xf32>
    %764 = math.exp %763 : vector<8x32xf32>
    %cst_253 = arith.constant 1.000000e+00 : f32
    %765 = vector.broadcast %cst_253 : f32 to vector<8x32xf32>
    %766 = arith.addf %765, %764 : vector<8x32xf32>
    %767 = arith.divf %765, %766 : vector<8x32xf32>
    %768 = arith.mulf %760, %767 : vector<8x32xf32>
    %cst_254 = arith.constant 1.000000e+00 : f32
    %769 = vector.broadcast %cst_254 : f32 to vector<8x32xf32>
    %770 = arith.subf %769, %767 : vector<8x32xf32>
    %771 = arith.mulf %760, %770 : vector<8x32xf32>
    %772 = arith.addf %758, %768 : vector<8x32xf32>
    %cst_255 = arith.constant dense<0.000000e+00> : vector<8x32xf32>
    %773 = tpu.matmul %772, %4, %cst_255 {dimension_numbers = #tpu.dot_dimension_numbers<[1], [0], [0], [1], [0, 0, 1, 1], [], []>} : vector<8x32xf32>, vector<32x32xf32>, vector<8x32xf32> -> vector<8x32xf32>
    %774 = arith.addf %773, %25 : vector<8x32xf32>
    %cst_256 = arith.constant 0.000000e+00 : f32
    %775 = vector.broadcast %cst_256 : f32 to vector<8x32xf32>
    %776 = arith.maximumf %774, %775 : vector<8x32xf32>
    %cst_257 = arith.constant dense<0.000000e+00> : vector<8xf32>
    %777 = vector.multi_reduction <add>, %776, %cst_257 [1] : vector<8x32xf32> to vector<8xf32>
    %778 = vector.shape_cast %777 : vector<8xf32> to vector<8x1xf32>
    %779 = arith.mulf %776, %776 : vector<8x32xf32>
    %cst_258 = arith.constant dense<0.000000e+00> : vector<8xf32>
    %780 = vector.multi_reduction <add>, %779, %cst_258 [1] : vector<8x32xf32> to vector<8xf32>
    %781 = vector.shape_cast %780 : vector<8xf32> to vector<8x1xf32>
    %cst_259 = arith.constant 3.125000e-02 : f32
    %782 = vector.broadcast %cst_259 : f32 to vector<8x1xf32>
    %783 = arith.mulf %778, %782 : vector<8x1xf32>
    %cst_260 = arith.constant 3.125000e-02 : f32
    %784 = vector.broadcast %cst_260 : f32 to vector<8x1xf32>
    %785 = arith.mulf %781, %784 : vector<8x1xf32>
    %786 = arith.mulf %783, %783 : vector<8x1xf32>
    %787 = arith.subf %785, %786 : vector<8x1xf32>
    %788 = vector.broadcast %783 : vector<8x1xf32> to vector<8x32xf32>
    %789 = arith.subf %776, %788 : vector<8x32xf32>
    %cst_261 = arith.constant 9.99999974E-6 : f32
    %790 = vector.broadcast %cst_261 : f32 to vector<8x1xf32>
    %791 = arith.addf %787, %790 : vector<8x1xf32>
    %792 = math.rsqrt %791 : vector<8x1xf32>
    %793 = vector.broadcast %792 : vector<8x1xf32> to vector<8x32xf32>
    %794 = arith.mulf %789, %793 : vector<8x32xf32>
    %795 = arith.mulf %794, %28 : vector<8x32xf32>
    %796 = arith.addf %795, %31 : vector<8x32xf32>
    %797 = arith.index_cast %c7_i32 : i32 to index
    %c0_262 = arith.constant 0 : index
    %c0_263 = arith.constant 0 : index
    %798 = vector.load %arg22[%797, %c0_262, %c0_263] : memref<8x8x32xf32, #tpu.memory_space<vmem>>, vector<1x8x32xf32>
    %799 = vector.shape_cast %798 : vector<1x8x32xf32> to vector<8x32xf32>
    %800 = vector.shape_cast %796 : vector<8x32xf32> to vector<1x8x32xf32>
    tpu.vector_store %arg22[%797, %c0_262, %c0_263], %800 {strides = array<i32>} : memref<8x8x32xf32, #tpu.memory_space<vmem>>, vector<1x8x32xf32>,
    %c8_i32 = arith.constant 8 : i32
    %c0_264 = arith.constant 0 : index
    %c0_265 = arith.constant 0 : index
    %c0_266 = arith.constant 0 : index
    %801 = vector.load %arg22[%c0_264, %c0_265, %c0_266] : memref<8x8x32xf32, #tpu.memory_space<vmem>>, vector<8x8x32xf32>
    %802 = vector.shape_cast %801 : vector<8x8x32xf32> to vector<64x32xf32>
    %c0_267 = arith.constant 0 : index
    %c0_268 = arith.constant 0 : index
    %803 = vector.load %arg18[%c0_267, %c0_268] : memref<32x8xf32, #tpu.memory_space<vmem>>, vector<32x8xf32>
    %cst_269 = arith.constant dense<0.000000e+00> : vector<64x8xf32>
    %804 = tpu.matmul %802, %803, %cst_269 {dimension_numbers = #tpu.dot_dimension_numbers<[1], [0], [0], [1], [0, 0, 1, 1], [], []>} : vector<64x32xf32>, vector<32x8xf32>, vector<64x8xf32> -> vector<64x8xf32>
    %c0_270 = arith.constant 0 : index
    %c0_271 = arith.constant 0 : index
    %805 = vector.load %arg19[%c0_270, %c0_271] : memref<1x8xf32, #tpu.memory_space<vmem>>, vector<1x8xf32>
    %806 = vector.broadcast %805 : vector<1x8xf32> to vector<64x8xf32>
    %807 = arith.addf %804, %806 : vector<64x8xf32>
    %808 = vector.shape_cast %807 : vector<64x8xf32> to vector<8x8x8xf32>
    %c0_272 = arith.constant 0 : index
    %c0_273 = arith.constant 0 : index
    %c0_274 = arith.constant 0 : index
    %809 = vector.load %arg20[%c0_272, %c0_273, %c0_274] : memref<8x8x8xf32, #tpu.memory_space<vmem>>, vector<8x8x8xf32>
    tpu.vector_store %arg20[%c0_272, %c0_273, %c0_274], %808 {strides = array<i32>} : memref<8x8x8xf32, #tpu.memory_space<vmem>>, vector<8x8x8xf32>,
    return
  }
  func.func @transform_0(%arg0: i32) -> (i32, i32, i32) {
    %c0_i32 = arith.constant 0 : i32
    %c0_i32_0 = arith.constant 0 : i32
    %c0_i32_1 = arith.constant 0 : i32
    return %c0_i32, %arg0, %c0_i32_0 : i32, i32, i32
  }
  func.func @transform_1(%arg0: i32) -> (i32, i32) {
    %c0_i32 = arith.constant 0 : i32
    %c0_i32_0 = arith.constant 0 : i32
    %c0_i32_1 = arith.constant 0 : i32
    return %c0_i32, %c0_i32_0 : i32, i32
  }
  func.func @transform_2(%arg0: i32) -> (i32, i32) {
    %c0_i32 = arith.constant 0 : i32
    %c0_i32_0 = arith.constant 0 : i32
    %c0_i32_1 = arith.constant 0 : i32
    return %c0_i32, %c0_i32_0 : i32, i32
  }
  func.func @transform_3(%arg0: i32) -> (i32, i32) {
    %c0_i32 = arith.constant 0 : i32
    %c0_i32_0 = arith.constant 0 : i32
    %c0_i32_1 = arith.constant 0 : i32
    return %c0_i32, %c0_i32_0 : i32, i32
  }
  func.func @transform_4(%arg0: i32) -> (i32, i32) {
    %c0_i32 = arith.constant 0 : i32
    %c0_i32_0 = arith.constant 0 : i32
    %c0_i32_1 = arith.constant 0 : i32
    return %c0_i32, %c0_i32_0 : i32, i32
  }
  func.func @transform_5(%arg0: i32) -> (i32, i32) {
    %c0_i32 = arith.constant 0 : i32
    %c0_i32_0 = arith.constant 0 : i32
    %c0_i32_1 = arith.constant 0 : i32
    return %c0_i32, %c0_i32_0 : i32, i32
  }
  func.func @transform_6(%arg0: i32) -> (i32, i32) {
    %c0_i32 = arith.constant 0 : i32
    %c0_i32_0 = arith.constant 0 : i32
    %c0_i32_1 = arith.constant 0 : i32
    return %c0_i32, %c0_i32_0 : i32, i32
  }
  func.func @transform_7(%arg0: i32) -> (i32, i32) {
    %c0_i32 = arith.constant 0 : i32
    %c0_i32_0 = arith.constant 0 : i32
    %c0_i32_1 = arith.constant 0 : i32
    return %c0_i32, %c0_i32_0 : i32, i32
  }
  func.func @transform_8(%arg0: i32) -> (i32, i32) {
    %c0_i32 = arith.constant 0 : i32
    %c0_i32_0 = arith.constant 0 : i32
    %c0_i32_1 = arith.constant 0 : i32
    return %c0_i32, %c0_i32_0 : i32, i32
  }
  func.func @transform_9(%arg0: i32) -> (i32, i32) {
    %c0_i32 = arith.constant 0 : i32
    %c0_i32_0 = arith.constant 0 : i32
    %c0_i32_1 = arith.constant 0 : i32
    return %c0_i32, %c0_i32_0 : i32, i32
  }
  func.func @transform_10(%arg0: i32) -> (i32, i32) {
    %c0_i32 = arith.constant 0 : i32
    %c0_i32_0 = arith.constant 0 : i32
    %c0_i32_1 = arith.constant 0 : i32
    return %c0_i32, %c0_i32_0 : i32, i32
  }
  func.func @transform_11(%arg0: i32) -> (i32, i32) {
    %c0_i32 = arith.constant 0 : i32
    %c0_i32_0 = arith.constant 0 : i32
    %c0_i32_1 = arith.constant 0 : i32
    return %c0_i32, %c0_i32_0 : i32, i32
  }
  func.func @transform_12(%arg0: i32) -> (i32, i32) {
    %c0_i32 = arith.constant 0 : i32
    %c0_i32_0 = arith.constant 0 : i32
    %c0_i32_1 = arith.constant 0 : i32
    return %c0_i32, %c0_i32_0 : i32, i32
  }
  func.func @transform_13(%arg0: i32) -> (i32, i32) {
    %c0_i32 = arith.constant 0 : i32
    %c0_i32_0 = arith.constant 0 : i32
    %c0_i32_1 = arith.constant 0 : i32
    return %c0_i32, %c0_i32_0 : i32, i32
  }
  func.func @transform_14(%arg0: i32) -> (i32, i32) {
    %c0_i32 = arith.constant 0 : i32
    %c0_i32_0 = arith.constant 0 : i32
    %c0_i32_1 = arith.constant 0 : i32
    return %c0_i32, %c0_i32_0 : i32, i32
  }
  func.func @transform_15(%arg0: i32) -> (i32, i32) {
    %c0_i32 = arith.constant 0 : i32
    %c0_i32_0 = arith.constant 0 : i32
    %c0_i32_1 = arith.constant 0 : i32
    return %c0_i32, %c0_i32_0 : i32, i32
  }
  func.func @transform_16(%arg0: i32) -> (i32, i32) {
    %c0_i32 = arith.constant 0 : i32
    %c0_i32_0 = arith.constant 0 : i32
    %c0_i32_1 = arith.constant 0 : i32
    return %c0_i32, %c0_i32_0 : i32, i32
  }
  func.func @transform_17(%arg0: i32) -> (i32, i32) {
    %c0_i32 = arith.constant 0 : i32
    %c0_i32_0 = arith.constant 0 : i32
    %c0_i32_1 = arith.constant 0 : i32
    return %c0_i32, %c0_i32_0 : i32, i32
  }
  func.func @transform_18(%arg0: i32) -> (i32, i32) {
    %c0_i32 = arith.constant 0 : i32
    %c0_i32_0 = arith.constant 0 : i32
    %c0_i32_1 = arith.constant 0 : i32
    return %c0_i32, %c0_i32_0 : i32, i32
  }
  func.func @transform_19(%arg0: i32) -> (i32, i32, i32) {
    %c0_i32 = arith.constant 0 : i32
    %c0_i32_0 = arith.constant 0 : i32
    %c0_i32_1 = arith.constant 0 : i32
    return %c0_i32, %arg0, %c0_i32_0 : i32, i32, i32
  }
}

</mosaic_0001>

<llo_original>
// kernel: delayed_mlp_forward.1
$region0: #{delayed_mlp_forward.1}
  #allocation0 [shape = 'u32[]', space=smem, size = 0x4, offset = 0x4, fixed_abs, tag = 'smem constant byte address 0x4 - core index']
  #allocation1 [shape = 'u32[144,128]{1,0:T(1,128)}', space=vmem, size = 0x12000, scoped, tag = 'internal scratch']
  #allocation2 [shape = 'f32[8,8,16]{2,1,0:T(8,128)}', space=vmem, size = 0x8000, scoped, tag = 'scratch operand']
  #allocation3 [shape = 'f32[8,8,32]{2,1,0:T(8,128)}', space=vmem, size = 0x8000, scoped, tag = 'scratch operand']
  %s0 = inlined_call_operand.vmem [shape: f32[8,8,16], index: 0, kind: input, shape index: {}]
  %s1 = inlined_call_operand.vmem [shape: f32[16,16], index: 1, kind: input, shape index: {}]
  %s2 = inlined_call_operand.vmem [shape: f32[1,16], index: 2, kind: input, shape index: {}]
  %s3 = inlined_call_operand.vmem [shape: f32[16,16], index: 3, kind: input, shape index: {}]
  %s4 = inlined_call_operand.vmem [shape: f32[1,16], index: 4, kind: input, shape index: {}]
  %s5 = inlined_call_operand.vmem [shape: f32[16,32], index: 5, kind: input, shape index: {}]
  %s6 = inlined_call_operand.vmem [shape: f32[1,32], index: 6, kind: input, shape index: {}]
  %s7 = inlined_call_operand.vmem [shape: f32[1,32], index: 7, kind: input, shape index: {}]
  %s8 = inlined_call_operand.hbm [shape: f32[1,32], index: 8, kind: input, shape index: {}]
  %s9 = inlined_call_operand.vmem [shape: f32[32,32], index: 9, kind: input, shape index: {}]
  %s10 = inlined_call_operand.vmem [shape: f32[1,32], index: 10, kind: input, shape index: {}]
  %s11 = inlined_call_operand.vmem [shape: f32[32,32], index: 11, kind: input, shape index: {}]
  %s12 = inlined_call_operand.vmem [shape: f32[1,32], index: 12, kind: input, shape index: {}]
  %s13 = inlined_call_operand.vmem [shape: f32[32,32], index: 13, kind: input, shape index: {}]
  %s14 = inlined_call_operand.vmem [shape: f32[1,32], index: 14, kind: input, shape index: {}]
  %s15 = inlined_call_operand.vmem [shape: f32[1,32], index: 15, kind: input, shape index: {}]
  %s16 = inlined_call_operand.vmem [shape: f32[1,32], index: 16, kind: input, shape index: {}]
  %s17 = inlined_call_operand.vmem [shape: f32[32,8], index: 17, kind: input, shape index: {}]
  %s18 = inlined_call_operand.hbm [shape: f32[1,8], index: 18, kind: input, shape index: {}]
  %s19 = inlined_call_operand.vmem [shape: f32[8,8,8], index: 19, kind: output, shape index: {}]
  %s20 = sld [smem:[#allocation0]]
  $region94: #{delayed_mlp_forward.1} parent=0
    _
  %s22 = ssub.s32 1, %s20
  %s23 = scalar_select 0, %s22, %s20
  $region1: #{delayed_mlp_forward.1} parent=0
    #allocation4 [shape = 'u8[512]{0}', space=vmem, size = 0x400, scoped, tag = 'input window, operand 8, single buffered']
    #allocation5 [shape = 's32[1]{0}', space=sflag, size = 0x4, scoped, tag = 'scoped memory for delayed_mlp_forward.1']
    #allocation6 [shape = 'u8[512]{0}', space=vmem, size = 0x400, scoped, tag = 'input window, operand 18, single buffered']
    #allocation7 [shape = 's32[1]{0}', space=sflag, size = 0x4, scoped, tag = 'scoped memory for delayed_mlp_forward.1']
    %24 = vsyncpa [#allocation5], 0
    %25 = vsyncpa [#allocation7], 0
    // Predicated region
    $region2: #{delayed_mlp_forward.1} parent=1 // pred_check
      _
    $region3: #{delayed_mlp_forward.1} parent=1 // pred_check_branch
      %27 = sbr.rel (0) target = $region5
    $region4: #{delayed_mlp_forward.1} parent=1 // pred_region
      _
    $region5: #{delayed_mlp_forward.1} parent=1 // pred_fallthru
      _
    // Predicated region
    $region6: #{delayed_mlp_forward.1} parent=1 // pred_check
      _
    $region7: #{delayed_mlp_forward.1} parent=1 // pred_check_branch
      %29 = sbr.rel (0) target = $region9
    $region8: #{delayed_mlp_forward.1} parent=1 // pred_region
      _
    $region9: #{delayed_mlp_forward.1} parent=1 // pred_fallthru
      _
    // Predicated region
    $region10: #{delayed_mlp_forward.1} parent=1 // pred_check
      _
    $region11: #{delayed_mlp_forward.1} parent=1 // pred_check_branch
      %31 = sbr.rel (0) target = $region13
    $region12: #{delayed_mlp_forward.1} parent=1 // pred_region
      _
    $region13: #{delayed_mlp_forward.1} parent=1 // pred_fallthru
      _
    // Predicated region
    $region14: #{delayed_mlp_forward.1} parent=1 // pred_check
      _
    $region15: #{delayed_mlp_forward.1} parent=1 // pred_check_branch
      %33 = sbr.rel (0) target = $region17
    $region16: #{delayed_mlp_forward.1} parent=1 // pred_region
      _
    $region17: #{delayed_mlp_forward.1} parent=1 // pred_fallthru
      _
    // Predicated region
    $region18: #{delayed_mlp_forward.1} parent=1 // pred_check
      _
    $region19: #{delayed_mlp_forward.1} parent=1 // pred_check_branch
      %35 = sbr.rel (0) target = $region21
    $region20: #{delayed_mlp_forward.1} parent=1 // pred_region
      _
    $region21: #{delayed_mlp_forward.1} parent=1 // pred_fallthru
      _
    // Predicated region
    $region22: #{delayed_mlp_forward.1} parent=1 // pred_check
      _
    $region23: #{delayed_mlp_forward.1} parent=1 // pred_check_branch
      %37 = sbr.rel (0) target = $region25
    $region24: #{delayed_mlp_forward.1} parent=1 // pred_region
      _
    $region25: #{delayed_mlp_forward.1} parent=1 // pred_fallthru
      _
    // Predicated region
    $region26: #{delayed_mlp_forward.1} parent=1 // pred_check
      _
    $region27: #{delayed_mlp_forward.1} parent=1 // pred_check_branch
      %39 = sbr.rel (0) target = $region29
    $region28: #{delayed_mlp_forward.1} parent=1 // pred_region
      _
    $region29: #{delayed_mlp_forward.1} parent=1 // pred_fallthru
      _
    // Predicated region
    $region30: #{delayed_mlp_forward.1} parent=1 // pred_check
      _
    $region31: #{delayed_mlp_forward.1} parent=1 // pred_check_branch
      %41 = sbr.rel (0) target = $region33
    $region32: #{delayed_mlp_forward.1} parent=1 // pred_region
      _
    $region33: #{delayed_mlp_forward.1} parent=1 // pred_fallthru
      _
    // Predicated region
    $region34: #{delayed_mlp_forward.1} parent=1 // pred_check
      _
    $region35: #{delayed_mlp_forward.1} parent=1 // pred_check_branch
      %43 = sbr.rel (0) target = $region37
    $region36: #{delayed_mlp_forward.1} parent=1 // pred_region
      %s45 = ssub.s32 16, 16
      %46 = vsyncadd [#allocation5], %s45
      %s48 = sshll.u32 [#allocation4], 4
      %s49 = int_to_ptr.vmem [resolvable:$true] %s48
      %51 = dma.hbm_to_vmem [thread:$0]  %s8, 16, %s49, [#allocation5]
    $region37: #{delayed_mlp_forward.1} parent=1 // pred_fallthru
      _
    // Predicated region
    $region38: #{delayed_mlp_forward.1} parent=1 // pred_check
      _
    $region39: #{delayed_mlp_forward.1} parent=1 // pred_check_branch
      %53 = sbr.rel (0) target = $region41
    $region40: #{delayed_mlp_forward.1} parent=1 // pred_region
      _
    $region41: #{delayed_mlp_forward.1} parent=1 // pred_fallthru
      _
    // Predicated region
    $region42: #{delayed_mlp_forward.1} parent=1 // pred_check
      _
    $region43: #{delayed_mlp_forward.1} parent=1 // pred_check_branch
      %55 = sbr.rel (0) target = $region45
    $region44: #{delayed_mlp_forward.1} parent=1 // pred_region
      _
    $region45: #{delayed_mlp_forward.1} parent=1 // pred_fallthru
      _
    // Predicated region
    $region46: #{delayed_mlp_forward.1} parent=1 // pred_check
      _
    $region47: #{delayed_mlp_forward.1} parent=1 // pred_check_branch
      %57 = sbr.rel (0) target = $region49
    $region48: #{delayed_mlp_forward.1} parent=1 // pred_region
      _
    $region49: #{delayed_mlp_forward.1} parent=1 // pred_fallthru
      _
    // Predicated region
    $region50: #{delayed_mlp_forward.1} parent=1 // pred_check
      _
    $region51: #{delayed_mlp_forward.1} parent=1 // pred_check_branch
      %59 = sbr.rel (0) target = $region53
    $region52: #{delayed_mlp_forward.1} parent=1 // pred_region
      _
    $region53: #{delayed_mlp_forward.1} parent=1 // pred_fallthru
      _
    // Predicated region
    $region54: #{delayed_mlp_forward.1} parent=1 // pred_check
      _
    $region55: #{delayed_mlp_forward.1} parent=1 // pred_check_branch
      %61 = sbr.rel (0) target = $region57
    $region56: #{delayed_mlp_forward.1} parent=1 // pred_region
      _
    $region57: #{delayed_mlp_forward.1} parent=1 // pred_fallthru
      _
    // Predicated region
    $region58: #{delayed_mlp_forward.1} parent=1 // pred_check
      _
    $region59: #{delayed_mlp_forward.1} parent=1 // pred_check_branch
      %63 = sbr.rel (0) target = $region61
    $region60: #{delayed_mlp_forward.1} parent=1 // pred_region
      _
    $region61: #{delayed_mlp_forward.1} parent=1 // pred_fallthru
      _
    // Predicated region
    $region62: #{delayed_mlp_forward.1} parent=1 // pred_check
      _
    $region63: #{delayed_mlp_forward.1} parent=1 // pred_check_branch
      %65 = sbr.rel (0) target = $region65
    $region64: #{delayed_mlp_forward.1} parent=1 // pred_region
      _
    $region65: #{delayed_mlp_forward.1} parent=1 // pred_fallthru
      _
    // Predicated region
    $region66: #{delayed_mlp_forward.1} parent=1 // pred_check
      _
    $region67: #{delayed_mlp_forward.1} parent=1 // pred_check_branch
      %67 = sbr.rel (0) target = $region69
    $region68: #{delayed_mlp_forward.1} parent=1 // pred_region
      _
    $region69: #{delayed_mlp_forward.1} parent=1 // pred_fallthru
      _
    // Predicated region
    $region70: #{delayed_mlp_forward.1} parent=1 // pred_check
      _
    $region71: #{delayed_mlp_forward.1} parent=1 // pred_check_branch
      %69 = sbr.rel (0) target = $region73
    $region72: #{delayed_mlp_forward.1} parent=1 // pred_region
      _
    $region73: #{delayed_mlp_forward.1} parent=1 // pred_fallthru
      _
    // Predicated region
    $region74: #{delayed_mlp_forward.1} parent=1 // pred_check
      _
    $region75: #{delayed_mlp_forward.1} parent=1 // pred_check_branch
      %71 = sbr.rel (0) target = $region77
    $region76: #{delayed_mlp_forward.1} parent=1 // pred_region
      %s73 = ssub.s32 16, 16
      %74 = vsyncadd [#allocation7], %s73
      %s76 = sshll.u32 [#allocation6], 4
      %s77 = int_to_ptr.vmem [resolvable:$true] %s76
      %79 = dma.hbm_to_vmem [thread:$0]  %s18, 16, %s77, [#allocation7]
    $region77: #{delayed_mlp_forward.1} parent=1 // pred_fallthru
      _
    // Predicated region
    $region78: #{delayed_mlp_forward.1} parent=1 // pred_check
      _
    $region79: #{delayed_mlp_forward.1} parent=1 // pred_check_branch
      %81 = sbr.rel (0) target = $region81
    $region80: #{delayed_mlp_forward.1} parent=1 // pred_region
      %82 = dma.done [#allocation5], 16
    $region81: #{delayed_mlp_forward.1} parent=1 // pred_fallthru
      _
    // Predicated region
    $region82: #{delayed_mlp_forward.1} parent=1 // pred_check
      _
    $region83: #{delayed_mlp_forward.1} parent=1 // pred_check_branch
      %84 = sbr.rel (0) target = $region85
    $region84: #{delayed_mlp_forward.1} parent=1 // pred_region
      %85 = dma.done [#allocation7], 16
    $region85: #{delayed_mlp_forward.1} parent=1 // pred_fallthru
      _
    %v86 = vld [vmem:[%s3] sm:$0xff]
    %v87 = vld [vmem:[%s3 + $0x8] sm:$0xff]
    %v88 = vld [vmem:[%s5] sm:$0xff]
    %v89 = vld [vmem:[%s5 + $0x8] sm:$0xff]
    %v90 = vld [vmem:[%s9] sm:$0xff]
    %v91 = vld [vmem:[%s9 + $0x8] sm:$0xff]
    %v92 = vld [vmem:[%s9 + $0x10] sm:$0xff]
    %v93 = vld [vmem:[%s9 + $0x18] sm:$0xff]
    %v94 = vld [vmem:[%s11] sm:$0xff]
    %v95 = vld [vmem:[%s11 + $0x8] sm:$0xff]
    %v96 = vld [vmem:[%s11 + $0x10] sm:$0xff]
    %v97 = vld [vmem:[%s11 + $0x18] sm:$0xff]
    %v98 = vld [vmem:[%s13] sm:$0xff]
    %v99 = vld [vmem:[%s13 + $0x8] sm:$0xff]
    %v100 = vld [vmem:[%s13 + $0x10] sm:$0xff]
    %v101 = vld [vmem:[%s13 + $0x18] sm:$0xff]
    %v102 = vld [vmem:[%s4] sm:$0x1]
    %v104 = vlaneseq
    %v105 = vshrl.u32 %v104, 7
    %v106 = vsub.s32 0, %v105
    %v107 = vrot.slane %v102, %v106
    %v109 = vld [vmem:[%s6] sm:$0x1]
    %v111 = vlaneseq
    %v112 = vshrl.u32 %v111, 7
    %v113 = vsub.s32 0, %v112
    %v114 = vrot.slane %v109, %v113
    %v116 = vld [vmem:[%s7] sm:$0x1]
    %v118 = vlaneseq
    %v119 = vshrl.u32 %v118, 7
    %v120 = vsub.s32 0, %v119
    %v121 = vrot.slane %v116, %v120
    %v123 = vld [vmem:[#allocation4] sm:$0x1]
    %v125 = vlaneseq
    %v126 = vshrl.u32 %v125, 7
    %v127 = vsub.s32 0, %v126
    %v128 = vrot.slane %v123, %v127
    %v130 = vld [vmem:[%s10] sm:$0x1]
    %v132 = vlaneseq
    %v133 = vshrl.u32 %v132, 7
    %v134 = vsub.s32 0, %v133
    %v135 = vrot.slane %v130, %v134
    %v137 = vld [vmem:[%s12] sm:$0x1]
    %v139 = vlaneseq
    %v140 = vshrl.u32 %v139, 7
    %v141 = vsub.s32 0, %v140
    %v142 = vrot.slane %v137, %v141
    %v144 = vld [vmem:[%s14] sm:$0x1]
    %v146 = vlaneseq
    %v147 = vshrl.u32 %v146, 7
    %v148 = vsub.s32 0, %v147
    %v149 = vrot.slane %v144, %v148
    %v151 = vld [vmem:[%s15] sm:$0x1]
    %v153 = vlaneseq
    %v154 = vshrl.u32 %v153, 7
    %v155 = vsub.s32 0, %v154
    %v156 = vrot.slane %v151, %v155
    %v158 = vld [vmem:[%s16] sm:$0x1]
    %v160 = vlaneseq
    %v161 = vshrl.u32 %v160, 7
    %v162 = vsub.s32 0, %v161
    %v163 = vrot.slane %v158, %v162
    %v165 = vld [vmem:[%s0] sm:$0xff]
    %v166 = vld [vmem:[%s0 + $0x8] sm:$0xff]
    %v167 = vld [vmem:[%s0 + $0x10] sm:$0xff]
    %v168 = vld [vmem:[%s0 + $0x18] sm:$0xff]
    %v169 = vld [vmem:[%s0 + $0x20] sm:$0xff]
    %v170 = vld [vmem:[%s0 + $0x28] sm:$0xff]
    %v171 = vld [vmem:[%s0 + $0x30] sm:$0xff]
    %v172 = vld [vmem:[%s0 + $0x38] sm:$0xff]
    %v173 = vld [vmem:[%s1] sm:$0xff]
    %v174 = vld [vmem:[%s1 + $0x8] sm:$0xff]
    %v175 = vld [vmem:[%s2] sm:$0x1]
    %v177 = vlaneseq
    %v178 = vshrl.u32 %v177, 7
    %v179 = vsub.s32 0, %v178
    %v180 = vrot.slane %v175, %v179
    %vm182 = vcmask 130048
    %v184 = vsel %vm182, %v165, 0
    %v187 = vsel %vm182, %v166, 0
    %v190 = vsel %vm182, %v167, 0
    %v193 = vsel %vm182, %v168, 0
    %v196 = vsel %vm182, %v169, 0
    %v199 = vsel %vm182, %v170, 0
    %v202 = vsel %vm182, %v171, 0
    %v205 = vsel %vm182, %v172, 0
    %207 = vmatprep.subr.mxu0 0.0
    %208 = vmatpush1.msra.mxu0 0.0
    %209 = vmatprep.subr.mxu0 0.0
    %210 = vmatpush1.msra.mxu0 0.0
    %211 = vmatprep.subr.mxu0 0.0
    %212 = vmatpush1.msra.mxu0 0.0
    %213 = vmatprep.subr.mxu0 0.0
    %214 = vmatpush1.msra.mxu0 0.0
    %215 = vmatprep.subr.mxu0 0.0
    %216 = vmatpush1.msra.mxu0 0.0
    %217 = vmatprep.subr.mxu0 0.0
    %218 = vmatpush1.msra.mxu0 0.0
    %219 = vmatprep.subr.mxu0 0.0
    %220 = vmatpush1.msra.mxu0 0.0
    %221 = vmatprep.subr.mxu0 0.0
    %222 = vmatpush1.msra.mxu0 0.0
    %223 = vmatprep.subr.mxu0 0.0
    %224 = vmatpush1.msra.mxu0 0.0
    %225 = vmatprep.subr.mxu0 0.0
    %226 = vmatpush1.msra.mxu0 0.0
    %227 = vmatprep.subr.mxu0 0.0
    %228 = vmatpush1.msra.mxu0 0.0
    %229 = vmatprep.subr.mxu0 0.0
    %230 = vmatpush1.msra.mxu0 0.0
    %231 = vmatprep.subr.mxu0 0.0
    %232 = vmatpush1.msra.mxu0 0.0
    %233 = vmatprep.subr.mxu0 0.0
    %234 = vmatpush1.msra.mxu0 0.0
    %235 = vmatprep.subr.mxu0 0.0
    %236 = vmatpush1.msra.mxu0 %v174
    %237 = vmatprep.subr.mxu0 0.0
    %238 = vmatpush1.msra.mxu0 %v173
    %239 = vmatprep.subr.mxu0 0.0
    %240 = vmatpush2.msra.mxu0 0.0
    %241 = vmatprep.subr.mxu0 0.0
    %242 = vmatpush2.msra.mxu0 0.0
    %243 = vmatprep.subr.mxu0 0.0
    %244 = vmatpush2.msra.mxu0 0.0
    %245 = vmatprep.subr.mxu0 0.0
    %246 = vmatpush2.msra.mxu0 0.0
    %247 = vmatprep.subr.mxu0 0.0
    %248 = vmatpush2.msra.mxu0 0.0
    %249 = vmatprep.subr.mxu0 0.0
    %250 = vmatpush2.msra.mxu0 0.0
    %251 = vmatprep.subr.mxu0 0.0
    %252 = vmatpush2.msra.mxu0 0.0
    %253 = vmatprep.subr.mxu0 0.0
    %254 = vmatpush2.msra.mxu0 0.0
    %255 = vmatprep.subr.mxu0 0.0
    %256 = vmatpush2.msra.mxu0 0.0
    %257 = vmatprep.subr.mxu0 0.0
    %258 = vmatpush2.msra.mxu0 0.0
    %259 = vmatprep.subr.mxu0 0.0
    %260 = vmatpush2.msra.mxu0 0.0
    %261 = vmatprep.subr.mxu0 0.0
    %262 = vmatpush2.msra.mxu0 0.0
    %263 = vmatprep.subr.mxu0 0.0
    %264 = vmatpush2.msra.mxu0 0.0
    %265 = vmatprep.subr.mxu0 0.0
    %266 = vmatpush2.msra.mxu0 0.0
    %267 = vmatprep.subr.mxu0 0.0
    %268 = vmatpush2.msra.mxu0 0.0
    %269 = vmatprep.subr.mxu0 0.0
    %270 = vmatpush2.msra.mxu0 0.0
    %271 = vmatprep.mubr.f32.mxu0 0.0
    %272 = vmatmul.mubr.f32.gmra.mxu0 %v184
    %v273 = vpop.f32.mrf.mxu0
    %v274 = vadd.f32 %v180, %v273
    %v275 = vpop.f32.mrf.mxu0
    %276 = vmatprep.mubr.f32.mxu0 0.0
    %277 = vmatmul.mubr.f32.gmra.mxu0 %v187
    %v278 = vpop.f32.mrf.mxu0
    %v279 = vadd.f32 %v180, %v278
    %v280 = vpop.f32.mrf.mxu0
    %281 = vmatprep.mubr.f32.mxu0 0.0
    %282 = vmatmul.mubr.f32.gmra.mxu0 %v190
    %v283 = vpop.f32.mrf.mxu0
    %v284 = vadd.f32 %v180, %v283
    %v285 = vpop.f32.mrf.mxu0
    %286 = vmatprep.mubr.f32.mxu0 0.0
    %287 = vmatmul.mubr.f32.gmra.mxu0 %v193
    %v288 = vpop.f32.mrf.mxu0
    %v289 = vadd.f32 %v180, %v288
    %v290 = vpop.f32.mrf.mxu0
    %291 = vmatprep.mubr.f32.mxu0 0.0
    %292 = vmatmul.mubr.f32.gmra.mxu0 %v196
    %v293 = vpop.f32.mrf.mxu0
    %v294 = vadd.f32 %v180, %v293
    %v295 = vpop.f32.mrf.mxu0
    %296 = vmatprep.mubr.f32.mxu0 0.0
    %297 = vmatmul.mubr.f32.gmra.mxu0 %v199
    %v298 = vpop.f32.mrf.mxu0
    %v299 = vadd.f32 %v180, %v298
    %v300 = vpop.f32.mrf.mxu0
    %301 = vmatprep.mubr.f32.mxu0 0.0
    %302 = vmatmul.mubr.f32.gmra.mxu0 %v202
    %v303 = vpop.f32.mrf.mxu0
    %v304 = vadd.f32 %v180, %v303
    %v305 = vpop.f32.mrf.mxu0
    %306 = vmatprep.mubr.f32.mxu0 0.0
    %307 = vmatmul.mubr.f32.gmra.mxu0 %v205
    %v308 = vpop.f32.mrf.mxu0
    %v309 = vadd.f32 %v180, %v308
    %v310 = vpop.f32.mrf.mxu0
    %311 = vdwg.mxu0
    %v312 = vxor.u32 %v274, 2147483648
    %v313 = vxor.u32 %v279, 2147483648
    %v314 = vxor.u32 %v284, 2147483648
    %v315 = vxor.u32 %v289, 2147483648
    %v316 = vxor.u32 %v294, 2147483648
    %v317 = vxor.u32 %v299, 2147483648
    %v318 = vxor.u32 %v304, 2147483648
    %v319 = vxor.u32 %v309, 2147483648
    %v320 = vmul.f32 %v312, 1.442695
    %v321 = vpow.pop %v320
    %v322 = vmul.f32 %v313, 1.442695
    %v323 = vpow.pop %v322
    %v324 = vmul.f32 %v314, 1.442695
    %v325 = vpow.pop %v324
    %v326 = vmul.f32 %v315, 1.442695
    %v327 = vpow.pop %v326
    %v328 = vmul.f32 %v316, 1.442695
    %v329 = vpow.pop %v328
    %v330 = vmul.f32 %v317, 1.442695
    %v331 = vpow.pop %v330
    %v332 = vmul.f32 %v318, 1.442695
    %v333 = vpow.pop %v332
    %v334 = vmul.f32 %v319, 1.442695
    %v335 = vpow.pop %v334
    %v336 = vadd.f32 %v321, 1.0
    %v337 = vadd.f32 %v323, 1.0
    %v338 = vadd.f32 %v325, 1.0
    %v339 = vadd.f32 %v327, 1.0
    %v340 = vadd.f32 %v329, 1.0
    %v341 = vadd.f32 %v331, 1.0
    %v342 = vadd.f32 %v333, 1.0
    %v343 = vadd.f32 %v335, 1.0
    %v344 = vrcp.pop %v336
    %v345 = vmul.f32 1.0, %v344
    %v346 = vrcp.pop %v337
    %v347 = vmul.f32 1.0, %v346
    %v348 = vrcp.pop %v338
    %v349 = vmul.f32 1.0, %v348
    %v350 = vrcp.pop %v339
    %v351 = vmul.f32 1.0, %v350
    %v352 = vrcp.pop %v340
    %v353 = vmul.f32 1.0, %v352
    %v354 = vrcp.pop %v341
    %v355 = vmul.f32 1.0, %v354
    %v356 = vrcp.pop %v342
    %v357 = vmul.f32 1.0, %v356
    %v358 = vrcp.pop %v343
    %v359 = vmul.f32 1.0, %v358
    %v360 = vmul.f32 %v165, %v345
    %v361 = vmul.f32 %v166, %v347
    %v362 = vmul.f32 %v167, %v349
    %v363 = vmul.f32 %v168, %v351
    %v364 = vmul.f32 %v169, %v353
    %v365 = vmul.f32 %v170, %v355
    %v366 = vmul.f32 %v171, %v357
    %v367 = vmul.f32 %v172, %v359
    %368 = vst.msk [vmem:[#allocation2] sm:$0xff] %vm182, %v360
    %369 = vst.msk [vmem:[#allocation2 + $0x8] sm:$0xff] %vm182, %v361
    %370 = vst.msk [vmem:[#allocation2 + $0x10] sm:$0xff] %vm182, %v362
    %371 = vst.msk [vmem:[#allocation2 + $0x18] sm:$0xff] %vm182, %v363
    %372 = vst.msk [vmem:[#allocation2 + $0x20] sm:$0xff] %vm182, %v364
    %373 = vst.msk [vmem:[#allocation2 + $0x28] sm:$0xff] %vm182, %v365
    %374 = vst.msk [vmem:[#allocation2 + $0x30] sm:$0xff] %vm182, %v366
    %375 = vst.msk [vmem:[#allocation2 + $0x38] sm:$0xff] %vm182, %v367
    %v376 = vld [vmem:[%s0] sm:$0xff]
    %v377 = vld [vmem:[#allocation2] sm:$0xff]
    %v378 = vsub.f32 %v376, %v377
    %v379 = vadd.f32 %v378, 0.0
    %v381 = vsel %vm182, %v379, 0
    %383 = vmatprep.subr.mxu0 0.0
    %384 = vmatpush1.msra.mxu0 0.0
    %385 = vmatprep.subr.mxu0 0.0
    %386 = vmatpush1.msra.mxu0 0.0
    %387 = vmatprep.subr.mxu0 0.0
    %388 = vmatpush1.msra.mxu0 0.0
    %389 = vmatprep.subr.mxu0 0.0
    %390 = vmatpush1.msra.mxu0 0.0
    %391 = vmatprep.subr.mxu0 0.0
    %392 = vmatpush1.msra.mxu0 0.0
    %393 = vmatprep.subr.mxu0 0.0
    %394 = vmatpush1.msra.mxu0 0.0
    %395 = vmatprep.subr.mxu0 0.0
    %396 = vmatpush1.msra.mxu0 0.0
    %397 = vmatprep.subr.mxu0 0.0
    %398 = vmatpush1.msra.mxu0 0.0
    %399 = vmatprep.subr.mxu0 0.0
    %400 = vmatpush1.msra.mxu0 0.0
    %401 = vmatprep.subr.mxu0 0.0
    %402 = vmatpush1.msra.mxu0 0.0
    %403 = vmatprep.subr.mxu0 0.0
    %404 = vmatpush1.msra.mxu0 0.0
    %405 = vmatprep.subr.mxu0 0.0
    %406 = vmatpush1.msra.mxu0 0.0
    %407 = vmatprep.subr.mxu0 0.0
    %408 = vmatpush1.msra.mxu0 0.0
    %409 = vmatprep.subr.mxu0 0.0
    %410 = vmatpush1.msra.mxu0 0.0
    %411 = vmatprep.subr.mxu0 0.0
    %412 = vmatpush1.msra.mxu0 %v87
    %413 = vmatprep.subr.mxu0 0.0
    %414 = vmatpush1.msra.mxu0 %v86
    %415 = vmatprep.subr.mxu0 0.0
    %416 = vmatpush2.msra.mxu0 0.0
    %417 = vmatprep.subr.mxu0 0.0
    %418 = vmatpush2.msra.mxu0 0.0
    %419 = vmatprep.subr.mxu0 0.0
    %420 = vmatpush2.msra.mxu0 0.0
    %421 = vmatprep.subr.mxu0 0.0
    %422 = vmatpush2.msra.mxu0 0.0
    %423 = vmatprep.subr.mxu0 0.0
    %424 = vmatpush2.msra.mxu0 0.0
    %425 = vmatprep.subr.mxu0 0.0
    %426 = vmatpush2.msra.mxu0 0.0
    %427 = vmatprep.subr.mxu0 0.0
    %428 = vmatpush2.msra.mxu0 0.0
    %429 = vmatprep.subr.mxu0 0.0
    %430 = vmatpush2.msra.mxu0 0.0
    %431 = vmatprep.subr.mxu0 0.0
    %432 = vmatpush2.msra.mxu0 0.0
    %433 = vmatprep.subr.mxu0 0.0
    %434 = vmatpush2.msra.mxu0 0.0
    %435 = vmatprep.subr.mxu0 0.0
    %436 = vmatpush2.msra.mxu0 0.0
    %437 = vmatprep.subr.mxu0 0.0
    %438 = vmatpush2.msra.mxu0 0.0
    %439 = vmatprep.subr.mxu0 0.0
    %440 = vmatpush2.msra.mxu0 0.0
    %441 = vmatprep.subr.mxu0 0.0
    %442 = vmatpush2.msra.mxu0 0.0
    %443 = vmatprep.subr.mxu0 0.0
    %444 = vmatpush2.msra.mxu0 0.0
    %445 = vmatprep.subr.mxu0 0.0
    %446 = vmatpush2.msra.mxu0 0.0
    %447 = vmatprep.mubr.f32.mxu0 0.0
    %448 = vmatmul.mubr.f32.gmra.mxu0 %v381
    %v449 = vpop.f32.mrf.mxu0
    %v450 = vadd.f32 %v107, %v449
    %v451 = vpop.f32.mrf.mxu0
    %452 = vdwg.mxu0
    %v453 = vxor.u32 %v450, 2147483648
    %v454 = vmul.f32 %v453, 1.442695
    %v455 = vpow.pop %v454
    %v456 = vadd.f32 %v455, 1.0
    %v457 = vrcp.pop %v456
    %v458 = vmul.f32 1.0, %v457
    %v459 = vmul.f32 %v379, %v458
    %v460 = vsub.f32 1.0, %v458
    %v461 = vmul.f32 %v379, %v460
    %v462 = vadd.f32 %v377, %v459
    %v464 = vsel %vm182, %v462, 0
    %466 = vmatprep.subr.mxu0 0.0
    %467 = vmatpush1.msra.mxu0 0.0
    %468 = vmatprep.subr.mxu0 0.0
    %469 = vmatpush1.msra.mxu0 0.0
    %470 = vmatprep.subr.mxu0 0.0
    %471 = vmatpush1.msra.mxu0 0.0
    %472 = vmatprep.subr.mxu0 0.0
    %473 = vmatpush1.msra.mxu0 0.0
    %474 = vmatprep.subr.mxu0 0.0
    %475 = vmatpush1.msra.mxu0 0.0
    %476 = vmatprep.subr.mxu0 0.0
    %477 = vmatpush1.msra.mxu0 0.0
    %478 = vmatprep.subr.mxu0 0.0
    %479 = vmatpush1.msra.mxu0 0.0
    %480 = vmatprep.subr.mxu0 0.0
    %481 = vmatpush1.msra.mxu0 0.0
    %482 = vmatprep.subr.mxu0 0.0
    %483 = vmatpush1.msra.mxu0 0.0
    %484 = vmatprep.subr.mxu0 0.0
    %485 = vmatpush1.msra.mxu0 0.0
    %486 = vmatprep.subr.mxu0 0.0
    %487 = vmatpush1.msra.mxu0 0.0
    %488 = vmatprep.subr.mxu0 0.0
    %489 = vmatpush1.msra.mxu0 0.0
    %490 = vmatprep.subr.mxu0 0.0
    %491 = vmatpush1.msra.mxu0 0.0
    %492 = vmatprep.subr.mxu0 0.0
    %493 = vmatpush1.msra.mxu0 0.0
    %494 = vmatprep.subr.mxu0 0.0
    %495 = vmatpush1.msra.mxu0 %v89
    %496 = vmatprep.subr.mxu0 0.0
    %497 = vmatpush1.msra.mxu0 %v88
    %498 = vmatprep.subr.mxu0 0.0
    %499 = vmatpush2.msra.mxu0 0.0
    %500 = vmatprep.subr.mxu0 0.0
    %501 = vmatpush2.msra.mxu0 0.0
    %502 = vmatprep.subr.mxu0 0.0
    %503 = vmatpush2.msra.mxu0 0.0
    %504 = vmatprep.subr.mxu0 0.0
    %505 = vmatpush2.msra.mxu0 0.0
    %506 = vmatprep.subr.mxu0 0.0
    %507 = vmatpush2.msra.mxu0 0.0
    %508 = vmatprep.subr.mxu0 0.0
    %509 = vmatpush2.msra.mxu0 0.0
    %510 = vmatprep.subr.mxu0 0.0
    %511 = vmatpush2.msra.mxu0 0.0
    %512 = vmatprep.subr.mxu0 0.0
    %513 = vmatpush2.msra.mxu0 0.0
    %514 = vmatprep.subr.mxu0 0.0
    %515 = vmatpush2.msra.mxu0 0.0
    %516 = vmatprep.subr.mxu0 0.0
    %517 = vmatpush2.msra.mxu0 0.0
    %518 = vmatprep.subr.mxu0 0.0
    %519 = vmatpush2.msra.mxu0 0.0
    %520 = vmatprep.subr.mxu0 0.0
    %521 = vmatpush2.msra.mxu0 0.0
    %522 = vmatprep.subr.mxu0 0.0
    %523 = vmatpush2.msra.mxu0 0.0
    %524 = vmatprep.subr.mxu0 0.0
    %525 = vmatpush2.msra.mxu0 0.0
    %526 = vmatprep.subr.mxu0 0.0
    %527 = vmatpush2.msra.mxu0 0.0
    %528 = vmatprep.subr.mxu0 0.0
    %529 = vmatpush2.msra.mxu0 0.0
    %530 = vmatprep.mubr.f32.mxu0 0.0
    %531 = vmatmul.mubr.f32.gmra.mxu0 %v464
    %v532 = vpop.f32.mrf.mxu0
    %v533 = vadd.f32 %v114, %v532
    %v534 = vpop.f32.mrf.mxu0
    %535 = vdwg.mxu0
    %v536 = vmax.f32 %v533, 0.0
    %vm537 = vcmask 261120
    %v538 = vsel %vm537, %v536, 0.0
    %539 = vadd.xlane.f32.xlu0 %v538
    %v540 = vpop.xlane.xlu0 %539
    %v541 = vmul.f32 %v536, %v536
    %v542 = vsel %vm537, %v541, 0.0
    %543 = vadd.xlane.f32.xlu0 %v542
    %v544 = vpop.xlane.xlu0 %543
    %v545 = vmul.f32 %v540, 0.03125
    %v546 = vmul.f32 %v544, 0.03125
    %v547 = vmul.f32 %v545, %v545
    %v548 = vsub.f32 %v546, %v547
    %v549 = vsub.f32 %v536, %v545
    %v550 = vadd.f32 %v548, 1e-05
    %v551 = vrsqrt.pop %v550
    %v552 = vmul.f32 %v549, %v551
    %v553 = vmul.f32 %v552, %v121
    %v554 = vadd.f32 %v553, %v128
    %v556 = vsel %vm537, %v554, 0
    %558 = vmatprep.subr.mxu0 0.0
    %559 = vmatpush1.msra.mxu0 0.0
    %560 = vmatprep.subr.mxu0 0.0
    %561 = vmatpush1.msra.mxu0 0.0
    %562 = vmatprep.subr.mxu0 0.0
    %563 = vmatpush1.msra.mxu0 0.0
    %564 = vmatprep.subr.mxu0 0.0
    %565 = vmatpush1.msra.mxu0 0.0
    %566 = vmatprep.subr.mxu0 0.0
    %567 = vmatpush1.msra.mxu0 0.0
    %568 = vmatprep.subr.mxu0 0.0
    %569 = vmatpush1.msra.mxu0 0.0
    %570 = vmatprep.subr.mxu0 0.0
    %571 = vmatpush1.msra.mxu0 0.0
    %572 = vmatprep.subr.mxu0 0.0
    %573 = vmatpush1.msra.mxu0 0.0
    %574 = vmatprep.subr.mxu0 0.0
    %575 = vmatpush1.msra.mxu0 0.0
    %576 = vmatprep.subr.mxu0 0.0
    %577 = vmatpush1.msra.mxu0 0.0
    %578 = vmatprep.subr.mxu0 0.0
    %579 = vmatpush1.msra.mxu0 0.0
    %580 = vmatprep.subr.mxu0 0.0
    %581 = vmatpush1.msra.mxu0 0.0
    %582 = vmatprep.subr.mxu0 0.0
    %583 = vmatpush1.msra.mxu0 %v93
    %584 = vmatprep.subr.mxu0 0.0
    %585 = vmatpush1.msra.mxu0 %v92
    %586 = vmatprep.subr.mxu0 0.0
    %587 = vmatpush1.msra.mxu0 %v91
    %588 = vmatprep.subr.mxu0 0.0
    %589 = vmatpush1.msra.mxu0 %v90
    %590 = vmatprep.subr.mxu0 0.0
    %591 = vmatpush2.msra.mxu0 0.0
    %592 = vmatprep.subr.mxu0 0.0
    %593 = vmatpush2.msra.mxu0 0.0
    %594 = vmatprep.subr.mxu0 0.0
    %595 = vmatpush2.msra.mxu0 0.0
    %596 = vmatprep.subr.mxu0 0.0
    %597 = vmatpush2.msra.mxu0 0.0
    %598 = vmatprep.subr.mxu0 0.0
    %599 = vmatpush2.msra.mxu0 0.0
    %600 = vmatprep.subr.mxu0 0.0
    %601 = vmatpush2.msra.mxu0 0.0
    %602 = vmatprep.subr.mxu0 0.0
    %603 = vmatpush2.msra.mxu0 0.0
    %604 = vmatprep.subr.mxu0 0.0
    %605 = vmatpush2.msra.mxu0 0.0
    %606 = vmatprep.subr.mxu0 0.0
    %607 = vmatpush2.msra.mxu0 0.0
    %608 = vmatprep.subr.mxu0 0.0
    %609 = vmatpush2.msra.mxu0 0.0
    %610 = vmatprep.subr.mxu0 0.0
    %611 = vmatpush2.msra.mxu0 0.0
    %612 = vmatprep.subr.mxu0 0.0
    %613 = vmatpush2.msra.mxu0 0.0
    %614 = vmatprep.subr.mxu0 0.0
    %615 = vmatpush2.msra.mxu0 0.0
    %616 = vmatprep.subr.mxu0 0.0
    %617 = vmatpush2.msra.mxu0 0.0
    %618 = vmatprep.subr.mxu0 0.0
    %619 = vmatpush2.msra.mxu0 0.0
    %620 = vmatprep.subr.mxu0 0.0
    %621 = vmatpush2.msra.mxu0 0.0
    %622 = vmatprep.mubr.f32.mxu0 0.0
    %623 = vmatmul.mubr.f32.gmra.mxu0 %v556
    %v624 = vpop.f32.mrf.mxu0
    %v625 = vadd.f32 %v135, %v624
    %v626 = vpop.f32.mrf.mxu0
    %627 = vdwg.mxu0
    %v628 = vxor.u32 %v625, 2147483648
    %v629 = vmul.f32 %v628, 1.442695
    %v630 = vpow.pop %v629
    %v631 = vadd.f32 %v630, 1.0
    %v632 = vrcp.pop %v631
    %v633 = vmul.f32 1.0, %v632
    %v634 = vmul.f32 %v554, %v633
    %v635 = vsub.f32 %v554, %v634
    %v636 = vadd.f32 %v635, 0.0
    %v638 = vsel %vm537, %v636, 0
    %640 = vmatprep.subr.mxu0 0.0
    %641 = vmatpush1.msra.mxu0 0.0
    %642 = vmatprep.subr.mxu0 0.0
    %643 = vmatpush1.msra.mxu0 0.0
    %644 = vmatprep.subr.mxu0 0.0
    %645 = vmatpush1.msra.mxu0 0.0
    %646 = vmatprep.subr.mxu0 0.0
    %647 = vmatpush1.msra.mxu0 0.0
    %648 = vmatprep.subr.mxu0 0.0
    %649 = vmatpush1.msra.mxu0 0.0
    %650 = vmatprep.subr.mxu0 0.0
    %651 = vmatpush1.msra.mxu0 0.0
    %652 = vmatprep.subr.mxu0 0.0
    %653 = vmatpush1.msra.mxu0 0.0
    %654 = vmatprep.subr.mxu0 0.0
    %655 = vmatpush1.msra.mxu0 0.0
    %656 = vmatprep.subr.mxu0 0.0
    %657 = vmatpush1.msra.mxu0 0.0
    %658 = vmatprep.subr.mxu0 0.0
    %659 = vmatpush1.msra.mxu0 0.0
    %660 = vmatprep.subr.mxu0 0.0
    %661 = vmatpush1.msra.mxu0 0.0
    %662 = vmatprep.subr.mxu0 0.0
    %663 = vmatpush1.msra.mxu0 0.0
    %664 = vmatprep.subr.mxu0 0.0
    %665 = vmatpush1.msra.mxu0 %v97
    %666 = vmatprep.subr.mxu0 0.0
    %667 = vmatpush1.msra.mxu0 %v96
    %668 = vmatprep.subr.mxu0 0.0
    %669 = vmatpush1.msra.mxu0 %v95
    %670 = vmatprep.subr.mxu0 0.0
    %671 = vmatpush1.msra.mxu0 %v94
    %672 = vmatprep.subr.mxu0 0.0
    %673 = vmatpush2.msra.mxu0 0.0
    %674 = vmatprep.subr.mxu0 0.0
    %675 = vmatpush2.msra.mxu0 0.0
    %676 = vmatprep.subr.mxu0 0.0
    %677 = vmatpush2.msra.mxu0 0.0
    %678 = vmatprep.subr.mxu0 0.0
    %679 = vmatpush2.msra.mxu0 0.0
    %680 = vmatprep.subr.mxu0 0.0
    %681 = vmatpush2.msra.mxu0 0.0
    %682 = vmatprep.subr.mxu0 0.0
    %683 = vmatpush2.msra.mxu0 0.0
    %684 = vmatprep.subr.mxu0 0.0
    %685 = vmatpush2.msra.mxu0 0.0
    %686 = vmatprep.subr.mxu0 0.0
    %687 = vmatpush2.msra.mxu0 0.0
    %688 = vmatprep.subr.mxu0 0.0
    %689 = vmatpush2.msra.mxu0 0.0
    %690 = vmatprep.subr.mxu0 0.0
    %691 = vmatpush2.msra.mxu0 0.0
    %692 = vmatprep.subr.mxu0 0.0
    %693 = vmatpush2.msra.mxu0 0.0
    %694 = vmatprep.subr.mxu0 0.0
    %695 = vmatpush2.msra.mxu0 0.0
    %696 = vmatprep.subr.mxu0 0.0
    %697 = vmatpush2.msra.mxu0 0.0
    %698 = vmatprep.subr.mxu0 0.0
    %699 = vmatpush2.msra.mxu0 0.0
    %700 = vmatprep.subr.mxu0 0.0
    %701 = vmatpush2.msra.mxu0 0.0
    %702 = vmatprep.subr.mxu0 0.0
    %703 = vmatpush2.msra.mxu0 0.0
    %704 = vmatprep.mubr.f32.mxu0 0.0
    %705 = vmatmul.mubr.f32.gmra.mxu0 %v638
    %v706 = vpop.f32.mrf.mxu0
    %v707 = vadd.f32 %v142, %v706
    %v708 = vpop.f32.mrf.mxu0
    %709 = vdwg.mxu0
    %v710 = vxor.u32 %v707, 2147483648
    %v711 = vmul.f32 %v710, 1.442695
    %v712 = vpow.pop %v711
    %v713 = vadd.f32 %v712, 1.0
    %v714 = vrcp.pop %v713
    %v715 = vmul.f32 1.0, %v714
    %v716 = vmul.f32 %v636, %v715
    %v717 = vsub.f32 1.0, %v715
    %v718 = vmul.f32 %v636, %v717
    %v719 = vadd.f32 %v634, %v716
    %v721 = vsel %vm537, %v719, 0
    %723 = vmatprep.subr.mxu0 0.0
    %724 = vmatpush1.msra.mxu0 0.0
    %725 = vmatprep.subr.mxu0 0.0
    %726 = vmatpush1.msra.mxu0 0.0
    %727 = vmatprep.subr.mxu0 0.0
    %728 = vmatpush1.msra.mxu0 0.0
    %729 = vmatprep.subr.mxu0 0.0
    %730 = vmatpush1.msra.mxu0 0.0
    %731 = vmatprep.subr.mxu0 0.0
    %732 = vmatpush1.msra.mxu0 0.0
    %733 = vmatprep.subr.mxu0 0.0
    %734 = vmatpush1.msra.mxu0 0.0
    %735 = vmatprep.subr.mxu0 0.0
    %736 = vmatpush1.msra.mxu0 0.0
    %737 = vmatprep.subr.mxu0 0.0
    %738 = vmatpush1.msra.mxu0 0.0
    %739 = vmatprep.subr.mxu0 0.0
    %740 = vmatpush1.msra.mxu0 0.0
    %741 = vmatprep.subr.mxu0 0.0
    %742 = vmatpush1.msra.mxu0 0.0
    %743 = vmatprep.subr.mxu0 0.0
    %744 = vmatpush1.msra.mxu0 0.0
    %745 = vmatprep.subr.mxu0 0.0
    %746 = vmatpush1.msra.mxu0 0.0
    %747 = vmatprep.subr.mxu0 0.0
    %748 = vmatpush1.msra.mxu0 %v101
    %749 = vmatprep.subr.mxu0 0.0
    %750 = vmatpush1.msra.mxu0 %v100
    %751 = vmatprep.subr.mxu0 0.0
    %752 = vmatpush1.msra.mxu0 %v99
    %753 = vmatprep.subr.mxu0 0.0
    %754 = vmatpush1.msra.mxu0 %v98
    %755 = vmatprep.subr.mxu0 0.0
    %756 = vmatpush2.msra.mxu0 0.0
    %757 = vmatprep.subr.mxu0 0.0
    %758 = vmatpush2.msra.mxu0 0.0
    %759 = vmatprep.subr.mxu0 0.0
    %760 = vmatpush2.msra.mxu0 0.0
    %761 = vmatprep.subr.mxu0 0.0
    %762 = vmatpush2.msra.mxu0 0.0
    %763 = vmatprep.subr.mxu0 0.0
    %764 = vmatpush2.msra.mxu0 0.0
    %765 = vmatprep.subr.mxu0 0.0
    %766 = vmatpush2.msra.mxu0 0.0
    %767 = vmatprep.subr.mxu0 0.0
    %768 = vmatpush2.msra.mxu0 0.0
    %769 = vmatprep.subr.mxu0 0.0
    %770 = vmatpush2.msra.mxu0 0.0
    %771 = vmatprep.subr.mxu0 0.0
    %772 = vmatpush2.msra.mxu0 0.0
    %773 = vmatprep.subr.mxu0 0.0
    %774 = vmatpush2.msra.mxu0 0.0
    %775 = vmatprep.subr.mxu0 0.0
    %776 = vmatpush2.msra.mxu0 0.0
    %777 = vmatprep.subr.mxu0 0.0
    %778 = vmatpush2.msra.mxu0 0.0
    %779 = vmatprep.subr.mxu0 0.0
    %780 = vmatpush2.msra.mxu0 0.0
    %781 = vmatprep.subr.mxu0 0.0
    %782 = vmatpush2.msra.mxu0 0.0
    %783 = vmatprep.subr.mxu0 0.0
    %784 = vmatpush2.msra.mxu0 0.0
    %785 = vmatprep.subr.mxu0 0.0
    %786 = vmatpush2.msra.mxu0 0.0
    %787 = vmatprep.mubr.f32.mxu0 0.0
    %788 = vmatmul.mubr.f32.gmra.mxu0 %v721
    %v789 = vpop.f32.mrf.mxu0
    %v790 = vadd.f32 %v149, %v789
    %v791 = vpop.f32.mrf.mxu0
    %792 = vdwg.mxu0
    %v793 = vmax.f32 %v790, 0.0
    %v794 = vsel %vm537, %v793, 0.0
    %795 = vadd.xlane.f32.xlu0 %v794
    %v796 = vpop.xlane.xlu0 %795
    %v797 = vmul.f32 %v793, %v793
    %v798 = vsel %vm537, %v797, 0.0
    %799 = vadd.xlane.f32.xlu0 %v798
    %v800 = vpop.xlane.xlu0 %799
    %v801 = vmul.f32 %v796, 0.03125
    %v802 = vmul.f32 %v800, 0.03125
    %v803 = vmul.f32 %v801, %v801
    %v804 = vsub.f32 %v802, %v803
    %v805 = vsub.f32 %v793, %v801
    %v806 = vadd.f32 %v804, 1e-05
    %v807 = vrsqrt.pop %v806
    %v808 = vmul.f32 %v805, %v807
    %v809 = vmul.f32 %v808, %v156
    %v810 = vadd.f32 %v809, %v163
    %811 = vst.msk [vmem:[#allocation3] sm:$0xff] %vm537, %v810
    %s812 = scalar_lea.vmem %s0, 8
    %v813 = vld [vmem:[%s812] sm:$0xff]
    %s814 = scalar_lea.vmem [#allocation2], 8
    %v815 = vld [vmem:[%s814] sm:$0xff]
    %v816 = vsub.f32 %v813, %v815
    %v817 = vadd.f32 %v461, %v816
    %v819 = vsel %vm182, %v817, 0
    %821 = vmatprep.subr.mxu0 0.0
    %822 = vmatpush1.msra.mxu0 0.0
    %823 = vmatprep.subr.mxu0 0.0
    %824 = vmatpush1.msra.mxu0 0.0
    %825 = vmatprep.subr.mxu0 0.0
    %826 = vmatpush1.msra.mxu0 0.0
    %827 = vmatprep.subr.mxu0 0.0
    %828 = vmatpush1.msra.mxu0 0.0
    %829 = vmatprep.subr.mxu0 0.0
    %830 = vmatpush1.msra.mxu0 0.0
    %831 = vmatprep.subr.mxu0 0.0
    %832 = vmatpush1.msra.mxu0 0.0
    %833 = vmatprep.subr.mxu0 0.0
    %834 = vmatpush1.msra.mxu0 0.0
    %835 = vmatprep.subr.mxu0 0.0
    %836 = vmatpush1.msra.mxu0 0.0
    %837 = vmatprep.subr.mxu0 0.0
    %838 = vmatpush1.msra.mxu0 0.0
    %839 = vmatprep.subr.mxu0 0.0
    %840 = vmatpush1.msra.mxu0 0.0
    %841 = vmatprep.subr.mxu0 0.0
    %842 = vmatpush1.msra.mxu0 0.0
    %843 = vmatprep.subr.mxu0 0.0
    %844 = vmatpush1.msra.mxu0 0.0
    %845 = vmatprep.subr.mxu0 0.0
    %846 = vmatpush1.msra.mxu0 0.0
    %847 = vmatprep.subr.mxu0 0.0
    %848 = vmatpush1.msra.mxu0 0.0
    %849 = vmatprep.subr.mxu0 0.0
    %850 = vmatpush1.msra.mxu0 %v87
    %851 = vmatprep.subr.mxu0 0.0
    %852 = vmatpush1.msra.mxu0 %v86
    %853 = vmatprep.subr.mxu0 0.0
    %854 = vmatpush2.msra.mxu0 0.0
    %855 = vmatprep.subr.mxu0 0.0
    %856 = vmatpush2.msra.mxu0 0.0
    %857 = vmatprep.subr.mxu0 0.0
    %858 = vmatpush2.msra.mxu0 0.0
    %859 = vmatprep.subr.mxu0 0.0
    %860 = vmatpush2.msra.mxu0 0.0
    %861 = vmatprep.subr.mxu0 0.0
    %862 = vmatpush2.msra.mxu0 0.0
    %863 = vmatprep.subr.mxu0 0.0
    %864 = vmatpush2.msra.mxu0 0.0
    %865 = vmatprep.subr.mxu0 0.0
    %866 = vmatpush2.msra.mxu0 0.0
    %867 = vmatprep.subr.mxu0 0.0
    %868 = vmatpush2.msra.mxu0 0.0
    %869 = vmatprep.subr.mxu0 0.0
    %870 = vmatpush2.msra.mxu0 0.0
    %871 = vmatprep.subr.mxu0 0.0
    %872 = vmatpush2.msra.mxu0 0.0
    %873 = vmatprep.subr.mxu0 0.0
    %874 = vmatpush2.msra.mxu0 0.0
    %875 = vmatprep.subr.mxu0 0.0
    %876 = vmatpush2.msra.mxu0 0.0
    %877 = vmatprep.subr.mxu0 0.0
    %878 = vmatpush2.msra.mxu0 0.0
    %879 = vmatprep.subr.mxu0 0.0
    %880 = vmatpush2.msra.mxu0 0.0
    %881 = vmatprep.subr.mxu0 0.0
    %882 = vmatpush2.msra.mxu0 0.0
    %883 = vmatprep.subr.mxu0 0.0
    %884 = vmatpush2.msra.mxu0 0.0
    %885 = vmatprep.mubr.f32.mxu0 0.0
    %886 = vmatmul.mubr.f32.gmra.mxu0 %v819
    %v887 = vpop.f32.mrf.mxu0
    %v888 = vadd.f32 %v107, %v887
    %v889 = vpop.f32.mrf.mxu0
    %890 = vdwg.mxu0
    %v891 = vxor.u32 %v888, 2147483648
    %v892 = vmul.f32 %v891, 1.442695
    %v893 = vpow.pop %v892
    %v894 = vadd.f32 %v893, 1.0
    %v895 = vrcp.pop %v894
    %v896 = vmul.f32 1.0, %v895
    %v897 = vmul.f32 %v817, %v896
    %v898 = vsub.f32 1.0, %v896
    %v899 = vmul.f32 %v817, %v898
    %v900 = vadd.f32 %v815, %v897
    %v902 = vsel %vm182, %v900, 0
    %904 = vmatprep.subr.mxu0 0.0
    %905 = vmatpush1.msra.mxu0 0.0
    %906 = vmatprep.subr.mxu0 0.0
    %907 = vmatpush1.msra.mxu0 0.0
    %908 = vmatprep.subr.mxu0 0.0
    %909 = vmatpush1.msra.mxu0 0.0
    %910 = vmatprep.subr.mxu0 0.0
    %911 = vmatpush1.msra.mxu0 0.0
    %912 = vmatprep.subr.mxu0 0.0
    %913 = vmatpush1.msra.mxu0 0.0
    %914 = vmatprep.subr.mxu0 0.0
    %915 = vmatpush1.msra.mxu0 0.0
    %916 = vmatprep.subr.mxu0 0.0
    %917 = vmatpush1.msra.mxu0 0.0
    %918 = vmatprep.subr.mxu0 0.0
    %919 = vmatpush1.msra.mxu0 0.0
    %920 = vmatprep.subr.mxu0 0.0
    %921 = vmatpush1.msra.mxu0 0.0
    %922 = vmatprep.subr.mxu0 0.0
    %923 = vmatpush1.msra.mxu0 0.0
    %924 = vmatprep.subr.mxu0 0.0
    %925 = vmatpush1.msra.mxu0 0.0
    %926 = vmatprep.subr.mxu0 0.0
    %927 = vmatpush1.msra.mxu0 0.0
    %928 = vmatprep.subr.mxu0 0.0
    %929 = vmatpush1.msra.mxu0 0.0
    %930 = vmatprep.subr.mxu0 0.0
    %931 = vmatpush1.msra.mxu0 0.0
    %932 = vmatprep.subr.mxu0 0.0
    %933 = vmatpush1.msra.mxu0 %v89
    %934 = vmatprep.subr.mxu0 0.0
    %935 = vmatpush1.msra.mxu0 %v88
    %936 = vmatprep.subr.mxu0 0.0
    %937 = vmatpush2.msra.mxu0 0.0
    %938 = vmatprep.subr.mxu0 0.0
    %939 = vmatpush2.msra.mxu0 0.0
    %940 = vmatprep.subr.mxu0 0.0
    %941 = vmatpush2.msra.mxu0 0.0
    %942 = vmatprep.subr.mxu0 0.0
    %943 = vmatpush2.msra.mxu0 0.0
    %944 = vmatprep.subr.mxu0 0.0
    %945 = vmatpush2.msra.mxu0 0.0
    %946 = vmatprep.subr.mxu0 0.0
    %947 = vmatpush2.msra.mxu0 0.0
    %948 = vmatprep.subr.mxu0 0.0
    %949 = vmatpush2.msra.mxu0 0.0
    %950 = vmatprep.subr.mxu0 0.0
    %951 = vmatpush2.msra.mxu0 0.0
    %952 = vmatprep.subr.mxu0 0.0
    %953 = vmatpush2.msra.mxu0 0.0
    %954 = vmatprep.subr.mxu0 0.0
    %955 = vmatpush2.msra.mxu0 0.0
    %956 = vmatprep.subr.mxu0 0.0
    %957 = vmatpush2.msra.mxu0 0.0
    %958 = vmatprep.subr.mxu0 0.0
    %959 = vmatpush2.msra.mxu0 0.0
    %960 = vmatprep.subr.mxu0 0.0
    %961 = vmatpush2.msra.mxu0 0.0
    %962 = vmatprep.subr.mxu0 0.0
    %963 = vmatpush2.msra.mxu0 0.0
    %964 = vmatprep.subr.mxu0 0.0
    %965 = vmatpush2.msra.mxu0 0.0
    %966 = vmatprep.subr.mxu0 0.0
    %967 = vmatpush2.msra.mxu0 0.0
    %968 = vmatprep.mubr.f32.mxu0 0.0
    %969 = vmatmul.mubr.f32.gmra.mxu0 %v902
    %v970 = vpop.f32.mrf.mxu0
    %v971 = vadd.f32 %v114, %v970
    %v972 = vpop.f32.mrf.mxu0
    %973 = vdwg.mxu0
    %v974 = vmax.f32 %v971, 0.0
    %v975 = vsel %vm537, %v974, 0.0
    %976 = vadd.xlane.f32.xlu0 %v975
    %v977 = vpop.xlane.xlu0 %976
    %v978 = vmul.f32 %v974, %v974
    %v979 = vsel %vm537, %v978, 0.0
    %980 = vadd.xlane.f32.xlu0 %v979
    %v981 = vpop.xlane.xlu0 %980
    %v982 = vmul.f32 %v977, 0.03125
    %v983 = vmul.f32 %v981, 0.03125
    %v984 = vmul.f32 %v982, %v982
    %v985 = vsub.f32 %v983, %v984
    %v986 = vsub.f32 %v974, %v982
    %v987 = vadd.f32 %v985, 1e-05
    %v988 = vrsqrt.pop %v987
    %v989 = vmul.f32 %v986, %v988
    %v990 = vmul.f32 %v989, %v121
    %v991 = vadd.f32 %v990, %v128
    %v993 = vsel %vm537, %v991, 0
    %995 = vmatprep.subr.mxu0 0.0
    %996 = vmatpush1.msra.mxu0 0.0
    %997 = vmatprep.subr.mxu0 0.0
    %998 = vmatpush1.msra.mxu0 0.0
    %999 = vmatprep.subr.mxu0 0.0
    %1000 = vmatpush1.msra.mxu0 0.0
    %1001 = vmatprep.subr.mxu0 0.0
    %1002 = vmatpush1.msra.mxu0 0.0
    %1003 = vmatprep.subr.mxu0 0.0
    %1004 = vmatpush1.msra.mxu0 0.0
    %1005 = vmatprep.subr.mxu0 0.0
    %1006 = vmatpush1.msra.mxu0 0.0
    %1007 = vmatprep.subr.mxu0 0.0
    %1008 = vmatpush1.msra.mxu0 0.0
    %1009 = vmatprep.subr.mxu0 0.0
    %1010 = vmatpush1.msra.mxu0 0.0
    %1011 = vmatprep.subr.mxu0 0.0
    %1012 = vmatpush1.msra.mxu0 0.0
    %1013 = vmatprep.subr.mxu0 0.0
    %1014 = vmatpush1.msra.mxu0 0.0
    %1015 = vmatprep.subr.mxu0 0.0
    %1016 = vmatpush1.msra.mxu0 0.0
    %1017 = vmatprep.subr.mxu0 0.0
    %1018 = vmatpush1.msra.mxu0 0.0
    %1019 = vmatprep.subr.mxu0 0.0
    %1020 = vmatpush1.msra.mxu0 %v93
    %1021 = vmatprep.subr.mxu0 0.0
    %1022 = vmatpush1.msra.mxu0 %v92
    %1023 = vmatprep.subr.mxu0 0.0
    %1024 = vmatpush1.msra.mxu0 %v91
    %1025 = vmatprep.subr.mxu0 0.0
    %1026 = vmatpush1.msra.mxu0 %v90
    %1027 = vmatprep.subr.mxu0 0.0
    %1028 = vmatpush2.msra.mxu0 0.0
    %1029 = vmatprep.subr.mxu0 0.0
    %1030 = vmatpush2.msra.mxu0 0.0
    %1031 = vmatprep.subr.mxu0 0.0
    %1032 = vmatpush2.msra.mxu0 0.0
    %1033 = vmatprep.subr.mxu0 0.0
    %1034 = vmatpush2.msra.mxu0 0.0
    %1035 = vmatprep.subr.mxu0 0.0
    %1036 = vmatpush2.msra.mxu0 0.0
    %1037 = vmatprep.subr.mxu0 0.0
    %1038 = vmatpush2.msra.mxu0 0.0
    %1039 = vmatprep.subr.mxu0 0.0
    %1040 = vmatpush2.msra.mxu0 0.0
    %1041 = vmatprep.subr.mxu0 0.0
    %1042 = vmatpush2.msra.mxu0 0.0
    %1043 = vmatprep.subr.mxu0 0.0
    %1044 = vmatpush2.msra.mxu0 0.0
    %1045 = vmatprep.subr.mxu0 0.0
    %1046 = vmatpush2.msra.mxu0 0.0
    %1047 = vmatprep.subr.mxu0 0.0
    %1048 = vmatpush2.msra.mxu0 0.0
    %1049 = vmatprep.subr.mxu0 0.0
    %1050 = vmatpush2.msra.mxu0 0.0
    %1051 = vmatprep.subr.mxu0 0.0
    %1052 = vmatpush2.msra.mxu0 0.0
    %1053 = vmatprep.subr.mxu0 0.0
    %1054 = vmatpush2.msra.mxu0 0.0
    %1055 = vmatprep.subr.mxu0 0.0
    %1056 = vmatpush2.msra.mxu0 0.0
    %1057 = vmatprep.subr.mxu0 0.0
    %1058 = vmatpush2.msra.mxu0 0.0
    %1059 = vmatprep.mubr.f32.mxu0 0.0
    %1060 = vmatmul.mubr.f32.gmra.mxu0 %v993
    %v1061 = vpop.f32.mrf.mxu0
    %v1062 = vadd.f32 %v135, %v1061
    %v1063 = vpop.f32.mrf.mxu0
    %1064 = vdwg.mxu0
    %v1065 = vxor.u32 %v1062, 2147483648
    %v1066 = vmul.f32 %v1065, 1.442695
    %v1067 = vpow.pop %v1066
    %v1068 = vadd.f32 %v1067, 1.0
    %v1069 = vrcp.pop %v1068
    %v1070 = vmul.f32 1.0, %v1069
    %v1071 = vmul.f32 %v991, %v1070
    %v1072 = vsub.f32 %v991, %v1071
    %v1073 = vadd.f32 %v718, %v1072
    %v1075 = vsel %vm537, %v1073, 0
    %1077 = vmatprep.subr.mxu0 0.0
    %1078 = vmatpush1.msra.mxu0 0.0
    %1079 = vmatprep.subr.mxu0 0.0
    %1080 = vmatpush1.msra.mxu0 0.0
    %1081 = vmatprep.subr.mxu0 0.0
    %1082 = vmatpush1.msra.mxu0 0.0
    %1083 = vmatprep.subr.mxu0 0.0
    %1084 = vmatpush1.msra.mxu0 0.0
    %1085 = vmatprep.subr.mxu0 0.0
    %1086 = vmatpush1.msra.mxu0 0.0
    %1087 = vmatprep.subr.mxu0 0.0
    %1088 = vmatpush1.msra.mxu0 0.0
    %1089 = vmatprep.subr.mxu0 0.0
    %1090 = vmatpush1.msra.mxu0 0.0
    %1091 = vmatprep.subr.mxu0 0.0
    %1092 = vmatpush1.msra.mxu0 0.0
    %1093 = vmatprep.subr.mxu0 0.0
    %1094 = vmatpush1.msra.mxu0 0.0
    %1095 = vmatprep.subr.mxu0 0.0
    %1096 = vmatpush1.msra.mxu0 0.0
    %1097 = vmatprep.subr.mxu0 0.0
    %1098 = vmatpush1.msra.mxu0 0.0
    %1099 = vmatprep.subr.mxu0 0.0
    %1100 = vmatpush1.msra.mxu0 0.0
    %1101 = vmatprep.subr.mxu0 0.0
    %1102 = vmatpush1.msra.mxu0 %v97
    %1103 = vmatprep.subr.mxu0 0.0
    %1104 = vmatpush1.msra.mxu0 %v96
    %1105 = vmatprep.subr.mxu0 0.0
    %1106 = vmatpush1.msra.mxu0 %v95
    %1107 = vmatprep.subr.mxu0 0.0
    %1108 = vmatpush1.msra.mxu0 %v94
    %1109 = vmatprep.subr.mxu0 0.0
    %1110 = vmatpush2.msra.mxu0 0.0
    %1111 = vmatprep.subr.mxu0 0.0
    %1112 = vmatpush2.msra.mxu0 0.0
    %1113 = vmatprep.subr.mxu0 0.0
    %1114 = vmatpush2.msra.mxu0 0.0
    %1115 = vmatprep.subr.mxu0 0.0
    %1116 = vmatpush2.msra.mxu0 0.0
    %1117 = vmatprep.subr.mxu0 0.0
    %1118 = vmatpush2.msra.mxu0 0.0
    %1119 = vmatprep.subr.mxu0 0.0
    %1120 = vmatpush2.msra.mxu0 0.0
    %1121 = vmatprep.subr.mxu0 0.0
    %1122 = vmatpush2.msra.mxu0 0.0
    %1123 = vmatprep.subr.mxu0 0.0
    %1124 = vmatpush2.msra.mxu0 0.0
    %1125 = vmatprep.subr.mxu0 0.0
    %1126 = vmatpush2.msra.mxu0 0.0
    %1127 = vmatprep.subr.mxu0 0.0
    %1128 = vmatpush2.msra.mxu0 0.0
    %1129 = vmatprep.subr.mxu0 0.0
    %1130 = vmatpush2.msra.mxu0 0.0
    %1131 = vmatprep.subr.mxu0 0.0
    %1132 = vmatpush2.msra.mxu0 0.0
    %1133 = vmatprep.subr.mxu0 0.0
    %1134 = vmatpush2.msra.mxu0 0.0
    %1135 = vmatprep.subr.mxu0 0.0
    %1136 = vmatpush2.msra.mxu0 0.0
    %1137 = vmatprep.subr.mxu0 0.0
    %1138 = vmatpush2.msra.mxu0 0.0
    %1139 = vmatprep.subr.mxu0 0.0
    %1140 = vmatpush2.msra.mxu0 0.0
    %1141 = vmatprep.mubr.f32.mxu0 0.0
    %1142 = vmatmul.mubr.f32.gmra.mxu0 %v1075
    %v1143 = vpop.f32.mrf.mxu0
    %v1144 = vadd.f32 %v142, %v1143
    %v1145 = vpop.f32.mrf.mxu0
    %1146 = vdwg.mxu0
    %v1147 = vxor.u32 %v1144, 2147483648
    %v1148 = vmul.f32 %v1147, 1.442695
    %v1149 = vpow.pop %v1148
    %v1150 = vadd.f32 %v1149, 1.0
    %v1151 = vrcp.pop %v1150
    %v1152 = vmul.f32 1.0, %v1151
    %v1153 = vmul.f32 %v1073, %v1152
    %v1154 = vsub.f32 1.0, %v1152
    %v1155 = vmul.f32 %v1073, %v1154
    %v1156 = vadd.f32 %v1071, %v1153
    %v1158 = vsel %vm537, %v1156, 0
    %1160 = vmatprep.subr.mxu0 0.0
    %1161 = vmatpush1.msra.mxu0 0.0
    %1162 = vmatprep.subr.mxu0 0.0
    %1163 = vmatpush1.msra.mxu0 0.0
    %1164 = vmatprep.subr.mxu0 0.0
    %1165 = vmatpush1.msra.mxu0 0.0
    %1166 = vmatprep.subr.mxu0 0.0
    %1167 = vmatpush1.msra.mxu0 0.0
    %1168 = vmatprep.subr.mxu0 0.0
    %1169 = vmatpush1.msra.mxu0 0.0
    %1170 = vmatprep.subr.mxu0 0.0
    %1171 = vmatpush1.msra.mxu0 0.0
    %1172 = vmatprep.subr.mxu0 0.0
    %1173 = vmatpush1.msra.mxu0 0.0
    %1174 = vmatprep.subr.mxu0 0.0
    %1175 = vmatpush1.msra.mxu0 0.0
    %1176 = vmatprep.subr.mxu0 0.0
    %1177 = vmatpush1.msra.mxu0 0.0
    %1178 = vmatprep.subr.mxu0 0.0
    %1179 = vmatpush1.msra.mxu0 0.0
    %1180 = vmatprep.subr.mxu0 0.0
    %1181 = vmatpush1.msra.mxu0 0.0
    %1182 = vmatprep.subr.mxu0 0.0
    %1183 = vmatpush1.msra.mxu0 0.0
    %1184 = vmatprep.subr.mxu0 0.0
    %1185 = vmatpush1.msra.mxu0 %v101
    %1186 = vmatprep.subr.mxu0 0.0
    %1187 = vmatpush1.msra.mxu0 %v100
    %1188 = vmatprep.subr.mxu0 0.0
    %1189 = vmatpush1.msra.mxu0 %v99
    %1190 = vmatprep.subr.mxu0 0.0
    %1191 = vmatpush1.msra.mxu0 %v98
    %1192 = vmatprep.subr.mxu0 0.0
    %1193 = vmatpush2.msra.mxu0 0.0
    %1194 = vmatprep.subr.mxu0 0.0
    %1195 = vmatpush2.msra.mxu0 0.0
    %1196 = vmatprep.subr.mxu0 0.0
    %1197 = vmatpush2.msra.mxu0 0.0
    %1198 = vmatprep.subr.mxu0 0.0
    %1199 = vmatpush2.msra.mxu0 0.0
    %1200 = vmatprep.subr.mxu0 0.0
    %1201 = vmatpush2.msra.mxu0 0.0
    %1202 = vmatprep.subr.mxu0 0.0
    %1203 = vmatpush2.msra.mxu0 0.0
    %1204 = vmatprep.subr.mxu0 0.0
    %1205 = vmatpush2.msra.mxu0 0.0
    %1206 = vmatprep.subr.mxu0 0.0
    %1207 = vmatpush2.msra.mxu0 0.0
    %1208 = vmatprep.subr.mxu0 0.0
    %1209 = vmatpush2.msra.mxu0 0.0
    %1210 = vmatprep.subr.mxu0 0.0
    %1211 = vmatpush2.msra.mxu0 0.0
    %1212 = vmatprep.subr.mxu0 0.0
    %1213 = vmatpush2.msra.mxu0 0.0
    %1214 = vmatprep.subr.mxu0 0.0
    %1215 = vmatpush2.msra.mxu0 0.0
    %1216 = vmatprep.subr.mxu0 0.0
    %1217 = vmatpush2.msra.mxu0 0.0
    %1218 = vmatprep.subr.mxu0 0.0
    %1219 = vmatpush2.msra.mxu0 0.0
    %1220 = vmatprep.subr.mxu0 0.0
    %1221 = vmatpush2.msra.mxu0 0.0
    %1222 = vmatprep.subr.mxu0 0.0
    %1223 = vmatpush2.msra.mxu0 0.0
    %1224 = vmatprep.mubr.f32.mxu0 0.0
    %1225 = vmatmul.mubr.f32.gmra.mxu0 %v1158
    %v1226 = vpop.f32.mrf.mxu0
    %v1227 = vadd.f32 %v149, %v1226
    %v1228 = vpop.f32.mrf.mxu0
    %1229 = vdwg.mxu0
    %v1230 = vmax.f32 %v1227, 0.0
    %v1231 = vsel %vm537, %v1230, 0.0
    %1232 = vadd.xlane.f32.xlu0 %v1231
    %v1233 = vpop.xlane.xlu0 %1232
    %v1234 = vmul.f32 %v1230, %v1230
    %v1235 = vsel %vm537, %v1234, 0.0
    %1236 = vadd.xlane.f32.xlu0 %v1235
    %v1237 = vpop.xlane.xlu0 %1236
    %v1238 = vmul.f32 %v1233, 0.03125
    %v1239 = vmul.f32 %v1237, 0.03125
    %v1240 = vmul.f32 %v1238, %v1238
    %v1241 = vsub.f32 %v1239, %v1240
    %v1242 = vsub.f32 %v1230, %v1238
    %v1243 = vadd.f32 %v1241, 1e-05
    %v1244 = vrsqrt.pop %v1243
    %v1245 = vmul.f32 %v1242, %v1244
    %v1246 = vmul.f32 %v1245, %v156
    %v1247 = vadd.f32 %v1246, %v163
    %s1248 = scalar_lea.vmem [#allocation3], 8
    %1249 = vst.msk [vmem:[%s1248] sm:$0xff] %vm537, %v1247
    %s1250 = scalar_lea.vmem %s0, 16
    %v1251 = vld [vmem:[%s1250] sm:$0xff]
    %s1252 = scalar_lea.vmem [#allocation2], 16
    %v1253 = vld [vmem:[%s1252] sm:$0xff]
    %v1254 = vsub.f32 %v1251, %v1253
    %v1255 = vadd.f32 %v899, %v1254
    %v1257 = vsel %vm182, %v1255, 0
    %1259 = vmatprep.subr.mxu0 0.0
    %1260 = vmatpush1.msra.mxu0 0.0
    %1261 = vmatprep.subr.mxu0 0.0
    %1262 = vmatpush1.msra.mxu0 0.0
    %1263 = vmatprep.subr.mxu0 0.0
    %1264 = vmatpush1.msra.mxu0 0.0
    %1265 = vmatprep.subr.mxu0 0.0
    %1266 = vmatpush1.msra.mxu0 0.0
    %1267 = vmatprep.subr.mxu0 0.0
    %1268 = vmatpush1.msra.mxu0 0.0
    %1269 = vmatprep.subr.mxu0 0.0
    %1270 = vmatpush1.msra.mxu0 0.0
    %1271 = vmatprep.subr.mxu0 0.0
    %1272 = vmatpush1.msra.mxu0 0.0
    %1273 = vmatprep.subr.mxu0 0.0
    %1274 = vmatpush1.msra.mxu0 0.0
    %1275 = vmatprep.subr.mxu0 0.0
    %1276 = vmatpush1.msra.mxu0 0.0
    %1277 = vmatprep.subr.mxu0 0.0
    %1278 = vmatpush1.msra.mxu0 0.0
    %1279 = vmatprep.subr.mxu0 0.0
    %1280 = vmatpush1.msra.mxu0 0.0
    %1281 = vmatprep.subr.mxu0 0.0
    %1282 = vmatpush1.msra.mxu0 0.0
    %1283 = vmatprep.subr.mxu0 0.0
    %1284 = vmatpush1.msra.mxu0 0.0
    %1285 = vmatprep.subr.mxu0 0.0
    %1286 = vmatpush1.msra.mxu0 0.0
    %1287 = vmatprep.subr.mxu0 0.0
    %1288 = vmatpush1.msra.mxu0 %v87
    %1289 = vmatprep.subr.mxu0 0.0
    %1290 = vmatpush1.msra.mxu0 %v86
    %1291 = vmatprep.subr.mxu0 0.0
    %1292 = vmatpush2.msra.mxu0 0.0
    %1293 = vmatprep.subr.mxu0 0.0
    %1294 = vmatpush2.msra.mxu0 0.0
    %1295 = vmatprep.subr.mxu0 0.0
    %1296 = vmatpush2.msra.mxu0 0.0
    %1297 = vmatprep.subr.mxu0 0.0
    %1298 = vmatpush2.msra.mxu0 0.0
    %1299 = vmatprep.subr.mxu0 0.0
    %1300 = vmatpush2.msra.mxu0 0.0
    %1301 = vmatprep.subr.mxu0 0.0
    %1302 = vmatpush2.msra.mxu0 0.0
    %1303 = vmatprep.subr.mxu0 0.0
    %1304 = vmatpush2.msra.mxu0 0.0
    %1305 = vmatprep.subr.mxu0 0.0
    %1306 = vmatpush2.msra.mxu0 0.0
    %1307 = vmatprep.subr.mxu0 0.0
    %1308 = vmatpush2.msra.mxu0 0.0
    %1309 = vmatprep.subr.mxu0 0.0
    %1310 = vmatpush2.msra.mxu0 0.0
    %1311 = vmatprep.subr.mxu0 0.0
    %1312 = vmatpush2.msra.mxu0 0.0
    %1313 = vmatprep.subr.mxu0 0.0
    %1314 = vmatpush2.msra.mxu0 0.0
    %1315 = vmatprep.subr.mxu0 0.0
    %1316 = vmatpush2.msra.mxu0 0.0
    %1317 = vmatprep.subr.mxu0 0.0
    %1318 = vmatpush2.msra.mxu0 0.0
    %1319 = vmatprep.subr.mxu0 0.0
    %1320 = vmatpush2.msra.mxu0 0.0
    %1321 = vmatprep.subr.mxu0 0.0
    %1322 = vmatpush2.msra.mxu0 0.0
    %1323 = vmatprep.mubr.f32.mxu0 0.0
    %1324 = vmatmul.mubr.f32.gmra.mxu0 %v1257
    %v1325 = vpop.f32.mrf.mxu0
    %v1326 = vadd.f32 %v107, %v1325
    %v1327 = vpop.f32.mrf.mxu0
    %1328 = vdwg.mxu0
    %v1329 = vxor.u32 %v1326, 2147483648
    %v1330 = vmul.f32 %v1329, 1.442695
    %v1331 = vpow.pop %v1330
    %v1332 = vadd.f32 %v1331, 1.0
    %v1333 = vrcp.pop %v1332
    %v1334 = vmul.f32 1.0, %v1333
    %v1335 = vmul.f32 %v1255, %v1334
    %v1336 = vsub.f32 1.0, %v1334
    %v1337 = vmul.f32 %v1255, %v1336
    %v1338 = vadd.f32 %v1253, %v1335
    %v1340 = vsel %vm182, %v1338, 0
    %1342 = vmatprep.subr.mxu0 0.0
    %1343 = vmatpush1.msra.mxu0 0.0
    %1344 = vmatprep.subr.mxu0 0.0
    %1345 = vmatpush1.msra.mxu0 0.0
    %1346 = vmatprep.subr.mxu0 0.0
    %1347 = vmatpush1.msra.mxu0 0.0
    %1348 = vmatprep.subr.mxu0 0.0
    %1349 = vmatpush1.msra.mxu0 0.0
    %1350 = vmatprep.subr.mxu0 0.0
    %1351 = vmatpush1.msra.mxu0 0.0
    %1352 = vmatprep.subr.mxu0 0.0
    %1353 = vmatpush1.msra.mxu0 0.0
    %1354 = vmatprep.subr.mxu0 0.0
    %1355 = vmatpush1.msra.mxu0 0.0
    %1356 = vmatprep.subr.mxu0 0.0
    %1357 = vmatpush1.msra.mxu0 0.0
    %1358 = vmatprep.subr.mxu0 0.0
    %1359 = vmatpush1.msra.mxu0 0.0
    %1360 = vmatprep.subr.mxu0 0.0
    %1361 = vmatpush1.msra.mxu0 0.0
    %1362 = vmatprep.subr.mxu0 0.0
    %1363 = vmatpush1.msra.mxu0 0.0
    %1364 = vmatprep.subr.mxu0 0.0
    %1365 = vmatpush1.msra.mxu0 0.0
    %1366 = vmatprep.subr.mxu0 0.0
    %1367 = vmatpush1.msra.mxu0 0.0
    %1368 = vmatprep.subr.mxu0 0.0
    %1369 = vmatpush1.msra.mxu0 0.0
    %1370 = vmatprep.subr.mxu0 0.0
    %1371 = vmatpush1.msra.mxu0 %v89
    %1372 = vmatprep.subr.mxu0 0.0
    %1373 = vmatpush1.msra.mxu0 %v88
    %1374 = vmatprep.subr.mxu0 0.0
    %1375 = vmatpush2.msra.mxu0 0.0
    %1376 = vmatprep.subr.mxu0 0.0
    %1377 = vmatpush2.msra.mxu0 0.0
    %1378 = vmatprep.subr.mxu0 0.0
    %1379 = vmatpush2.msra.mxu0 0.0
    %1380 = vmatprep.subr.mxu0 0.0
    %1381 = vmatpush2.msra.mxu0 0.0
    %1382 = vmatprep.subr.mxu0 0.0
    %1383 = vmatpush2.msra.mxu0 0.0
    %1384 = vmatprep.subr.mxu0 0.0
    %1385 = vmatpush2.msra.mxu0 0.0
    %1386 = vmatprep.subr.mxu0 0.0
    %1387 = vmatpush2.msra.mxu0 0.0
    %1388 = vmatprep.subr.mxu0 0.0
    %1389 = vmatpush2.msra.mxu0 0.0
    %1390 = vmatprep.subr.mxu0 0.0
    %1391 = vmatpush2.msra.mxu0 0.0
    %1392 = vmatprep.subr.mxu0 0.0
    %1393 = vmatpush2.msra.mxu0 0.0
    %1394 = vmatprep.subr.mxu0 0.0
    %1395 = vmatpush2.msra.mxu0 0.0
    %1396 = vmatprep.subr.mxu0 0.0
    %1397 = vmatpush2.msra.mxu0 0.0
    %1398 = vmatprep.subr.mxu0 0.0
    %1399 = vmatpush2.msra.mxu0 0.0
    %1400 = vmatprep.subr.mxu0 0.0
    %1401 = vmatpush2.msra.mxu0 0.0
    %1402 = vmatprep.subr.mxu0 0.0
    %1403 = vmatpush2.msra.mxu0 0.0
    %1404 = vmatprep.subr.mxu0 0.0
    %1405 = vmatpush2.msra.mxu0 0.0
    %1406 = vmatprep.mubr.f32.mxu0 0.0
    %1407 = vmatmul.mubr.f32.gmra.mxu0 %v1340
    %v1408 = vpop.f32.mrf.mxu0
    %v1409 = vadd.f32 %v114, %v1408
    %v1410 = vpop.f32.mrf.mxu0
    %1411 = vdwg.mxu0
    %v1412 = vmax.f32 %v1409, 0.0
    %v1413 = vsel %vm537, %v1412, 0.0
    %1414 = vadd.xlane.f32.xlu0 %v1413
    %v1415 = vpop.xlane.xlu0 %1414
    %v1416 = vmul.f32 %v1412, %v1412
    %v1417 = vsel %vm537, %v1416, 0.0
    %1418 = vadd.xlane.f32.xlu0 %v1417
    %v1419 = vpop.xlane.xlu0 %1418
    %v1420 = vmul.f32 %v1415, 0.03125
    %v1421 = vmul.f32 %v1419, 0.03125
    %v1422 = vmul.f32 %v1420, %v1420
    %v1423 = vsub.f32 %v1421, %v1422
    %v1424 = vsub.f32 %v1412, %v1420
    %v1425 = vadd.f32 %v1423, 1e-05
    %v1426 = vrsqrt.pop %v1425
    %v1427 = vmul.f32 %v1424, %v1426
    %v1428 = vmul.f32 %v1427, %v121
    %v1429 = vadd.f32 %v1428, %v128
    %v1431 = vsel %vm537, %v1429, 0
    %1433 = vmatprep.subr.mxu0 0.0
    %1434 = vmatpush1.msra.mxu0 0.0
    %1435 = vmatprep.subr.mxu0 0.0
    %1436 = vmatpush1.msra.mxu0 0.0
    %1437 = vmatprep.subr.mxu0 0.0
    %1438 = vmatpush1.msra.mxu0 0.0
    %1439 = vmatprep.subr.mxu0 0.0
    %1440 = vmatpush1.msra.mxu0 0.0
    %1441 = vmatprep.subr.mxu0 0.0
    %1442 = vmatpush1.msra.mxu0 0.0
    %1443 = vmatprep.subr.mxu0 0.0
    %1444 = vmatpush1.msra.mxu0 0.0
    %1445 = vmatprep.subr.mxu0 0.0
    %1446 = vmatpush1.msra.mxu0 0.0
    %1447 = vmatprep.subr.mxu0 0.0
    %1448 = vmatpush1.msra.mxu0 0.0
    %1449 = vmatprep.subr.mxu0 0.0
    %1450 = vmatpush1.msra.mxu0 0.0
    %1451 = vmatprep.subr.mxu0 0.0
    %1452 = vmatpush1.msra.mxu0 0.0
    %1453 = vmatprep.subr.mxu0 0.0
    %1454 = vmatpush1.msra.mxu0 0.0
    %1455 = vmatprep.subr.mxu0 0.0
    %1456 = vmatpush1.msra.mxu0 0.0
    %1457 = vmatprep.subr.mxu0 0.0
    %1458 = vmatpush1.msra.mxu0 %v93
    %1459 = vmatprep.subr.mxu0 0.0
    %1460 = vmatpush1.msra.mxu0 %v92
    %1461 = vmatprep.subr.mxu0 0.0
    %1462 = vmatpush1.msra.mxu0 %v91
    %1463 = vmatprep.subr.mxu0 0.0
    %1464 = vmatpush1.msra.mxu0 %v90
    %1465 = vmatprep.subr.mxu0 0.0
    %1466 = vmatpush2.msra.mxu0 0.0
    %1467 = vmatprep.subr.mxu0 0.0
    %1468 = vmatpush2.msra.mxu0 0.0
    %1469 = vmatprep.subr.mxu0 0.0
    %1470 = vmatpush2.msra.mxu0 0.0
    %1471 = vmatprep.subr.mxu0 0.0
    %1472 = vmatpush2.msra.mxu0 0.0
    %1473 = vmatprep.subr.mxu0 0.0
    %1474 = vmatpush2.msra.mxu0 0.0
    %1475 = vmatprep.subr.mxu0 0.0
    %1476 = vmatpush2.msra.mxu0 0.0
    %1477 = vmatprep.subr.mxu0 0.0
    %1478 = vmatpush2.msra.mxu0 0.0
    %1479 = vmatprep.subr.mxu0 0.0
    %1480 = vmatpush2.msra.mxu0 0.0
    %1481 = vmatprep.subr.mxu0 0.0
    %1482 = vmatpush2.msra.mxu0 0.0
    %1483 = vmatprep.subr.mxu0 0.0
    %1484 = vmatpush2.msra.mxu0 0.0
    %1485 = vmatprep.subr.mxu0 0.0
    %1486 = vmatpush2.msra.mxu0 0.0
    %1487 = vmatprep.subr.mxu0 0.0
    %1488 = vmatpush2.msra.mxu0 0.0
    %1489 = vmatprep.subr.mxu0 0.0
    %1490 = vmatpush2.msra.mxu0 0.0
    %1491 = vmatprep.subr.mxu0 0.0
    %1492 = vmatpush2.msra.mxu0 0.0
    %1493 = vmatprep.subr.mxu0 0.0
    %1494 = vmatpush2.msra.mxu0 0.0
    %1495 = vmatprep.subr.mxu0 0.0
    %1496 = vmatpush2.msra.mxu0 0.0
    %1497 = vmatprep.mubr.f32.mxu0 0.0
    %1498 = vmatmul.mubr.f32.gmra.mxu0 %v1431
    %v1499 = vpop.f32.mrf.mxu0
    %v1500 = vadd.f32 %v135, %v1499
    %v1501 = vpop.f32.mrf.mxu0
    %1502 = vdwg.mxu0
    %v1503 = vxor.u32 %v1500, 2147483648
    %v1504 = vmul.f32 %v1503, 1.442695
    %v1505 = vpow.pop %v1504
    %v1506 = vadd.f32 %v1505, 1.0
    %v1507 = vrcp.pop %v1506
    %v1508 = vmul.f32 1.0, %v1507
    %v1509 = vmul.f32 %v1429, %v1508
    %v1510 = vsub.f32 %v1429, %v1509
    %v1511 = vadd.f32 %v1155, %v1510
    %v1513 = vsel %vm537, %v1511, 0
    %1515 = vmatprep.subr.mxu0 0.0
    %1516 = vmatpush1.msra.mxu0 0.0
    %1517 = vmatprep.subr.mxu0 0.0
    %1518 = vmatpush1.msra.mxu0 0.0
    %1519 = vmatprep.subr.mxu0 0.0
    %1520 = vmatpush1.msra.mxu0 0.0
    %1521 = vmatprep.subr.mxu0 0.0
    %1522 = vmatpush1.msra.mxu0 0.0
    %1523 = vmatprep.subr.mxu0 0.0
    %1524 = vmatpush1.msra.mxu0 0.0
    %1525 = vmatprep.subr.mxu0 0.0
    %1526 = vmatpush1.msra.mxu0 0.0
    %1527 = vmatprep.subr.mxu0 0.0
    %1528 = vmatpush1.msra.mxu0 0.0
    %1529 = vmatprep.subr.mxu0 0.0
    %1530 = vmatpush1.msra.mxu0 0.0
    %1531 = vmatprep.subr.mxu0 0.0
    %1532 = vmatpush1.msra.mxu0 0.0
    %1533 = vmatprep.subr.mxu0 0.0
    %1534 = vmatpush1.msra.mxu0 0.0
    %1535 = vmatprep.subr.mxu0 0.0
    %1536 = vmatpush1.msra.mxu0 0.0
    %1537 = vmatprep.subr.mxu0 0.0
    %1538 = vmatpush1.msra.mxu0 0.0
    %1539 = vmatprep.subr.mxu0 0.0
    %1540 = vmatpush1.msra.mxu0 %v97
    %1541 = vmatprep.subr.mxu0 0.0
    %1542 = vmatpush1.msra.mxu0 %v96
    %1543 = vmatprep.subr.mxu0 0.0
    %1544 = vmatpush1.msra.mxu0 %v95
    %1545 = vmatprep.subr.mxu0 0.0
    %1546 = vmatpush1.msra.mxu0 %v94
    %1547 = vmatprep.subr.mxu0 0.0
    %1548 = vmatpush2.msra.mxu0 0.0
    %1549 = vmatprep.subr.mxu0 0.0
    %1550 = vmatpush2.msra.mxu0 0.0
    %1551 = vmatprep.subr.mxu0 0.0
    %1552 = vmatpush2.msra.mxu0 0.0
    %1553 = vmatprep.subr.mxu0 0.0
    %1554 = vmatpush2.msra.mxu0 0.0
    %1555 = vmatprep.subr.mxu0 0.0
    %1556 = vmatpush2.msra.mxu0 0.0
    %1557 = vmatprep.subr.mxu0 0.0
    %1558 = vmatpush2.msra.mxu0 0.0
    %1559 = vmatprep.subr.mxu0 0.0
    %1560 = vmatpush2.msra.mxu0 0.0
    %1561 = vmatprep.subr.mxu0 0.0
    %1562 = vmatpush2.msra.mxu0 0.0
    %1563 = vmatprep.subr.mxu0 0.0
    %1564 = vmatpush2.msra.mxu0 0.0
    %1565 = vmatprep.subr.mxu0 0.0
    %1566 = vmatpush2.msra.mxu0 0.0
    %1567 = vmatprep.subr.mxu0 0.0
    %1568 = vmatpush2.msra.mxu0 0.0
    %1569 = vmatprep.subr.mxu0 0.0
    %1570 = vmatpush2.msra.mxu0 0.0
    %1571 = vmatprep.subr.mxu0 0.0
    %1572 = vmatpush2.msra.mxu0 0.0
    %1573 = vmatprep.subr.mxu0 0.0
    %1574 = vmatpush2.msra.mxu0 0.0
    %1575 = vmatprep.subr.mxu0 0.0
    %1576 = vmatpush2.msra.mxu0 0.0
    %1577 = vmatprep.subr.mxu0 0.0
    %1578 = vmatpush2.msra.mxu0 0.0
    %1579 = vmatprep.mubr.f32.mxu0 0.0
    %1580 = vmatmul.mubr.f32.gmra.mxu0 %v1513
    %v1581 = vpop.f32.mrf.mxu0
    %v1582 = vadd.f32 %v142, %v1581
    %v1583 = vpop.f32.mrf.mxu0
    %1584 = vdwg.mxu0
    %v1585 = vxor.u32 %v1582, 2147483648
    %v1586 = vmul.f32 %v1585, 1.442695
    %v1587 = vpow.pop %v1586
    %v1588 = vadd.f32 %v1587, 1.0
    %v1589 = vrcp.pop %v1588
    %v1590 = vmul.f32 1.0, %v1589
    %v1591 = vmul.f32 %v1511, %v1590
    %v1592 = vsub.f32 1.0, %v1590
    %v1593 = vmul.f32 %v1511, %v1592
    %v1594 = vadd.f32 %v1509, %v1591
    %v1596 = vsel %vm537, %v1594, 0
    %1598 = vmatprep.subr.mxu0 0.0
    %1599 = vmatpush1.msra.mxu0 0.0
    %1600 = vmatprep.subr.mxu0 0.0
    %1601 = vmatpush1.msra.mxu0 0.0
    %1602 = vmatprep.subr.mxu0 0.0
    %1603 = vmatpush1.msra.mxu0 0.0
    %1604 = vmatprep.subr.mxu0 0.0
    %1605 = vmatpush1.msra.mxu0 0.0
    %1606 = vmatprep.subr.mxu0 0.0
    %1607 = vmatpush1.msra.mxu0 0.0
    %1608 = vmatprep.subr.mxu0 0.0
    %1609 = vmatpush1.msra.mxu0 0.0
    %1610 = vmatprep.subr.mxu0 0.0
    %1611 = vmatpush1.msra.mxu0 0.0
    %1612 = vmatprep.subr.mxu0 0.0
    %1613 = vmatpush1.msra.mxu0 0.0
    %1614 = vmatprep.subr.mxu0 0.0
    %1615 = vmatpush1.msra.mxu0 0.0
    %1616 = vmatprep.subr.mxu0 0.0
    %1617 = vmatpush1.msra.mxu0 0.0
    %1618 = vmatprep.subr.mxu0 0.0
    %1619 = vmatpush1.msra.mxu0 0.0
    %1620 = vmatprep.subr.mxu0 0.0
    %1621 = vmatpush1.msra.mxu0 0.0
    %1622 = vmatprep.subr.mxu0 0.0
    %1623 = vmatpush1.msra.mxu0 %v101
    %1624 = vmatprep.subr.mxu0 0.0
    %1625 = vmatpush1.msra.mxu0 %v100
    %1626 = vmatprep.subr.mxu0 0.0
    %1627 = vmatpush1.msra.mxu0 %v99
    %1628 = vmatprep.subr.mxu0 0.0
    %1629 = vmatpush1.msra.mxu0 %v98
    %1630 = vmatprep.subr.mxu0 0.0
    %1631 = vmatpush2.msra.mxu0 0.0
    %1632 = vmatprep.subr.mxu0 0.0
    %1633 = vmatpush2.msra.mxu0 0.0
    %1634 = vmatprep.subr.mxu0 0.0
    %1635 = vmatpush2.msra.mxu0 0.0
    %1636 = vmatprep.subr.mxu0 0.0
    %1637 = vmatpush2.msra.mxu0 0.0
    %1638 = vmatprep.subr.mxu0 0.0
    %1639 = vmatpush2.msra.mxu0 0.0
    %1640 = vmatprep.subr.mxu0 0.0
    %1641 = vmatpush2.msra.mxu0 0.0
    %1642 = vmatprep.subr.mxu0 0.0
    %1643 = vmatpush2.msra.mxu0 0.0
    %1644 = vmatprep.subr.mxu0 0.0
    %1645 = vmatpush2.msra.mxu0 0.0
    %1646 = vmatprep.subr.mxu0 0.0
    %1647 = vmatpush2.msra.mxu0 0.0
    %1648 = vmatprep.subr.mxu0 0.0
    %1649 = vmatpush2.msra.mxu0 0.0
    %1650 = vmatprep.subr.mxu0 0.0
    %1651 = vmatpush2.msra.mxu0 0.0
    %1652 = vmatprep.subr.mxu0 0.0
    %1653 = vmatpush2.msra.mxu0 0.0
    %1654 = vmatprep.subr.mxu0 0.0
    %1655 = vmatpush2.msra.mxu0 0.0
    %1656 = vmatprep.subr.mxu0 0.0
    %1657 = vmatpush2.msra.mxu0 0.0
    %1658 = vmatprep.subr.mxu0 0.0
    %1659 = vmatpush2.msra.mxu0 0.0
    %1660 = vmatprep.subr.mxu0 0.0
    %1661 = vmatpush2.msra.mxu0 0.0
    %1662 = vmatprep.mubr.f32.mxu0 0.0
    %1663 = vmatmul.mubr.f32.gmra.mxu0 %v1596
    %v1664 = vpop.f32.mrf.mxu0
    %v1665 = vadd.f32 %v149, %v1664
    %v1666 = vpop.f32.mrf.mxu0
    %1667 = vdwg.mxu0
    %v1668 = vmax.f32 %v1665, 0.0
    %v1669 = vsel %vm537, %v1668, 0.0
    %1670 = vadd.xlane.f32.xlu0 %v1669
    %v1671 = vpop.xlane.xlu0 %1670
    %v1672 = vmul.f32 %v1668, %v1668
    %v1673 = vsel %vm537, %v1672, 0.0
    %1674 = vadd.xlane.f32.xlu0 %v1673
    %v1675 = vpop.xlane.xlu0 %1674
    %v1676 = vmul.f32 %v1671, 0.03125
    %v1677 = vmul.f32 %v1675, 0.03125
    %v1678 = vmul.f32 %v1676, %v1676
    %v1679 = vsub.f32 %v1677, %v1678
    %v1680 = vsub.f32 %v1668, %v1676
    %v1681 = vadd.f32 %v1679, 1e-05
    %v1682 = vrsqrt.pop %v1681
    %v1683 = vmul.f32 %v1680, %v1682
    %v1684 = vmul.f32 %v1683, %v156
    %v1685 = vadd.f32 %v1684, %v163
    %s1686 = scalar_lea.vmem [#allocation3], 16
    %1687 = vst.msk [vmem:[%s1686] sm:$0xff] %vm537, %v1685
    %s1688 = scalar_lea.vmem %s0, 24
    %v1689 = vld [vmem:[%s1688] sm:$0xff]
    %s1690 = scalar_lea.vmem [#allocation2], 24
    %v1691 = vld [vmem:[%s1690] sm:$0xff]
    %v1692 = vsub.f32 %v1689, %v1691
    %v1693 = vadd.f32 %v1337, %v1692
    %v1695 = vsel %vm182, %v1693, 0
    %1697 = vmatprep.subr.mxu0 0.0
    %1698 = vmatpush1.msra.mxu0 0.0
    %1699 = vmatprep.subr.mxu0 0.0
    %1700 = vmatpush1.msra.mxu0 0.0
    %1701 = vmatprep.subr.mxu0 0.0
    %1702 = vmatpush1.msra.mxu0 0.0
    %1703 = vmatprep.subr.mxu0 0.0
    %1704 = vmatpush1.msra.mxu0 0.0
    %1705 = vmatprep.subr.mxu0 0.0
    %1706 = vmatpush1.msra.mxu0 0.0
    %1707 = vmatprep.subr.mxu0 0.0
    %1708 = vmatpush1.msra.mxu0 0.0
    %1709 = vmatprep.subr.mxu0 0.0
    %1710 = vmatpush1.msra.mxu0 0.0
    %1711 = vmatprep.subr.mxu0 0.0
    %1712 = vmatpush1.msra.mxu0 0.0
    %1713 = vmatprep.subr.mxu0 0.0
    %1714 = vmatpush1.msra.mxu0 0.0
    %1715 = vmatprep.subr.mxu0 0.0
    %1716 = vmatpush1.msra.mxu0 0.0
    %1717 = vmatprep.subr.mxu0 0.0
    %1718 = vmatpush1.msra.mxu0 0.0
    %1719 = vmatprep.subr.mxu0 0.0
    %1720 = vmatpush1.msra.mxu0 0.0
    %1721 = vmatprep.subr.mxu0 0.0
    %1722 = vmatpush1.msra.mxu0 0.0
    %1723 = vmatprep.subr.mxu0 0.0
    %1724 = vmatpush1.msra.mxu0 0.0
    %1725 = vmatprep.subr.mxu0 0.0
    %1726 = vmatpush1.msra.mxu0 %v87
    %1727 = vmatprep.subr.mxu0 0.0
    %1728 = vmatpush1.msra.mxu0 %v86
    %1729 = vmatprep.subr.mxu0 0.0
    %1730 = vmatpush2.msra.mxu0 0.0
    %1731 = vmatprep.subr.mxu0 0.0
    %1732 = vmatpush2.msra.mxu0 0.0
    %1733 = vmatprep.subr.mxu0 0.0
    %1734 = vmatpush2.msra.mxu0 0.0
    %1735 = vmatprep.subr.mxu0 0.0
    %1736 = vmatpush2.msra.mxu0 0.0
    %1737 = vmatprep.subr.mxu0 0.0
    %1738 = vmatpush2.msra.mxu0 0.0
    %1739 = vmatprep.subr.mxu0 0.0
    %1740 = vmatpush2.msra.mxu0 0.0
    %1741 = vmatprep.subr.mxu0 0.0
    %1742 = vmatpush2.msra.mxu0 0.0
    %1743 = vmatprep.subr.mxu0 0.0
    %1744 = vmatpush2.msra.mxu0 0.0
    %1745 = vmatprep.subr.mxu0 0.0
    %1746 = vmatpush2.msra.mxu0 0.0
    %1747 = vmatprep.subr.mxu0 0.0
    %1748 = vmatpush2.msra.mxu0 0.0
    %1749 = vmatprep.subr.mxu0 0.0
    %1750 = vmatpush2.msra.mxu0 0.0
    %1751 = vmatprep.subr.mxu0 0.0
    %1752 = vmatpush2.msra.mxu0 0.0
    %1753 = vmatprep.subr.mxu0 0.0
    %1754 = vmatpush2.msra.mxu0 0.0
    %1755 = vmatprep.subr.mxu0 0.0
    %1756 = vmatpush2.msra.mxu0 0.0
    %1757 = vmatprep.subr.mxu0 0.0
    %1758 = vmatpush2.msra.mxu0 0.0
    %1759 = vmatprep.subr.mxu0 0.0
    %1760 = vmatpush2.msra.mxu0 0.0
    %1761 = vmatprep.mubr.f32.mxu0 0.0
    %1762 = vmatmul.mubr.f32.gmra.mxu0 %v1695
    %v1763 = vpop.f32.mrf.mxu0
    %v1764 = vadd.f32 %v107, %v1763
    %v1765 = vpop.f32.mrf.mxu0
    %1766 = vdwg.mxu0
    %v1767 = vxor.u32 %v1764, 2147483648
    %v1768 = vmul.f32 %v1767, 1.442695
    %v1769 = vpow.pop %v1768
    %v1770 = vadd.f32 %v1769, 1.0
    %v1771 = vrcp.pop %v1770
    %v1772 = vmul.f32 1.0, %v1771
    %v1773 = vmul.f32 %v1693, %v1772
    %v1774 = vsub.f32 1.0, %v1772
    %v1775 = vmul.f32 %v1693, %v1774
    %v1776 = vadd.f32 %v1691, %v1773
    %v1778 = vsel %vm182, %v1776, 0
    %1780 = vmatprep.subr.mxu0 0.0
    %1781 = vmatpush1.msra.mxu0 0.0
    %1782 = vmatprep.subr.mxu0 0.0
    %1783 = vmatpush1.msra.mxu0 0.0
    %1784 = vmatprep.subr.mxu0 0.0
    %1785 = vmatpush1.msra.mxu0 0.0
    %1786 = vmatprep.subr.mxu0 0.0
    %1787 = vmatpush1.msra.mxu0 0.0
    %1788 = vmatprep.subr.mxu0 0.0
    %1789 = vmatpush1.msra.mxu0 0.0
    %1790 = vmatprep.subr.mxu0 0.0
    %1791 = vmatpush1.msra.mxu0 0.0
    %1792 = vmatprep.subr.mxu0 0.0
    %1793 = vmatpush1.msra.mxu0 0.0
    %1794 = vmatprep.subr.mxu0 0.0
    %1795 = vmatpush1.msra.mxu0 0.0
    %1796 = vmatprep.subr.mxu0 0.0
    %1797 = vmatpush1.msra.mxu0 0.0
    %1798 = vmatprep.subr.mxu0 0.0
    %1799 = vmatpush1.msra.mxu0 0.0
    %1800 = vmatprep.subr.mxu0 0.0
    %1801 = vmatpush1.msra.mxu0 0.0
    %1802 = vmatprep.subr.mxu0 0.0
    %1803 = vmatpush1.msra.mxu0 0.0
    %1804 = vmatprep.subr.mxu0 0.0
    %1805 = vmatpush1.msra.mxu0 0.0
    %1806 = vmatprep.subr.mxu0 0.0
    %1807 = vmatpush1.msra.mxu0 0.0
    %1808 = vmatprep.subr.mxu0 0.0
    %1809 = vmatpush1.msra.mxu0 %v89
    %1810 = vmatprep.subr.mxu0 0.0
    %1811 = vmatpush1.msra.mxu0 %v88
    %1812 = vmatprep.subr.mxu0 0.0
    %1813 = vmatpush2.msra.mxu0 0.0
    %1814 = vmatprep.subr.mxu0 0.0
    %1815 = vmatpush2.msra.mxu0 0.0
    %1816 = vmatprep.subr.mxu0 0.0
    %1817 = vmatpush2.msra.mxu0 0.0
    %1818 = vmatprep.subr.mxu0 0.0
    %1819 = vmatpush2.msra.mxu0 0.0
    %1820 = vmatprep.subr.mxu0 0.0
    %1821 = vmatpush2.msra.mxu0 0.0
    %1822 = vmatprep.subr.mxu0 0.0
    %1823 = vmatpush2.msra.mxu0 0.0
    %1824 = vmatprep.subr.mxu0 0.0
    %1825 = vmatpush2.msra.mxu0 0.0
    %1826 = vmatprep.subr.mxu0 0.0
    %1827 = vmatpush2.msra.mxu0 0.0
    %1828 = vmatprep.subr.mxu0 0.0
    %1829 = vmatpush2.msra.mxu0 0.0
    %1830 = vmatprep.subr.mxu0 0.0
    %1831 = vmatpush2.msra.mxu0 0.0
    %1832 = vmatprep.subr.mxu0 0.0
    %1833 = vmatpush2.msra.mxu0 0.0
    %1834 = vmatprep.subr.mxu0 0.0
    %1835 = vmatpush2.msra.mxu0 0.0
    %1836 = vmatprep.subr.mxu0 0.0
    %1837 = vmatpush2.msra.mxu0 0.0
    %1838 = vmatprep.subr.mxu0 0.0
    %1839 = vmatpush2.msra.mxu0 0.0
    %1840 = vmatprep.subr.mxu0 0.0
    %1841 = vmatpush2.msra.mxu0 0.0
    %1842 = vmatprep.subr.mxu0 0.0
    %1843 = vmatpush2.msra.mxu0 0.0
    %1844 = vmatprep.mubr.f32.mxu0 0.0
    %1845 = vmatmul.mubr.f32.gmra.mxu0 %v1778
    %v1846 = vpop.f32.mrf.mxu0
    %v1847 = vadd.f32 %v114, %v1846
    %v1848 = vpop.f32.mrf.mxu0
    %1849 = vdwg.mxu0
    %v1850 = vmax.f32 %v1847, 0.0
    %v1851 = vsel %vm537, %v1850, 0.0
    %1852 = vadd.xlane.f32.xlu0 %v1851
    %v1853 = vpop.xlane.xlu0 %1852
    %v1854 = vmul.f32 %v1850, %v1850
    %v1855 = vsel %vm537, %v1854, 0.0
    %1856 = vadd.xlane.f32.xlu0 %v1855
    %v1857 = vpop.xlane.xlu0 %1856
    %v1858 = vmul.f32 %v1853, 0.03125
    %v1859 = vmul.f32 %v1857, 0.03125
    %v1860 = vmul.f32 %v1858, %v1858
    %v1861 = vsub.f32 %v1859, %v1860
    %v1862 = vsub.f32 %v1850, %v1858
    %v1863 = vadd.f32 %v1861, 1e-05
    %v1864 = vrsqrt.pop %v1863
    %v1865 = vmul.f32 %v1862, %v1864
    %v1866 = vmul.f32 %v1865, %v121
    %v1867 = vadd.f32 %v1866, %v128
    %v1869 = vsel %vm537, %v1867, 0
    %1871 = vmatprep.subr.mxu0 0.0
    %1872 = vmatpush1.msra.mxu0 0.0
    %1873 = vmatprep.subr.mxu0 0.0
    %1874 = vmatpush1.msra.mxu0 0.0
    %1875 = vmatprep.subr.mxu0 0.0
    %1876 = vmatpush1.msra.mxu0 0.0
    %1877 = vmatprep.subr.mxu0 0.0
    %1878 = vmatpush1.msra.mxu0 0.0
    %1879 = vmatprep.subr.mxu0 0.0
    %1880 = vmatpush1.msra.mxu0 0.0
    %1881 = vmatprep.subr.mxu0 0.0
    %1882 = vmatpush1.msra.mxu0 0.0
    %1883 = vmatprep.subr.mxu0 0.0
    %1884 = vmatpush1.msra.mxu0 0.0
    %1885 = vmatprep.subr.mxu0 0.0
    %1886 = vmatpush1.msra.mxu0 0.0
    %1887 = vmatprep.subr.mxu0 0.0
    %1888 = vmatpush1.msra.mxu0 0.0
    %1889 = vmatprep.subr.mxu0 0.0
    %1890 = vmatpush1.msra.mxu0 0.0
    %1891 = vmatprep.subr.mxu0 0.0
    %1892 = vmatpush1.msra.mxu0 0.0
    %1893 = vmatprep.subr.mxu0 0.0
    %1894 = vmatpush1.msra.mxu0 0.0
    %1895 = vmatprep.subr.mxu0 0.0
    %1896 = vmatpush1.msra.mxu0 %v93
    %1897 = vmatprep.subr.mxu0 0.0
    %1898 = vmatpush1.msra.mxu0 %v92
    %1899 = vmatprep.subr.mxu0 0.0
    %1900 = vmatpush1.msra.mxu0 %v91
    %1901 = vmatprep.subr.mxu0 0.0
    %1902 = vmatpush1.msra.mxu0 %v90
    %1903 = vmatprep.subr.mxu0 0.0
    %1904 = vmatpush2.msra.mxu0 0.0
    %1905 = vmatprep.subr.mxu0 0.0
    %1906 = vmatpush2.msra.mxu0 0.0
    %1907 = vmatprep.subr.mxu0 0.0
    %1908 = vmatpush2.msra.mxu0 0.0
    %1909 = vmatprep.subr.mxu0 0.0
    %1910 = vmatpush2.msra.mxu0 0.0
    %1911 = vmatprep.subr.mxu0 0.0
    %1912 = vmatpush2.msra.mxu0 0.0
    %1913 = vmatprep.subr.mxu0 0.0
    %1914 = vmatpush2.msra.mxu0 0.0
    %1915 = vmatprep.subr.mxu0 0.0
    %1916 = vmatpush2.msra.mxu0 0.0
    %1917 = vmatprep.subr.mxu0 0.0
    %1918 = vmatpush2.msra.mxu0 0.0
    %1919 = vmatprep.subr.mxu0 0.0
    %1920 = vmatpush2.msra.mxu0 0.0
    %1921 = vmatprep.subr.mxu0 0.0
    %1922 = vmatpush2.msra.mxu0 0.0
    %1923 = vmatprep.subr.mxu0 0.0
    %1924 = vmatpush2.msra.mxu0 0.0
    %1925 = vmatprep.subr.mxu0 0.0
    %1926 = vmatpush2.msra.mxu0 0.0
    %1927 = vmatprep.subr.mxu0 0.0
    %1928 = vmatpush2.msra.mxu0 0.0
    %1929 = vmatprep.subr.mxu0 0.0
    %1930 = vmatpush2.msra.mxu0 0.0
    %1931 = vmatprep.subr.mxu0 0.0
    %1932 = vmatpush2.msra.mxu0 0.0
    %1933 = vmatprep.subr.mxu0 0.0
    %1934 = vmatpush2.msra.mxu0 0.0
    %1935 = vmatprep.mubr.f32.mxu0 0.0
    %1936 = vmatmul.mubr.f32.gmra.mxu0 %v1869
    %v1937 = vpop.f32.mrf.mxu0
    %v1938 = vadd.f32 %v135, %v1937
    %v1939 = vpop.f32.mrf.mxu0
    %1940 = vdwg.mxu0
    %v1941 = vxor.u32 %v1938, 2147483648
    %v1942 = vmul.f32 %v1941, 1.442695
    %v1943 = vpow.pop %v1942
    %v1944 = vadd.f32 %v1943, 1.0
    %v1945 = vrcp.pop %v1944
    %v1946 = vmul.f32 1.0, %v1945
    %v1947 = vmul.f32 %v1867, %v1946
    %v1948 = vsub.f32 %v1867, %v1947
    %v1949 = vadd.f32 %v1593, %v1948
    %v1951 = vsel %vm537, %v1949, 0
    %1953 = vmatprep.subr.mxu0 0.0
    %1954 = vmatpush1.msra.mxu0 0.0
    %1955 = vmatprep.subr.mxu0 0.0
    %1956 = vmatpush1.msra.mxu0 0.0
    %1957 = vmatprep.subr.mxu0 0.0
    %1958 = vmatpush1.msra.mxu0 0.0
    %1959 = vmatprep.subr.mxu0 0.0
    %1960 = vmatpush1.msra.mxu0 0.0
    %1961 = vmatprep.subr.mxu0 0.0
    %1962 = vmatpush1.msra.mxu0 0.0
    %1963 = vmatprep.subr.mxu0 0.0
    %1964 = vmatpush1.msra.mxu0 0.0
    %1965 = vmatprep.subr.mxu0 0.0
    %1966 = vmatpush1.msra.mxu0 0.0
    %1967 = vmatprep.subr.mxu0 0.0
    %1968 = vmatpush1.msra.mxu0 0.0
    %1969 = vmatprep.subr.mxu0 0.0
    %1970 = vmatpush1.msra.mxu0 0.0
    %1971 = vmatprep.subr.mxu0 0.0
    %1972 = vmatpush1.msra.mxu0 0.0
    %1973 = vmatprep.subr.mxu0 0.0
    %1974 = vmatpush1.msra.mxu0 0.0
    %1975 = vmatprep.subr.mxu0 0.0
    %1976 = vmatpush1.msra.mxu0 0.0
    %1977 = vmatprep.subr.mxu0 0.0
    %1978 = vmatpush1.msra.mxu0 %v97
    %1979 = vmatprep.subr.mxu0 0.0
    %1980 = vmatpush1.msra.mxu0 %v96
    %1981 = vmatprep.subr.mxu0 0.0
    %1982 = vmatpush1.msra.mxu0 %v95
    %1983 = vmatprep.subr.mxu0 0.0
    %1984 = vmatpush1.msra.mxu0 %v94
    %1985 = vmatprep.subr.mxu0 0.0
    %1986 = vmatpush2.msra.mxu0 0.0
    %1987 = vmatprep.subr.mxu0 0.0
    %1988 = vmatpush2.msra.mxu0 0.0
    %1989 = vmatprep.subr.mxu0 0.0
    %1990 = vmatpush2.msra.mxu0 0.0
    %1991 = vmatprep.subr.mxu0 0.0
    %1992 = vmatpush2.msra.mxu0 0.0
    %1993 = vmatprep.subr.mxu0 0.0
    %1994 = vmatpush2.msra.mxu0 0.0
    %1995 = vmatprep.subr.mxu0 0.0
    %1996 = vmatpush2.msra.mxu0 0.0
    %1997 = vmatprep.subr.mxu0 0.0
    %1998 = vmatpush2.msra.mxu0 0.0
    %1999 = vmatprep.subr.mxu0 0.0
    %2000 = vmatpush2.msra.mxu0 0.0
    %2001 = vmatprep.subr.mxu0 0.0
    %2002 = vmatpush2.msra.mxu0 0.0
    %2003 = vmatprep.subr.mxu0 0.0
    %2004 = vmatpush2.msra.mxu0 0.0
    %2005 = vmatprep.subr.mxu0 0.0
    %2006 = vmatpush2.msra.mxu0 0.0
    %2007 = vmatprep.subr.mxu0 0.0
    %2008 = vmatpush2.msra.mxu0 0.0
    %2009 = vmatprep.subr.mxu0 0.0
    %2010 = vmatpush2.msra.mxu0 0.0
    %2011 = vmatprep.subr.mxu0 0.0
    %2012 = vmatpush2.msra.mxu0 0.0
    %2013 = vmatprep.subr.mxu0 0.0
    %2014 = vmatpush2.msra.mxu0 0.0
    %2015 = vmatprep.subr.mxu0 0.0
    %2016 = vmatpush2.msra.mxu0 0.0
    %2017 = vmatprep.mubr.f32.mxu0 0.0
    %2018 = vmatmul.mubr.f32.gmra.mxu0 %v1951
    %v2019 = vpop.f32.mrf.mxu0
    %v2020 = vadd.f32 %v142, %v2019
    %v2021 = vpop.f32.mrf.mxu0
    %2022 = vdwg.mxu0
    %v2023 = vxor.u32 %v2020, 2147483648
    %v2024 = vmul.f32 %v2023, 1.442695
    %v2025 = vpow.pop %v2024
    %v2026 = vadd.f32 %v2025, 1.0
    %v2027 = vrcp.pop %v2026
    %v2028 = vmul.f32 1.0, %v2027
    %v2029 = vmul.f32 %v1949, %v2028
    %v2030 = vsub.f32 1.0, %v2028
    %v2031 = vmul.f32 %v1949, %v2030
    %v2032 = vadd.f32 %v1947, %v2029
    %v2034 = vsel %vm537, %v2032, 0
    %2036 = vmatprep.subr.mxu0 0.0
    %2037 = vmatpush1.msra.mxu0 0.0
    %2038 = vmatprep.subr.mxu0 0.0
    %2039 = vmatpush1.msra.mxu0 0.0
    %2040 = vmatprep.subr.mxu0 0.0
    %2041 = vmatpush1.msra.mxu0 0.0
    %2042 = vmatprep.subr.mxu0 0.0
    %2043 = vmatpush1.msra.mxu0 0.0
    %2044 = vmatprep.subr.mxu0 0.0
    %2045 = vmatpush1.msra.mxu0 0.0
    %2046 = vmatprep.subr.mxu0 0.0
    %2047 = vmatpush1.msra.mxu0 0.0
    %2048 = vmatprep.subr.mxu0 0.0
    %2049 = vmatpush1.msra.mxu0 0.0
    %2050 = vmatprep.subr.mxu0 0.0
    %2051 = vmatpush1.msra.mxu0 0.0
    %2052 = vmatprep.subr.mxu0 0.0
    %2053 = vmatpush1.msra.mxu0 0.0
    %2054 = vmatprep.subr.mxu0 0.0
    %2055 = vmatpush1.msra.mxu0 0.0
    %2056 = vmatprep.subr.mxu0 0.0
    %2057 = vmatpush1.msra.mxu0 0.0
    %2058 = vmatprep.subr.mxu0 0.0
    %2059 = vmatpush1.msra.mxu0 0.0
    %2060 = vmatprep.subr.mxu0 0.0
    %2061 = vmatpush1.msra.mxu0 %v101
    %2062 = vmatprep.subr.mxu0 0.0
    %2063 = vmatpush1.msra.mxu0 %v100
    %2064 = vmatprep.subr.mxu0 0.0
    %2065 = vmatpush1.msra.mxu0 %v99
    %2066 = vmatprep.subr.mxu0 0.0
    %2067 = vmatpush1.msra.mxu0 %v98
    %2068 = vmatprep.subr.mxu0 0.0
    %2069 = vmatpush2.msra.mxu0 0.0
    %2070 = vmatprep.subr.mxu0 0.0
    %2071 = vmatpush2.msra.mxu0 0.0
    %2072 = vmatprep.subr.mxu0 0.0
    %2073 = vmatpush2.msra.mxu0 0.0
    %2074 = vmatprep.subr.mxu0 0.0
    %2075 = vmatpush2.msra.mxu0 0.0
    %2076 = vmatprep.subr.mxu0 0.0
    %2077 = vmatpush2.msra.mxu0 0.0
    %2078 = vmatprep.subr.mxu0 0.0
    %2079 = vmatpush2.msra.mxu0 0.0
    %2080 = vmatprep.subr.mxu0 0.0
    %2081 = vmatpush2.msra.mxu0 0.0
    %2082 = vmatprep.subr.mxu0 0.0
    %2083 = vmatpush2.msra.mxu0 0.0
    %2084 = vmatprep.subr.mxu0 0.0
    %2085 = vmatpush2.msra.mxu0 0.0
    %2086 = vmatprep.subr.mxu0 0.0
    %2087 = vmatpush2.msra.mxu0 0.0
    %2088 = vmatprep.subr.mxu0 0.0
    %2089 = vmatpush2.msra.mxu0 0.0
    %2090 = vmatprep.subr.mxu0 0.0
    %2091 = vmatpush2.msra.mxu0 0.0
    %2092 = vmatprep.subr.mxu0 0.0
    %2093 = vmatpush2.msra.mxu0 0.0
    %2094 = vmatprep.subr.mxu0 0.0
    %2095 = vmatpush2.msra.mxu0 0.0
    %2096 = vmatprep.subr.mxu0 0.0
    %2097 = vmatpush2.msra.mxu0 0.0
    %2098 = vmatprep.subr.mxu0 0.0
    %2099 = vmatpush2.msra.mxu0 0.0
    %2100 = vmatprep.mubr.f32.mxu0 0.0
    %2101 = vmatmul.mubr.f32.gmra.mxu0 %v2034
    %v2102 = vpop.f32.mrf.mxu0
    %v2103 = vadd.f32 %v149, %v2102
    %v2104 = vpop.f32.mrf.mxu0
    %2105 = vdwg.mxu0
    %v2106 = vmax.f32 %v2103, 0.0
    %v2107 = vsel %vm537, %v2106, 0.0
    %2108 = vadd.xlane.f32.xlu0 %v2107
    %v2109 = vpop.xlane.xlu0 %2108
    %v2110 = vmul.f32 %v2106, %v2106
    %v2111 = vsel %vm537, %v2110, 0.0
    %2112 = vadd.xlane.f32.xlu0 %v2111
    %v2113 = vpop.xlane.xlu0 %2112
    %v2114 = vmul.f32 %v2109, 0.03125
    %v2115 = vmul.f32 %v2113, 0.03125
    %v2116 = vmul.f32 %v2114, %v2114
    %v2117 = vsub.f32 %v2115, %v2116
    %v2118 = vsub.f32 %v2106, %v2114
    %v2119 = vadd.f32 %v2117, 1e-05
    %v2120 = vrsqrt.pop %v2119
    %v2121 = vmul.f32 %v2118, %v2120
    %v2122 = vmul.f32 %v2121, %v156
    %v2123 = vadd.f32 %v2122, %v163
    %s2124 = scalar_lea.vmem [#allocation3], 24
    %2125 = vst.msk [vmem:[%s2124] sm:$0xff] %vm537, %v2123
    %s2126 = scalar_lea.vmem %s0, 32
    %v2127 = vld [vmem:[%s2126] sm:$0xff]
    %s2128 = scalar_lea.vmem [#allocation2], 32
    %v2129 = vld [vmem:[%s2128] sm:$0xff]
    %v2130 = vsub.f32 %v2127, %v2129
    %v2131 = vadd.f32 %v1775, %v2130
    %v2133 = vsel %vm182, %v2131, 0
    %2135 = vmatprep.subr.mxu0 0.0
    %2136 = vmatpush1.msra.mxu0 0.0
    %2137 = vmatprep.subr.mxu0 0.0
    %2138 = vmatpush1.msra.mxu0 0.0
    %2139 = vmatprep.subr.mxu0 0.0
    %2140 = vmatpush1.msra.mxu0 0.0
    %2141 = vmatprep.subr.mxu0 0.0
    %2142 = vmatpush1.msra.mxu0 0.0
    %2143 = vmatprep.subr.mxu0 0.0
    %2144 = vmatpush1.msra.mxu0 0.0
    %2145 = vmatprep.subr.mxu0 0.0
    %2146 = vmatpush1.msra.mxu0 0.0
    %2147 = vmatprep.subr.mxu0 0.0
    %2148 = vmatpush1.msra.mxu0 0.0
    %2149 = vmatprep.subr.mxu0 0.0
    %2150 = vmatpush1.msra.mxu0 0.0
    %2151 = vmatprep.subr.mxu0 0.0
    %2152 = vmatpush1.msra.mxu0 0.0
    %2153 = vmatprep.subr.mxu0 0.0
    %2154 = vmatpush1.msra.mxu0 0.0
    %2155 = vmatprep.subr.mxu0 0.0
    %2156 = vmatpush1.msra.mxu0 0.0
    %2157 = vmatprep.subr.mxu0 0.0
    %2158 = vmatpush1.msra.mxu0 0.0
    %2159 = vmatprep.subr.mxu0 0.0
    %2160 = vmatpush1.msra.mxu0 0.0
    %2161 = vmatprep.subr.mxu0 0.0
    %2162 = vmatpush1.msra.mxu0 0.0
    %2163 = vmatprep.subr.mxu0 0.0
    %2164 = vmatpush1.msra.mxu0 %v87
    %2165 = vmatprep.subr.mxu0 0.0
    %2166 = vmatpush1.msra.mxu0 %v86
    %2167 = vmatprep.subr.mxu0 0.0
    %2168 = vmatpush2.msra.mxu0 0.0
    %2169 = vmatprep.subr.mxu0 0.0
    %2170 = vmatpush2.msra.mxu0 0.0
    %2171 = vmatprep.subr.mxu0 0.0
    %2172 = vmatpush2.msra.mxu0 0.0
    %2173 = vmatprep.subr.mxu0 0.0
    %2174 = vmatpush2.msra.mxu0 0.0
    %2175 = vmatprep.subr.mxu0 0.0
    %2176 = vmatpush2.msra.mxu0 0.0
    %2177 = vmatprep.subr.mxu0 0.0
    %2178 = vmatpush2.msra.mxu0 0.0
    %2179 = vmatprep.subr.mxu0 0.0
    %2180 = vmatpush2.msra.mxu0 0.0
    %2181 = vmatprep.subr.mxu0 0.0
    %2182 = vmatpush2.msra.mxu0 0.0
    %2183 = vmatprep.subr.mxu0 0.0
    %2184 = vmatpush2.msra.mxu0 0.0
    %2185 = vmatprep.subr.mxu0 0.0
    %2186 = vmatpush2.msra.mxu0 0.0
    %2187 = vmatprep.subr.mxu0 0.0
    %2188 = vmatpush2.msra.mxu0 0.0
    %2189 = vmatprep.subr.mxu0 0.0
    %2190 = vmatpush2.msra.mxu0 0.0
    %2191 = vmatprep.subr.mxu0 0.0
    %2192 = vmatpush2.msra.mxu0 0.0
    %2193 = vmatprep.subr.mxu0 0.0
    %2194 = vmatpush2.msra.mxu0 0.0
    %2195 = vmatprep.subr.mxu0 0.0
    %2196 = vmatpush2.msra.mxu0 0.0
    %2197 = vmatprep.subr.mxu0 0.0
    %2198 = vmatpush2.msra.mxu0 0.0
    %2199 = vmatprep.mubr.f32.mxu0 0.0
    %2200 = vmatmul.mubr.f32.gmra.mxu0 %v2133
    %v2201 = vpop.f32.mrf.mxu0
    %v2202 = vadd.f32 %v107, %v2201
    %v2203 = vpop.f32.mrf.mxu0
    %2204 = vdwg.mxu0
    %v2205 = vxor.u32 %v2202, 2147483648
    %v2206 = vmul.f32 %v2205, 1.442695
    %v2207 = vpow.pop %v2206
    %v2208 = vadd.f32 %v2207, 1.0
    %v2209 = vrcp.pop %v2208
    %v2210 = vmul.f32 1.0, %v2209
    %v2211 = vmul.f32 %v2131, %v2210
    %v2212 = vsub.f32 1.0, %v2210
    %v2213 = vmul.f32 %v2131, %v2212
    %v2214 = vadd.f32 %v2129, %v2211
    %v2216 = vsel %vm182, %v2214, 0
    %2218 = vmatprep.subr.mxu0 0.0
    %2219 = vmatpush1.msra.mxu0 0.0
    %2220 = vmatprep.subr.mxu0 0.0
    %2221 = vmatpush1.msra.mxu0 0.0
    %2222 = vmatprep.subr.mxu0 0.0
    %2223 = vmatpush1.msra.mxu0 0.0
    %2224 = vmatprep.subr.mxu0 0.0
    %2225 = vmatpush1.msra.mxu0 0.0
    %2226 = vmatprep.subr.mxu0 0.0
    %2227 = vmatpush1.msra.mxu0 0.0
    %2228 = vmatprep.subr.mxu0 0.0
    %2229 = vmatpush1.msra.mxu0 0.0
    %2230 = vmatprep.subr.mxu0 0.0
    %2231 = vmatpush1.msra.mxu0 0.0
    %2232 = vmatprep.subr.mxu0 0.0
    %2233 = vmatpush1.msra.mxu0 0.0
    %2234 = vmatprep.subr.mxu0 0.0
    %2235 = vmatpush1.msra.mxu0 0.0
    %2236 = vmatprep.subr.mxu0 0.0
    %2237 = vmatpush1.msra.mxu0 0.0
    %2238 = vmatprep.subr.mxu0 0.0
    %2239 = vmatpush1.msra.mxu0 0.0
    %2240 = vmatprep.subr.mxu0 0.0
    %2241 = vmatpush1.msra.mxu0 0.0
    %2242 = vmatprep.subr.mxu0 0.0
    %2243 = vmatpush1.msra.mxu0 0.0
    %2244 = vmatprep.subr.mxu0 0.0
    %2245 = vmatpush1.msra.mxu0 0.0
    %2246 = vmatprep.subr.mxu0 0.0
    %2247 = vmatpush1.msra.mxu0 %v89
    %2248 = vmatprep.subr.mxu0 0.0
    %2249 = vmatpush1.msra.mxu0 %v88
    %2250 = vmatprep.subr.mxu0 0.0
    %2251 = vmatpush2.msra.mxu0 0.0
    %2252 = vmatprep.subr.mxu0 0.0
    %2253 = vmatpush2.msra.mxu0 0.0
    %2254 = vmatprep.subr.mxu0 0.0
    %2255 = vmatpush2.msra.mxu0 0.0
    %2256 = vmatprep.subr.mxu0 0.0
    %2257 = vmatpush2.msra.mxu0 0.0
    %2258 = vmatprep.subr.mxu0 0.0
    %2259 = vmatpush2.msra.mxu0 0.0
    %2260 = vmatprep.subr.mxu0 0.0
    %2261 = vmatpush2.msra.mxu0 0.0
    %2262 = vmatprep.subr.mxu0 0.0
    %2263 = vmatpush2.msra.mxu0 0.0
    %2264 = vmatprep.subr.mxu0 0.0
    %2265 = vmatpush2.msra.mxu0 0.0
    %2266 = vmatprep.subr.mxu0 0.0
    %2267 = vmatpush2.msra.mxu0 0.0
    %2268 = vmatprep.subr.mxu0 0.0
    %2269 = vmatpush2.msra.mxu0 0.0
    %2270 = vmatprep.subr.mxu0 0.0
    %2271 = vmatpush2.msra.mxu0 0.0
    %2272 = vmatprep.subr.mxu0 0.0
    %2273 = vmatpush2.msra.mxu0 0.0
    %2274 = vmatprep.subr.mxu0 0.0
    %2275 = vmatpush2.msra.mxu0 0.0
    %2276 = vmatprep.subr.mxu0 0.0
    %2277 = vmatpush2.msra.mxu0 0.0
    %2278 = vmatprep.subr.mxu0 0.0
    %2279 = vmatpush2.msra.mxu0 0.0
    %2280 = vmatprep.subr.mxu0 0.0
    %2281 = vmatpush2.msra.mxu0 0.0
    %2282 = vmatprep.mubr.f32.mxu0 0.0
    %2283 = vmatmul.mubr.f32.gmra.mxu0 %v2216
    %v2284 = vpop.f32.mrf.mxu0
    %v2285 = vadd.f32 %v114, %v2284
    %v2286 = vpop.f32.mrf.mxu0
    %2287 = vdwg.mxu0
    %v2288 = vmax.f32 %v2285, 0.0
    %v2289 = vsel %vm537, %v2288, 0.0
    %2290 = vadd.xlane.f32.xlu0 %v2289
    %v2291 = vpop.xlane.xlu0 %2290
    %v2292 = vmul.f32 %v2288, %v2288
    %v2293 = vsel %vm537, %v2292, 0.0
    %2294 = vadd.xlane.f32.xlu0 %v2293
    %v2295 = vpop.xlane.xlu0 %2294
    %v2296 = vmul.f32 %v2291, 0.03125
    %v2297 = vmul.f32 %v2295, 0.03125
    %v2298 = vmul.f32 %v2296, %v2296
    %v2299 = vsub.f32 %v2297, %v2298
    %v2300 = vsub.f32 %v2288, %v2296
    %v2301 = vadd.f32 %v2299, 1e-05
    %v2302 = vrsqrt.pop %v2301
    %v2303 = vmul.f32 %v2300, %v2302
    %v2304 = vmul.f32 %v2303, %v121
    %v2305 = vadd.f32 %v2304, %v128
    %v2307 = vsel %vm537, %v2305, 0
    %2309 = vmatprep.subr.mxu0 0.0
    %2310 = vmatpush1.msra.mxu0 0.0
    %2311 = vmatprep.subr.mxu0 0.0
    %2312 = vmatpush1.msra.mxu0 0.0
    %2313 = vmatprep.subr.mxu0 0.0
    %2314 = vmatpush1.msra.mxu0 0.0
    %2315 = vmatprep.subr.mxu0 0.0
    %2316 = vmatpush1.msra.mxu0 0.0
    %2317 = vmatprep.subr.mxu0 0.0
    %2318 = vmatpush1.msra.mxu0 0.0
    %2319 = vmatprep.subr.mxu0 0.0
    %2320 = vmatpush1.msra.mxu0 0.0
    %2321 = vmatprep.subr.mxu0 0.0
    %2322 = vmatpush1.msra.mxu0 0.0
    %2323 = vmatprep.subr.mxu0 0.0
    %2324 = vmatpush1.msra.mxu0 0.0
    %2325 = vmatprep.subr.mxu0 0.0
    %2326 = vmatpush1.msra.mxu0 0.0
    %2327 = vmatprep.subr.mxu0 0.0
    %2328 = vmatpush1.msra.mxu0 0.0
    %2329 = vmatprep.subr.mxu0 0.0
    %2330 = vmatpush1.msra.mxu0 0.0
    %2331 = vmatprep.subr.mxu0 0.0
    %2332 = vmatpush1.msra.mxu0 0.0
    %2333 = vmatprep.subr.mxu0 0.0
    %2334 = vmatpush1.msra.mxu0 %v93
    %2335 = vmatprep.subr.mxu0 0.0
    %2336 = vmatpush1.msra.mxu0 %v92
    %2337 = vmatprep.subr.mxu0 0.0
    %2338 = vmatpush1.msra.mxu0 %v91
    %2339 = vmatprep.subr.mxu0 0.0
    %2340 = vmatpush1.msra.mxu0 %v90
    %2341 = vmatprep.subr.mxu0 0.0
    %2342 = vmatpush2.msra.mxu0 0.0
    %2343 = vmatprep.subr.mxu0 0.0
    %2344 = vmatpush2.msra.mxu0 0.0
    %2345 = vmatprep.subr.mxu0 0.0
    %2346 = vmatpush2.msra.mxu0 0.0
    %2347 = vmatprep.subr.mxu0 0.0
    %2348 = vmatpush2.msra.mxu0 0.0
    %2349 = vmatprep.subr.mxu0 0.0
    %2350 = vmatpush2.msra.mxu0 0.0
    %2351 = vmatprep.subr.mxu0 0.0
    %2352 = vmatpush2.msra.mxu0 0.0
    %2353 = vmatprep.subr.mxu0 0.0
    %2354 = vmatpush2.msra.mxu0 0.0
    %2355 = vmatprep.subr.mxu0 0.0
    %2356 = vmatpush2.msra.mxu0 0.0
    %2357 = vmatprep.subr.mxu0 0.0
    %2358 = vmatpush2.msra.mxu0 0.0
    %2359 = vmatprep.subr.mxu0 0.0
    %2360 = vmatpush2.msra.mxu0 0.0
    %2361 = vmatprep.subr.mxu0 0.0
    %2362 = vmatpush2.msra.mxu0 0.0
    %2363 = vmatprep.subr.mxu0 0.0
    %2364 = vmatpush2.msra.mxu0 0.0
    %2365 = vmatprep.subr.mxu0 0.0
    %2366 = vmatpush2.msra.mxu0 0.0
    %2367 = vmatprep.subr.mxu0 0.0
    %2368 = vmatpush2.msra.mxu0 0.0
    %2369 = vmatprep.subr.mxu0 0.0
    %2370 = vmatpush2.msra.mxu0 0.0
    %2371 = vmatprep.subr.mxu0 0.0
    %2372 = vmatpush2.msra.mxu0 0.0
    %2373 = vmatprep.mubr.f32.mxu0 0.0
    %2374 = vmatmul.mubr.f32.gmra.mxu0 %v2307
    %v2375 = vpop.f32.mrf.mxu0
    %v2376 = vadd.f32 %v135, %v2375
    %v2377 = vpop.f32.mrf.mxu0
    %2378 = vdwg.mxu0
    %v2379 = vxor.u32 %v2376, 2147483648
    %v2380 = vmul.f32 %v2379, 1.442695
    %v2381 = vpow.pop %v2380
    %v2382 = vadd.f32 %v2381, 1.0
    %v2383 = vrcp.pop %v2382
    %v2384 = vmul.f32 1.0, %v2383
    %v2385 = vmul.f32 %v2305, %v2384
    %v2386 = vsub.f32 %v2305, %v2385
    %v2387 = vadd.f32 %v2031, %v2386
    %v2389 = vsel %vm537, %v2387, 0
    %2391 = vmatprep.subr.mxu0 0.0
    %2392 = vmatpush1.msra.mxu0 0.0
    %2393 = vmatprep.subr.mxu0 0.0
    %2394 = vmatpush1.msra.mxu0 0.0
    %2395 = vmatprep.subr.mxu0 0.0
    %2396 = vmatpush1.msra.mxu0 0.0
    %2397 = vmatprep.subr.mxu0 0.0
    %2398 = vmatpush1.msra.mxu0 0.0
    %2399 = vmatprep.subr.mxu0 0.0
    %2400 = vmatpush1.msra.mxu0 0.0
    %2401 = vmatprep.subr.mxu0 0.0
    %2402 = vmatpush1.msra.mxu0 0.0
    %2403 = vmatprep.subr.mxu0 0.0
    %2404 = vmatpush1.msra.mxu0 0.0
    %2405 = vmatprep.subr.mxu0 0.0
    %2406 = vmatpush1.msra.mxu0 0.0
    %2407 = vmatprep.subr.mxu0 0.0
    %2408 = vmatpush1.msra.mxu0 0.0
    %2409 = vmatprep.subr.mxu0 0.0
    %2410 = vmatpush1.msra.mxu0 0.0
    %2411 = vmatprep.subr.mxu0 0.0
    %2412 = vmatpush1.msra.mxu0 0.0
    %2413 = vmatprep.subr.mxu0 0.0
    %2414 = vmatpush1.msra.mxu0 0.0
    %2415 = vmatprep.subr.mxu0 0.0
    %2416 = vmatpush1.msra.mxu0 %v97
    %2417 = vmatprep.subr.mxu0 0.0
    %2418 = vmatpush1.msra.mxu0 %v96
    %2419 = vmatprep.subr.mxu0 0.0
    %2420 = vmatpush1.msra.mxu0 %v95
    %2421 = vmatprep.subr.mxu0 0.0
    %2422 = vmatpush1.msra.mxu0 %v94
    %2423 = vmatprep.subr.mxu0 0.0
    %2424 = vmatpush2.msra.mxu0 0.0
    %2425 = vmatprep.subr.mxu0 0.0
    %2426 = vmatpush2.msra.mxu0 0.0
    %2427 = vmatprep.subr.mxu0 0.0
    %2428 = vmatpush2.msra.mxu0 0.0
    %2429 = vmatprep.subr.mxu0 0.0
    %2430 = vmatpush2.msra.mxu0 0.0
    %2431 = vmatprep.subr.mxu0 0.0
    %2432 = vmatpush2.msra.mxu0 0.0
    %2433 = vmatprep.subr.mxu0 0.0
    %2434 = vmatpush2.msra.mxu0 0.0
    %2435 = vmatprep.subr.mxu0 0.0
    %2436 = vmatpush2.msra.mxu0 0.0
    %2437 = vmatprep.subr.mxu0 0.0
    %2438 = vmatpush2.msra.mxu0 0.0
    %2439 = vmatprep.subr.mxu0 0.0
    %2440 = vmatpush2.msra.mxu0 0.0
    %2441 = vmatprep.subr.mxu0 0.0
    %2442 = vmatpush2.msra.mxu0 0.0
    %2443 = vmatprep.subr.mxu0 0.0
    %2444 = vmatpush2.msra.mxu0 0.0
    %2445 = vmatprep.subr.mxu0 0.0
    %2446 = vmatpush2.msra.mxu0 0.0
    %2447 = vmatprep.subr.mxu0 0.0
    %2448 = vmatpush2.msra.mxu0 0.0
    %2449 = vmatprep.subr.mxu0 0.0
    %2450 = vmatpush2.msra.mxu0 0.0
    %2451 = vmatprep.subr.mxu0 0.0
    %2452 = vmatpush2.msra.mxu0 0.0
    %2453 = vmatprep.subr.mxu0 0.0
    %2454 = vmatpush2.msra.mxu0 0.0
    %2455 = vmatprep.mubr.f32.mxu0 0.0
    %2456 = vmatmul.mubr.f32.gmra.mxu0 %v2389
    %v2457 = vpop.f32.mrf.mxu0
    %v2458 = vadd.f32 %v142, %v2457
    %v2459 = vpop.f32.mrf.mxu0
    %2460 = vdwg.mxu0
    %v2461 = vxor.u32 %v2458, 2147483648
    %v2462 = vmul.f32 %v2461, 1.442695
    %v2463 = vpow.pop %v2462
    %v2464 = vadd.f32 %v2463, 1.0
    %v2465 = vrcp.pop %v2464
    %v2466 = vmul.f32 1.0, %v2465
    %v2467 = vmul.f32 %v2387, %v2466
    %v2468 = vsub.f32 1.0, %v2466
    %v2469 = vmul.f32 %v2387, %v2468
    %v2470 = vadd.f32 %v2385, %v2467
    %v2472 = vsel %vm537, %v2470, 0
    %2474 = vmatprep.subr.mxu0 0.0
    %2475 = vmatpush1.msra.mxu0 0.0
    %2476 = vmatprep.subr.mxu0 0.0
    %2477 = vmatpush1.msra.mxu0 0.0
    %2478 = vmatprep.subr.mxu0 0.0
    %2479 = vmatpush1.msra.mxu0 0.0
    %2480 = vmatprep.subr.mxu0 0.0
    %2481 = vmatpush1.msra.mxu0 0.0
    %2482 = vmatprep.subr.mxu0 0.0
    %2483 = vmatpush1.msra.mxu0 0.0
    %2484 = vmatprep.subr.mxu0 0.0
    %2485 = vmatpush1.msra.mxu0 0.0
    %2486 = vmatprep.subr.mxu0 0.0
    %2487 = vmatpush1.msra.mxu0 0.0
    %2488 = vmatprep.subr.mxu0 0.0
    %2489 = vmatpush1.msra.mxu0 0.0
    %2490 = vmatprep.subr.mxu0 0.0
    %2491 = vmatpush1.msra.mxu0 0.0
    %2492 = vmatprep.subr.mxu0 0.0
    %2493 = vmatpush1.msra.mxu0 0.0
    %2494 = vmatprep.subr.mxu0 0.0
    %2495 = vmatpush1.msra.mxu0 0.0
    %2496 = vmatprep.subr.mxu0 0.0
    %2497 = vmatpush1.msra.mxu0 0.0
    %2498 = vmatprep.subr.mxu0 0.0
    %2499 = vmatpush1.msra.mxu0 %v101
    %2500 = vmatprep.subr.mxu0 0.0
    %2501 = vmatpush1.msra.mxu0 %v100
    %2502 = vmatprep.subr.mxu0 0.0
    %2503 = vmatpush1.msra.mxu0 %v99
    %2504 = vmatprep.subr.mxu0 0.0
    %2505 = vmatpush1.msra.mxu0 %v98
    %2506 = vmatprep.subr.mxu0 0.0
    %2507 = vmatpush2.msra.mxu0 0.0
    %2508 = vmatprep.subr.mxu0 0.0
    %2509 = vmatpush2.msra.mxu0 0.0
    %2510 = vmatprep.subr.mxu0 0.0
    %2511 = vmatpush2.msra.mxu0 0.0
    %2512 = vmatprep.subr.mxu0 0.0
    %2513 = vmatpush2.msra.mxu0 0.0
    %2514 = vmatprep.subr.mxu0 0.0
    %2515 = vmatpush2.msra.mxu0 0.0
    %2516 = vmatprep.subr.mxu0 0.0
    %2517 = vmatpush2.msra.mxu0 0.0
    %2518 = vmatprep.subr.mxu0 0.0
    %2519 = vmatpush2.msra.mxu0 0.0
    %2520 = vmatprep.subr.mxu0 0.0
    %2521 = vmatpush2.msra.mxu0 0.0
    %2522 = vmatprep.subr.mxu0 0.0
    %2523 = vmatpush2.msra.mxu0 0.0
    %2524 = vmatprep.subr.mxu0 0.0
    %2525 = vmatpush2.msra.mxu0 0.0
    %2526 = vmatprep.subr.mxu0 0.0
    %2527 = vmatpush2.msra.mxu0 0.0
    %2528 = vmatprep.subr.mxu0 0.0
    %2529 = vmatpush2.msra.mxu0 0.0
    %2530 = vmatprep.subr.mxu0 0.0
    %2531 = vmatpush2.msra.mxu0 0.0
    %2532 = vmatprep.subr.mxu0 0.0
    %2533 = vmatpush2.msra.mxu0 0.0
    %2534 = vmatprep.subr.mxu0 0.0
    %2535 = vmatpush2.msra.mxu0 0.0
    %2536 = vmatprep.subr.mxu0 0.0
    %2537 = vmatpush2.msra.mxu0 0.0
    %2538 = vmatprep.mubr.f32.mxu0 0.0
    %2539 = vmatmul.mubr.f32.gmra.mxu0 %v2472
    %v2540 = vpop.f32.mrf.mxu0
    %v2541 = vadd.f32 %v149, %v2540
    %v2542 = vpop.f32.mrf.mxu0
    %2543 = vdwg.mxu0
    %v2544 = vmax.f32 %v2541, 0.0
    %v2545 = vsel %vm537, %v2544, 0.0
    %2546 = vadd.xlane.f32.xlu0 %v2545
    %v2547 = vpop.xlane.xlu0 %2546
    %v2548 = vmul.f32 %v2544, %v2544
    %v2549 = vsel %vm537, %v2548, 0.0
    %2550 = vadd.xlane.f32.xlu0 %v2549
    %v2551 = vpop.xlane.xlu0 %2550
    %v2552 = vmul.f32 %v2547, 0.03125
    %v2553 = vmul.f32 %v2551, 0.03125
    %v2554 = vmul.f32 %v2552, %v2552
    %v2555 = vsub.f32 %v2553, %v2554
    %v2556 = vsub.f32 %v2544, %v2552
    %v2557 = vadd.f32 %v2555, 1e-05
    %v2558 = vrsqrt.pop %v2557
    %v2559 = vmul.f32 %v2556, %v2558
    %v2560 = vmul.f32 %v2559, %v156
    %v2561 = vadd.f32 %v2560, %v163
    %s2562 = scalar_lea.vmem [#allocation3], 32
    %2563 = vst.msk [vmem:[%s2562] sm:$0xff] %vm537, %v2561
    %s2564 = scalar_lea.vmem %s0, 40
    %v2565 = vld [vmem:[%s2564] sm:$0xff]
    %s2566 = scalar_lea.vmem [#allocation2], 40
    %v2567 = vld [vmem:[%s2566] sm:$0xff]
    %v2568 = vsub.f32 %v2565, %v2567
    %v2569 = vadd.f32 %v2213, %v2568
    %v2571 = vsel %vm182, %v2569, 0
    %2573 = vmatprep.subr.mxu0 0.0
    %2574 = vmatpush1.msra.mxu0 0.0
    %2575 = vmatprep.subr.mxu0 0.0
    %2576 = vmatpush1.msra.mxu0 0.0
    %2577 = vmatprep.subr.mxu0 0.0
    %2578 = vmatpush1.msra.mxu0 0.0
    %2579 = vmatprep.subr.mxu0 0.0
    %2580 = vmatpush1.msra.mxu0 0.0
    %2581 = vmatprep.subr.mxu0 0.0
    %2582 = vmatpush1.msra.mxu0 0.0
    %2583 = vmatprep.subr.mxu0 0.0
    %2584 = vmatpush1.msra.mxu0 0.0
    %2585 = vmatprep.subr.mxu0 0.0
    %2586 = vmatpush1.msra.mxu0 0.0
    %2587 = vmatprep.subr.mxu0 0.0
    %2588 = vmatpush1.msra.mxu0 0.0
    %2589 = vmatprep.subr.mxu0 0.0
    %2590 = vmatpush1.msra.mxu0 0.0
    %2591 = vmatprep.subr.mxu0 0.0
    %2592 = vmatpush1.msra.mxu0 0.0
    %2593 = vmatprep.subr.mxu0 0.0
    %2594 = vmatpush1.msra.mxu0 0.0
    %2595 = vmatprep.subr.mxu0 0.0
    %2596 = vmatpush1.msra.mxu0 0.0
    %2597 = vmatprep.subr.mxu0 0.0
    %2598 = vmatpush1.msra.mxu0 0.0
    %2599 = vmatprep.subr.mxu0 0.0
    %2600 = vmatpush1.msra.mxu0 0.0
    %2601 = vmatprep.subr.mxu0 0.0
    %2602 = vmatpush1.msra.mxu0 %v87
    %2603 = vmatprep.subr.mxu0 0.0
    %2604 = vmatpush1.msra.mxu0 %v86
    %2605 = vmatprep.subr.mxu0 0.0
    %2606 = vmatpush2.msra.mxu0 0.0
    %2607 = vmatprep.subr.mxu0 0.0
    %2608 = vmatpush2.msra.mxu0 0.0
    %2609 = vmatprep.subr.mxu0 0.0
    %2610 = vmatpush2.msra.mxu0 0.0
    %2611 = vmatprep.subr.mxu0 0.0
    %2612 = vmatpush2.msra.mxu0 0.0
    %2613 = vmatprep.subr.mxu0 0.0
    %2614 = vmatpush2.msra.mxu0 0.0
    %2615 = vmatprep.subr.mxu0 0.0
    %2616 = vmatpush2.msra.mxu0 0.0
    %2617 = vmatprep.subr.mxu0 0.0
    %2618 = vmatpush2.msra.mxu0 0.0
    %2619 = vmatprep.subr.mxu0 0.0
    %2620 = vmatpush2.msra.mxu0 0.0
    %2621 = vmatprep.subr.mxu0 0.0
    %2622 = vmatpush2.msra.mxu0 0.0
    %2623 = vmatprep.subr.mxu0 0.0
    %2624 = vmatpush2.msra.mxu0 0.0
    %2625 = vmatprep.subr.mxu0 0.0
    %2626 = vmatpush2.msra.mxu0 0.0
    %2627 = vmatprep.subr.mxu0 0.0
    %2628 = vmatpush2.msra.mxu0 0.0
    %2629 = vmatprep.subr.mxu0 0.0
    %2630 = vmatpush2.msra.mxu0 0.0
    %2631 = vmatprep.subr.mxu0 0.0
    %2632 = vmatpush2.msra.mxu0 0.0
    %2633 = vmatprep.subr.mxu0 0.0
    %2634 = vmatpush2.msra.mxu0 0.0
    %2635 = vmatprep.subr.mxu0 0.0
    %2636 = vmatpush2.msra.mxu0 0.0
    %2637 = vmatprep.mubr.f32.mxu0 0.0
    %2638 = vmatmul.mubr.f32.gmra.mxu0 %v2571
    %v2639 = vpop.f32.mrf.mxu0
    %v2640 = vadd.f32 %v107, %v2639
    %v2641 = vpop.f32.mrf.mxu0
    %2642 = vdwg.mxu0
    %v2643 = vxor.u32 %v2640, 2147483648
    %v2644 = vmul.f32 %v2643, 1.442695
    %v2645 = vpow.pop %v2644
    %v2646 = vadd.f32 %v2645, 1.0
    %v2647 = vrcp.pop %v2646
    %v2648 = vmul.f32 1.0, %v2647
    %v2649 = vmul.f32 %v2569, %v2648
    %v2650 = vsub.f32 1.0, %v2648
    %v2651 = vmul.f32 %v2569, %v2650
    %v2652 = vadd.f32 %v2567, %v2649
    %v2654 = vsel %vm182, %v2652, 0
    %2656 = vmatprep.subr.mxu0 0.0
    %2657 = vmatpush1.msra.mxu0 0.0
    %2658 = vmatprep.subr.mxu0 0.0
    %2659 = vmatpush1.msra.mxu0 0.0
    %2660 = vmatprep.subr.mxu0 0.0
    %2661 = vmatpush1.msra.mxu0 0.0
    %2662 = vmatprep.subr.mxu0 0.0
    %2663 = vmatpush1.msra.mxu0 0.0
    %2664 = vmatprep.subr.mxu0 0.0
    %2665 = vmatpush1.msra.mxu0 0.0
    %2666 = vmatprep.subr.mxu0 0.0
    %2667 = vmatpush1.msra.mxu0 0.0
    %2668 = vmatprep.subr.mxu0 0.0
    %2669 = vmatpush1.msra.mxu0 0.0
    %2670 = vmatprep.subr.mxu0 0.0
    %2671 = vmatpush1.msra.mxu0 0.0
    %2672 = vmatprep.subr.mxu0 0.0
    %2673 = vmatpush1.msra.mxu0 0.0
    %2674 = vmatprep.subr.mxu0 0.0
    %2675 = vmatpush1.msra.mxu0 0.0
    %2676 = vmatprep.subr.mxu0 0.0
    %2677 = vmatpush1.msra.mxu0 0.0
    %2678 = vmatprep.subr.mxu0 0.0
    %2679 = vmatpush1.msra.mxu0 0.0
    %2680 = vmatprep.subr.mxu0 0.0
    %2681 = vmatpush1.msra.mxu0 0.0
    %2682 = vmatprep.subr.mxu0 0.0
    %2683 = vmatpush1.msra.mxu0 0.0
    %2684 = vmatprep.subr.mxu0 0.0
    %2685 = vmatpush1.msra.mxu0 %v89
    %2686 = vmatprep.subr.mxu0 0.0
    %2687 = vmatpush1.msra.mxu0 %v88
    %2688 = vmatprep.subr.mxu0 0.0
    %2689 = vmatpush2.msra.mxu0 0.0
    %2690 = vmatprep.subr.mxu0 0.0
    %2691 = vmatpush2.msra.mxu0 0.0
    %2692 = vmatprep.subr.mxu0 0.0
    %2693 = vmatpush2.msra.mxu0 0.0
    %2694 = vmatprep.subr.mxu0 0.0
    %2695 = vmatpush2.msra.mxu0 0.0
    %2696 = vmatprep.subr.mxu0 0.0
    %2697 = vmatpush2.msra.mxu0 0.0
    %2698 = vmatprep.subr.mxu0 0.0
    %2699 = vmatpush2.msra.mxu0 0.0
    %2700 = vmatprep.subr.mxu0 0.0
    %2701 = vmatpush2.msra.mxu0 0.0
    %2702 = vmatprep.subr.mxu0 0.0
    %2703 = vmatpush2.msra.mxu0 0.0
    %2704 = vmatprep.subr.mxu0 0.0
    %2705 = vmatpush2.msra.mxu0 0.0
    %2706 = vmatprep.subr.mxu0 0.0
    %2707 = vmatpush2.msra.mxu0 0.0
    %2708 = vmatprep.subr.mxu0 0.0
    %2709 = vmatpush2.msra.mxu0 0.0
    %2710 = vmatprep.subr.mxu0 0.0
    %2711 = vmatpush2.msra.mxu0 0.0
    %2712 = vmatprep.subr.mxu0 0.0
    %2713 = vmatpush2.msra.mxu0 0.0
    %2714 = vmatprep.subr.mxu0 0.0
    %2715 = vmatpush2.msra.mxu0 0.0
    %2716 = vmatprep.subr.mxu0 0.0
    %2717 = vmatpush2.msra.mxu0 0.0
    %2718 = vmatprep.subr.mxu0 0.0
    %2719 = vmatpush2.msra.mxu0 0.0
    %2720 = vmatprep.mubr.f32.mxu0 0.0
    %2721 = vmatmul.mubr.f32.gmra.mxu0 %v2654
    %v2722 = vpop.f32.mrf.mxu0
    %v2723 = vadd.f32 %v114, %v2722
    %v2724 = vpop.f32.mrf.mxu0
    %2725 = vdwg.mxu0
    %v2726 = vmax.f32 %v2723, 0.0
    %v2727 = vsel %vm537, %v2726, 0.0
    %2728 = vadd.xlane.f32.xlu0 %v2727
    %v2729 = vpop.xlane.xlu0 %2728
    %v2730 = vmul.f32 %v2726, %v2726
    %v2731 = vsel %vm537, %v2730, 0.0
    %2732 = vadd.xlane.f32.xlu0 %v2731
    %v2733 = vpop.xlane.xlu0 %2732
    %v2734 = vmul.f32 %v2729, 0.03125
    %v2735 = vmul.f32 %v2733, 0.03125
    %v2736 = vmul.f32 %v2734, %v2734
    %v2737 = vsub.f32 %v2735, %v2736
    %v2738 = vsub.f32 %v2726, %v2734
    %v2739 = vadd.f32 %v2737, 1e-05
    %v2740 = vrsqrt.pop %v2739
    %v2741 = vmul.f32 %v2738, %v2740
    %v2742 = vmul.f32 %v2741, %v121
    %v2743 = vadd.f32 %v2742, %v128
    %v2745 = vsel %vm537, %v2743, 0
    %2747 = vmatprep.subr.mxu0 0.0
    %2748 = vmatpush1.msra.mxu0 0.0
    %2749 = vmatprep.subr.mxu0 0.0
    %2750 = vmatpush1.msra.mxu0 0.0
    %2751 = vmatprep.subr.mxu0 0.0
    %2752 = vmatpush1.msra.mxu0 0.0
    %2753 = vmatprep.subr.mxu0 0.0
    %2754 = vmatpush1.msra.mxu0 0.0
    %2755 = vmatprep.subr.mxu0 0.0
    %2756 = vmatpush1.msra.mxu0 0.0
    %2757 = vmatprep.subr.mxu0 0.0
    %2758 = vmatpush1.msra.mxu0 0.0
    %2759 = vmatprep.subr.mxu0 0.0
    %2760 = vmatpush1.msra.mxu0 0.0
    %2761 = vmatprep.subr.mxu0 0.0
    %2762 = vmatpush1.msra.mxu0 0.0
    %2763 = vmatprep.subr.mxu0 0.0
    %2764 = vmatpush1.msra.mxu0 0.0
    %2765 = vmatprep.subr.mxu0 0.0
    %2766 = vmatpush1.msra.mxu0 0.0
    %2767 = vmatprep.subr.mxu0 0.0
    %2768 = vmatpush1.msra.mxu0 0.0
    %2769 = vmatprep.subr.mxu0 0.0
    %2770 = vmatpush1.msra.mxu0 0.0
    %2771 = vmatprep.subr.mxu0 0.0
    %2772 = vmatpush1.msra.mxu0 %v93
    %2773 = vmatprep.subr.mxu0 0.0
    %2774 = vmatpush1.msra.mxu0 %v92
    %2775 = vmatprep.subr.mxu0 0.0
    %2776 = vmatpush1.msra.mxu0 %v91
    %2777 = vmatprep.subr.mxu0 0.0
    %2778 = vmatpush1.msra.mxu0 %v90
    %2779 = vmatprep.subr.mxu0 0.0
    %2780 = vmatpush2.msra.mxu0 0.0
    %2781 = vmatprep.subr.mxu0 0.0
    %2782 = vmatpush2.msra.mxu0 0.0
    %2783 = vmatprep.subr.mxu0 0.0
    %2784 = vmatpush2.msra.mxu0 0.0
    %2785 = vmatprep.subr.mxu0 0.0
    %2786 = vmatpush2.msra.mxu0 0.0
    %2787 = vmatprep.subr.mxu0 0.0
    %2788 = vmatpush2.msra.mxu0 0.0
    %2789 = vmatprep.subr.mxu0 0.0
    %2790 = vmatpush2.msra.mxu0 0.0
    %2791 = vmatprep.subr.mxu0 0.0
    %2792 = vmatpush2.msra.mxu0 0.0
    %2793 = vmatprep.subr.mxu0 0.0
    %2794 = vmatpush2.msra.mxu0 0.0
    %2795 = vmatprep.subr.mxu0 0.0
    %2796 = vmatpush2.msra.mxu0 0.0
    %2797 = vmatprep.subr.mxu0 0.0
    %2798 = vmatpush2.msra.mxu0 0.0
    %2799 = vmatprep.subr.mxu0 0.0
    %2800 = vmatpush2.msra.mxu0 0.0
    %2801 = vmatprep.subr.mxu0 0.0
    %2802 = vmatpush2.msra.mxu0 0.0
    %2803 = vmatprep.subr.mxu0 0.0
    %2804 = vmatpush2.msra.mxu0 0.0
    %2805 = vmatprep.subr.mxu0 0.0
    %2806 = vmatpush2.msra.mxu0 0.0
    %2807 = vmatprep.subr.mxu0 0.0
    %2808 = vmatpush2.msra.mxu0 0.0
    %2809 = vmatprep.subr.mxu0 0.0
    %2810 = vmatpush2.msra.mxu0 0.0
    %2811 = vmatprep.mubr.f32.mxu0 0.0
    %2812 = vmatmul.mubr.f32.gmra.mxu0 %v2745
    %v2813 = vpop.f32.mrf.mxu0
    %v2814 = vadd.f32 %v135, %v2813
    %v2815 = vpop.f32.mrf.mxu0
    %2816 = vdwg.mxu0
    %v2817 = vxor.u32 %v2814, 2147483648
    %v2818 = vmul.f32 %v2817, 1.442695
    %v2819 = vpow.pop %v2818
    %v2820 = vadd.f32 %v2819, 1.0
    %v2821 = vrcp.pop %v2820
    %v2822 = vmul.f32 1.0, %v2821
    %v2823 = vmul.f32 %v2743, %v2822
    %v2824 = vsub.f32 %v2743, %v2823
    %v2825 = vadd.f32 %v2469, %v2824
    %v2827 = vsel %vm537, %v2825, 0
    %2829 = vmatprep.subr.mxu0 0.0
    %2830 = vmatpush1.msra.mxu0 0.0
    %2831 = vmatprep.subr.mxu0 0.0
    %2832 = vmatpush1.msra.mxu0 0.0
    %2833 = vmatprep.subr.mxu0 0.0
    %2834 = vmatpush1.msra.mxu0 0.0
    %2835 = vmatprep.subr.mxu0 0.0
    %2836 = vmatpush1.msra.mxu0 0.0
    %2837 = vmatprep.subr.mxu0 0.0
    %2838 = vmatpush1.msra.mxu0 0.0
    %2839 = vmatprep.subr.mxu0 0.0
    %2840 = vmatpush1.msra.mxu0 0.0
    %2841 = vmatprep.subr.mxu0 0.0
    %2842 = vmatpush1.msra.mxu0 0.0
    %2843 = vmatprep.subr.mxu0 0.0
    %2844 = vmatpush1.msra.mxu0 0.0
    %2845 = vmatprep.subr.mxu0 0.0
    %2846 = vmatpush1.msra.mxu0 0.0
    %2847 = vmatprep.subr.mxu0 0.0
    %2848 = vmatpush1.msra.mxu0 0.0
    %2849 = vmatprep.subr.mxu0 0.0
    %2850 = vmatpush1.msra.mxu0 0.0
    %2851 = vmatprep.subr.mxu0 0.0
    %2852 = vmatpush1.msra.mxu0 0.0
    %2853 = vmatprep.subr.mxu0 0.0
    %2854 = vmatpush1.msra.mxu0 %v97
    %2855 = vmatprep.subr.mxu0 0.0
    %2856 = vmatpush1.msra.mxu0 %v96
    %2857 = vmatprep.subr.mxu0 0.0
    %2858 = vmatpush1.msra.mxu0 %v95
    %2859 = vmatprep.subr.mxu0 0.0
    %2860 = vmatpush1.msra.mxu0 %v94
    %2861 = vmatprep.subr.mxu0 0.0
    %2862 = vmatpush2.msra.mxu0 0.0
    %2863 = vmatprep.subr.mxu0 0.0
    %2864 = vmatpush2.msra.mxu0 0.0
    %2865 = vmatprep.subr.mxu0 0.0
    %2866 = vmatpush2.msra.mxu0 0.0
    %2867 = vmatprep.subr.mxu0 0.0
    %2868 = vmatpush2.msra.mxu0 0.0
    %2869 = vmatprep.subr.mxu0 0.0
    %2870 = vmatpush2.msra.mxu0 0.0
    %2871 = vmatprep.subr.mxu0 0.0
    %2872 = vmatpush2.msra.mxu0 0.0
    %2873 = vmatprep.subr.mxu0 0.0
    %2874 = vmatpush2.msra.mxu0 0.0
    %2875 = vmatprep.subr.mxu0 0.0
    %2876 = vmatpush2.msra.mxu0 0.0
    %2877 = vmatprep.subr.mxu0 0.0
    %2878 = vmatpush2.msra.mxu0 0.0
    %2879 = vmatprep.subr.mxu0 0.0
    %2880 = vmatpush2.msra.mxu0 0.0
    %2881 = vmatprep.subr.mxu0 0.0
    %2882 = vmatpush2.msra.mxu0 0.0
    %2883 = vmatprep.subr.mxu0 0.0
    %2884 = vmatpush2.msra.mxu0 0.0
    %2885 = vmatprep.subr.mxu0 0.0
    %2886 = vmatpush2.msra.mxu0 0.0
    %2887 = vmatprep.subr.mxu0 0.0
    %2888 = vmatpush2.msra.mxu0 0.0
    %2889 = vmatprep.subr.mxu0 0.0
    %2890 = vmatpush2.msra.mxu0 0.0
    %2891 = vmatprep.subr.mxu0 0.0
    %2892 = vmatpush2.msra.mxu0 0.0
    %2893 = vmatprep.mubr.f32.mxu0 0.0
    %2894 = vmatmul.mubr.f32.gmra.mxu0 %v2827
    %v2895 = vpop.f32.mrf.mxu0
    %v2896 = vadd.f32 %v142, %v2895
    %v2897 = vpop.f32.mrf.mxu0
    %2898 = vdwg.mxu0
    %v2899 = vxor.u32 %v2896, 2147483648
    %v2900 = vmul.f32 %v2899, 1.442695
    %v2901 = vpow.pop %v2900
    %v2902 = vadd.f32 %v2901, 1.0
    %v2903 = vrcp.pop %v2902
    %v2904 = vmul.f32 1.0, %v2903
    %v2905 = vmul.f32 %v2825, %v2904
    %v2906 = vsub.f32 1.0, %v2904
    %v2907 = vmul.f32 %v2825, %v2906
    %v2908 = vadd.f32 %v2823, %v2905
    %v2910 = vsel %vm537, %v2908, 0
    %2912 = vmatprep.subr.mxu0 0.0
    %2913 = vmatpush1.msra.mxu0 0.0
    %2914 = vmatprep.subr.mxu0 0.0
    %2915 = vmatpush1.msra.mxu0 0.0
    %2916 = vmatprep.subr.mxu0 0.0
    %2917 = vmatpush1.msra.mxu0 0.0
    %2918 = vmatprep.subr.mxu0 0.0
    %2919 = vmatpush1.msra.mxu0 0.0
    %2920 = vmatprep.subr.mxu0 0.0
    %2921 = vmatpush1.msra.mxu0 0.0
    %2922 = vmatprep.subr.mxu0 0.0
    %2923 = vmatpush1.msra.mxu0 0.0
    %2924 = vmatprep.subr.mxu0 0.0
    %2925 = vmatpush1.msra.mxu0 0.0
    %2926 = vmatprep.subr.mxu0 0.0
    %2927 = vmatpush1.msra.mxu0 0.0
    %2928 = vmatprep.subr.mxu0 0.0
    %2929 = vmatpush1.msra.mxu0 0.0
    %2930 = vmatprep.subr.mxu0 0.0
    %2931 = vmatpush1.msra.mxu0 0.0
    %2932 = vmatprep.subr.mxu0 0.0
    %2933 = vmatpush1.msra.mxu0 0.0
    %2934 = vmatprep.subr.mxu0 0.0
    %2935 = vmatpush1.msra.mxu0 0.0
    %2936 = vmatprep.subr.mxu0 0.0
    %2937 = vmatpush1.msra.mxu0 %v101
    %2938 = vmatprep.subr.mxu0 0.0
    %2939 = vmatpush1.msra.mxu0 %v100
    %2940 = vmatprep.subr.mxu0 0.0
    %2941 = vmatpush1.msra.mxu0 %v99
    %2942 = vmatprep.subr.mxu0 0.0
    %2943 = vmatpush1.msra.mxu0 %v98
    %2944 = vmatprep.subr.mxu0 0.0
    %2945 = vmatpush2.msra.mxu0 0.0
    %2946 = vmatprep.subr.mxu0 0.0
    %2947 = vmatpush2.msra.mxu0 0.0
    %2948 = vmatprep.subr.mxu0 0.0
    %2949 = vmatpush2.msra.mxu0 0.0
    %2950 = vmatprep.subr.mxu0 0.0
    %2951 = vmatpush2.msra.mxu0 0.0
    %2952 = vmatprep.subr.mxu0 0.0
    %2953 = vmatpush2.msra.mxu0 0.0
    %2954 = vmatprep.subr.mxu0 0.0
    %2955 = vmatpush2.msra.mxu0 0.0
    %2956 = vmatprep.subr.mxu0 0.0
    %2957 = vmatpush2.msra.mxu0 0.0
    %2958 = vmatprep.subr.mxu0 0.0
    %2959 = vmatpush2.msra.mxu0 0.0
    %2960 = vmatprep.subr.mxu0 0.0
    %2961 = vmatpush2.msra.mxu0 0.0
    %2962 = vmatprep.subr.mxu0 0.0
    %2963 = vmatpush2.msra.mxu0 0.0
    %2964 = vmatprep.subr.mxu0 0.0
    %2965 = vmatpush2.msra.mxu0 0.0
    %2966 = vmatprep.subr.mxu0 0.0
    %2967 = vmatpush2.msra.mxu0 0.0
    %2968 = vmatprep.subr.mxu0 0.0
    %2969 = vmatpush2.msra.mxu0 0.0
    %2970 = vmatprep.subr.mxu0 0.0
    %2971 = vmatpush2.msra.mxu0 0.0
    %2972 = vmatprep.subr.mxu0 0.0
    %2973 = vmatpush2.msra.mxu0 0.0
    %2974 = vmatprep.subr.mxu0 0.0
    %2975 = vmatpush2.msra.mxu0 0.0
    %2976 = vmatprep.mubr.f32.mxu0 0.0
    %2977 = vmatmul.mubr.f32.gmra.mxu0 %v2910
    %v2978 = vpop.f32.mrf.mxu0
    %v2979 = vadd.f32 %v149, %v2978
    %v2980 = vpop.f32.mrf.mxu0
    %2981 = vdwg.mxu0
    %v2982 = vmax.f32 %v2979, 0.0
    %v2983 = vsel %vm537, %v2982, 0.0
    %2984 = vadd.xlane.f32.xlu0 %v2983
    %v2985 = vpop.xlane.xlu0 %2984
    %v2986 = vmul.f32 %v2982, %v2982
    %v2987 = vsel %vm537, %v2986, 0.0
    %2988 = vadd.xlane.f32.xlu0 %v2987
    %v2989 = vpop.xlane.xlu0 %2988
    %v2990 = vmul.f32 %v2985, 0.03125
    %v2991 = vmul.f32 %v2989, 0.03125
    %v2992 = vmul.f32 %v2990, %v2990
    %v2993 = vsub.f32 %v2991, %v2992
    %v2994 = vsub.f32 %v2982, %v2990
    %v2995 = vadd.f32 %v2993, 1e-05
    %v2996 = vrsqrt.pop %v2995
    %v2997 = vmul.f32 %v2994, %v2996
    %v2998 = vmul.f32 %v2997, %v156
    %v2999 = vadd.f32 %v2998, %v163
    %s3000 = scalar_lea.vmem [#allocation3], 40
    %3001 = vst.msk [vmem:[%s3000] sm:$0xff] %vm537, %v2999
    %s3002 = scalar_lea.vmem %s0, 48
    %v3003 = vld [vmem:[%s3002] sm:$0xff]
    %s3004 = scalar_lea.vmem [#allocation2], 48
    %v3005 = vld [vmem:[%s3004] sm:$0xff]
    %v3006 = vsub.f32 %v3003, %v3005
    %v3007 = vadd.f32 %v2651, %v3006
    %v3009 = vsel %vm182, %v3007, 0
    %3011 = vmatprep.subr.mxu0 0.0
    %3012 = vmatpush1.msra.mxu0 0.0
    %3013 = vmatprep.subr.mxu0 0.0
    %3014 = vmatpush1.msra.mxu0 0.0
    %3015 = vmatprep.subr.mxu0 0.0
    %3016 = vmatpush1.msra.mxu0 0.0
    %3017 = vmatprep.subr.mxu0 0.0
    %3018 = vmatpush1.msra.mxu0 0.0
    %3019 = vmatprep.subr.mxu0 0.0
    %3020 = vmatpush1.msra.mxu0 0.0
    %3021 = vmatprep.subr.mxu0 0.0
    %3022 = vmatpush1.msra.mxu0 0.0
    %3023 = vmatprep.subr.mxu0 0.0
    %3024 = vmatpush1.msra.mxu0 0.0
    %3025 = vmatprep.subr.mxu0 0.0
    %3026 = vmatpush1.msra.mxu0 0.0
    %3027 = vmatprep.subr.mxu0 0.0
    %3028 = vmatpush1.msra.mxu0 0.0
    %3029 = vmatprep.subr.mxu0 0.0
    %3030 = vmatpush1.msra.mxu0 0.0
    %3031 = vmatprep.subr.mxu0 0.0
    %3032 = vmatpush1.msra.mxu0 0.0
    %3033 = vmatprep.subr.mxu0 0.0
    %3034 = vmatpush1.msra.mxu0 0.0
    %3035 = vmatprep.subr.mxu0 0.0
    %3036 = vmatpush1.msra.mxu0 0.0
    %3037 = vmatprep.subr.mxu0 0.0
    %3038 = vmatpush1.msra.mxu0 0.0
    %3039 = vmatprep.subr.mxu0 0.0
    %3040 = vmatpush1.msra.mxu0 %v87
    %3041 = vmatprep.subr.mxu0 0.0
    %3042 = vmatpush1.msra.mxu0 %v86
    %3043 = vmatprep.subr.mxu0 0.0
    %3044 = vmatpush2.msra.mxu0 0.0
    %3045 = vmatprep.subr.mxu0 0.0
    %3046 = vmatpush2.msra.mxu0 0.0
    %3047 = vmatprep.subr.mxu0 0.0
    %3048 = vmatpush2.msra.mxu0 0.0
    %3049 = vmatprep.subr.mxu0 0.0
    %3050 = vmatpush2.msra.mxu0 0.0
    %3051 = vmatprep.subr.mxu0 0.0
    %3052 = vmatpush2.msra.mxu0 0.0
    %3053 = vmatprep.subr.mxu0 0.0
    %3054 = vmatpush2.msra.mxu0 0.0
    %3055 = vmatprep.subr.mxu0 0.0
    %3056 = vmatpush2.msra.mxu0 0.0
    %3057 = vmatprep.subr.mxu0 0.0
    %3058 = vmatpush2.msra.mxu0 0.0
    %3059 = vmatprep.subr.mxu0 0.0
    %3060 = vmatpush2.msra.mxu0 0.0
    %3061 = vmatprep.subr.mxu0 0.0
    %3062 = vmatpush2.msra.mxu0 0.0
    %3063 = vmatprep.subr.mxu0 0.0
    %3064 = vmatpush2.msra.mxu0 0.0
    %3065 = vmatprep.subr.mxu0 0.0
    %3066 = vmatpush2.msra.mxu0 0.0
    %3067 = vmatprep.subr.mxu0 0.0
    %3068 = vmatpush2.msra.mxu0 0.0
    %3069 = vmatprep.subr.mxu0 0.0
    %3070 = vmatpush2.msra.mxu0 0.0
    %3071 = vmatprep.subr.mxu0 0.0
    %3072 = vmatpush2.msra.mxu0 0.0
    %3073 = vmatprep.subr.mxu0 0.0
    %3074 = vmatpush2.msra.mxu0 0.0
    %3075 = vmatprep.mubr.f32.mxu0 0.0
    %3076 = vmatmul.mubr.f32.gmra.mxu0 %v3009
    %v3077 = vpop.f32.mrf.mxu0
    %v3078 = vadd.f32 %v107, %v3077
    %v3079 = vpop.f32.mrf.mxu0
    %3080 = vdwg.mxu0
    %v3081 = vxor.u32 %v3078, 2147483648
    %v3082 = vmul.f32 %v3081, 1.442695
    %v3083 = vpow.pop %v3082
    %v3084 = vadd.f32 %v3083, 1.0
    %v3085 = vrcp.pop %v3084
    %v3086 = vmul.f32 1.0, %v3085
    %v3087 = vmul.f32 %v3007, %v3086
    %v3088 = vsub.f32 1.0, %v3086
    %v3089 = vmul.f32 %v3007, %v3088
    %v3090 = vadd.f32 %v3005, %v3087
    %v3092 = vsel %vm182, %v3090, 0
    %3094 = vmatprep.subr.mxu0 0.0
    %3095 = vmatpush1.msra.mxu0 0.0
    %3096 = vmatprep.subr.mxu0 0.0
    %3097 = vmatpush1.msra.mxu0 0.0
    %3098 = vmatprep.subr.mxu0 0.0
    %3099 = vmatpush1.msra.mxu0 0.0
    %3100 = vmatprep.subr.mxu0 0.0
    %3101 = vmatpush1.msra.mxu0 0.0
    %3102 = vmatprep.subr.mxu0 0.0
    %3103 = vmatpush1.msra.mxu0 0.0
    %3104 = vmatprep.subr.mxu0 0.0
    %3105 = vmatpush1.msra.mxu0 0.0
    %3106 = vmatprep.subr.mxu0 0.0
    %3107 = vmatpush1.msra.mxu0 0.0
    %3108 = vmatprep.subr.mxu0 0.0
    %3109 = vmatpush1.msra.mxu0 0.0
    %3110 = vmatprep.subr.mxu0 0.0
    %3111 = vmatpush1.msra.mxu0 0.0
    %3112 = vmatprep.subr.mxu0 0.0
    %3113 = vmatpush1.msra.mxu0 0.0
    %3114 = vmatprep.subr.mxu0 0.0
    %3115 = vmatpush1.msra.mxu0 0.0
    %3116 = vmatprep.subr.mxu0 0.0
    %3117 = vmatpush1.msra.mxu0 0.0
    %3118 = vmatprep.subr.mxu0 0.0
    %3119 = vmatpush1.msra.mxu0 0.0
    %3120 = vmatprep.subr.mxu0 0.0
    %3121 = vmatpush1.msra.mxu0 0.0
    %3122 = vmatprep.subr.mxu0 0.0
    %3123 = vmatpush1.msra.mxu0 %v89
    %3124 = vmatprep.subr.mxu0 0.0
    %3125 = vmatpush1.msra.mxu0 %v88
    %3126 = vmatprep.subr.mxu0 0.0
    %3127 = vmatpush2.msra.mxu0 0.0
    %3128 = vmatprep.subr.mxu0 0.0
    %3129 = vmatpush2.msra.mxu0 0.0
    %3130 = vmatprep.subr.mxu0 0.0
    %3131 = vmatpush2.msra.mxu0 0.0
    %3132 = vmatprep.subr.mxu0 0.0
    %3133 = vmatpush2.msra.mxu0 0.0
    %3134 = vmatprep.subr.mxu0 0.0
    %3135 = vmatpush2.msra.mxu0 0.0
    %3136 = vmatprep.subr.mxu0 0.0
    %3137 = vmatpush2.msra.mxu0 0.0
    %3138 = vmatprep.subr.mxu0 0.0
    %3139 = vmatpush2.msra.mxu0 0.0
    %3140 = vmatprep.subr.mxu0 0.0
    %3141 = vmatpush2.msra.mxu0 0.0
    %3142 = vmatprep.subr.mxu0 0.0
    %3143 = vmatpush2.msra.mxu0 0.0
    %3144 = vmatprep.subr.mxu0 0.0
    %3145 = vmatpush2.msra.mxu0 0.0
    %3146 = vmatprep.subr.mxu0 0.0
    %3147 = vmatpush2.msra.mxu0 0.0
    %3148 = vmatprep.subr.mxu0 0.0
    %3149 = vmatpush2.msra.mxu0 0.0
    %3150 = vmatprep.subr.mxu0 0.0
    %3151 = vmatpush2.msra.mxu0 0.0
    %3152 = vmatprep.subr.mxu0 0.0
    %3153 = vmatpush2.msra.mxu0 0.0
    %3154 = vmatprep.subr.mxu0 0.0
    %3155 = vmatpush2.msra.mxu0 0.0
    %3156 = vmatprep.subr.mxu0 0.0
    %3157 = vmatpush2.msra.mxu0 0.0
    %3158 = vmatprep.mubr.f32.mxu0 0.0
    %3159 = vmatmul.mubr.f32.gmra.mxu0 %v3092
    %v3160 = vpop.f32.mrf.mxu0
    %v3161 = vadd.f32 %v114, %v3160
    %v3162 = vpop.f32.mrf.mxu0
    %3163 = vdwg.mxu0
    %v3164 = vmax.f32 %v3161, 0.0
    %v3165 = vsel %vm537, %v3164, 0.0
    %3166 = vadd.xlane.f32.xlu0 %v3165
    %v3167 = vpop.xlane.xlu0 %3166
    %v3168 = vmul.f32 %v3164, %v3164
    %v3169 = vsel %vm537, %v3168, 0.0
    %3170 = vadd.xlane.f32.xlu0 %v3169
    %v3171 = vpop.xlane.xlu0 %3170
    %v3172 = vmul.f32 %v3167, 0.03125
    %v3173 = vmul.f32 %v3171, 0.03125
    %v3174 = vmul.f32 %v3172, %v3172
    %v3175 = vsub.f32 %v3173, %v3174
    %v3176 = vsub.f32 %v3164, %v3172
    %v3177 = vadd.f32 %v3175, 1e-05
    %v3178 = vrsqrt.pop %v3177
    %v3179 = vmul.f32 %v3176, %v3178
    %v3180 = vmul.f32 %v3179, %v121
    %v3181 = vadd.f32 %v3180, %v128
    %v3183 = vsel %vm537, %v3181, 0
    %3185 = vmatprep.subr.mxu0 0.0
    %3186 = vmatpush1.msra.mxu0 0.0
    %3187 = vmatprep.subr.mxu0 0.0
    %3188 = vmatpush1.msra.mxu0 0.0
    %3189 = vmatprep.subr.mxu0 0.0
    %3190 = vmatpush1.msra.mxu0 0.0
    %3191 = vmatprep.subr.mxu0 0.0
    %3192 = vmatpush1.msra.mxu0 0.0
    %3193 = vmatprep.subr.mxu0 0.0
    %3194 = vmatpush1.msra.mxu0 0.0
    %3195 = vmatprep.subr.mxu0 0.0
    %3196 = vmatpush1.msra.mxu0 0.0
    %3197 = vmatprep.subr.mxu0 0.0
    %3198 = vmatpush1.msra.mxu0 0.0
    %3199 = vmatprep.subr.mxu0 0.0
    %3200 = vmatpush1.msra.mxu0 0.0
    %3201 = vmatprep.subr.mxu0 0.0
    %3202 = vmatpush1.msra.mxu0 0.0
    %3203 = vmatprep.subr.mxu0 0.0
    %3204 = vmatpush1.msra.mxu0 0.0
    %3205 = vmatprep.subr.mxu0 0.0
    %3206 = vmatpush1.msra.mxu0 0.0
    %3207 = vmatprep.subr.mxu0 0.0
    %3208 = vmatpush1.msra.mxu0 0.0
    %3209 = vmatprep.subr.mxu0 0.0
    %3210 = vmatpush1.msra.mxu0 %v93
    %3211 = vmatprep.subr.mxu0 0.0
    %3212 = vmatpush1.msra.mxu0 %v92
    %3213 = vmatprep.subr.mxu0 0.0
    %3214 = vmatpush1.msra.mxu0 %v91
    %3215 = vmatprep.subr.mxu0 0.0
    %3216 = vmatpush1.msra.mxu0 %v90
    %3217 = vmatprep.subr.mxu0 0.0
    %3218 = vmatpush2.msra.mxu0 0.0
    %3219 = vmatprep.subr.mxu0 0.0
    %3220 = vmatpush2.msra.mxu0 0.0
    %3221 = vmatprep.subr.mxu0 0.0
    %3222 = vmatpush2.msra.mxu0 0.0
    %3223 = vmatprep.subr.mxu0 0.0
    %3224 = vmatpush2.msra.mxu0 0.0
    %3225 = vmatprep.subr.mxu0 0.0
    %3226 = vmatpush2.msra.mxu0 0.0
    %3227 = vmatprep.subr.mxu0 0.0
    %3228 = vmatpush2.msra.mxu0 0.0
    %3229 = vmatprep.subr.mxu0 0.0
    %3230 = vmatpush2.msra.mxu0 0.0
    %3231 = vmatprep.subr.mxu0 0.0
    %3232 = vmatpush2.msra.mxu0 0.0
    %3233 = vmatprep.subr.mxu0 0.0
    %3234 = vmatpush2.msra.mxu0 0.0
    %3235 = vmatprep.subr.mxu0 0.0
    %3236 = vmatpush2.msra.mxu0 0.0
    %3237 = vmatprep.subr.mxu0 0.0
    %3238 = vmatpush2.msra.mxu0 0.0
    %3239 = vmatprep.subr.mxu0 0.0
    %3240 = vmatpush2.msra.mxu0 0.0
    %3241 = vmatprep.subr.mxu0 0.0
    %3242 = vmatpush2.msra.mxu0 0.0
    %3243 = vmatprep.subr.mxu0 0.0
    %3244 = vmatpush2.msra.mxu0 0.0
    %3245 = vmatprep.subr.mxu0 0.0
    %3246 = vmatpush2.msra.mxu0 0.0
    %3247 = vmatprep.subr.mxu0 0.0
    %3248 = vmatpush2.msra.mxu0 0.0
    %3249 = vmatprep.mubr.f32.mxu0 0.0
    %3250 = vmatmul.mubr.f32.gmra.mxu0 %v3183
    %v3251 = vpop.f32.mrf.mxu0
    %v3252 = vadd.f32 %v135, %v3251
    %v3253 = vpop.f32.mrf.mxu0
    %3254 = vdwg.mxu0
    %v3255 = vxor.u32 %v3252, 2147483648
    %v3256 = vmul.f32 %v3255, 1.442695
    %v3257 = vpow.pop %v3256
    %v3258 = vadd.f32 %v3257, 1.0
    %v3259 = vrcp.pop %v3258
    %v3260 = vmul.f32 1.0, %v3259
    %v3261 = vmul.f32 %v3181, %v3260
    %v3262 = vsub.f32 %v3181, %v3261
    %v3263 = vadd.f32 %v2907, %v3262
    %v3265 = vsel %vm537, %v3263, 0
    %3267 = vmatprep.subr.mxu0 0.0
    %3268 = vmatpush1.msra.mxu0 0.0
    %3269 = vmatprep.subr.mxu0 0.0
    %3270 = vmatpush1.msra.mxu0 0.0
    %3271 = vmatprep.subr.mxu0 0.0
    %3272 = vmatpush1.msra.mxu0 0.0
    %3273 = vmatprep.subr.mxu0 0.0
    %3274 = vmatpush1.msra.mxu0 0.0
    %3275 = vmatprep.subr.mxu0 0.0
    %3276 = vmatpush1.msra.mxu0 0.0
    %3277 = vmatprep.subr.mxu0 0.0
    %3278 = vmatpush1.msra.mxu0 0.0
    %3279 = vmatprep.subr.mxu0 0.0
    %3280 = vmatpush1.msra.mxu0 0.0
    %3281 = vmatprep.subr.mxu0 0.0
    %3282 = vmatpush1.msra.mxu0 0.0
    %3283 = vmatprep.subr.mxu0 0.0
    %3284 = vmatpush1.msra.mxu0 0.0
    %3285 = vmatprep.subr.mxu0 0.0
    %3286 = vmatpush1.msra.mxu0 0.0
    %3287 = vmatprep.subr.mxu0 0.0
    %3288 = vmatpush1.msra.mxu0 0.0
    %3289 = vmatprep.subr.mxu0 0.0
    %3290 = vmatpush1.msra.mxu0 0.0
    %3291 = vmatprep.subr.mxu0 0.0
    %3292 = vmatpush1.msra.mxu0 %v97
    %3293 = vmatprep.subr.mxu0 0.0
    %3294 = vmatpush1.msra.mxu0 %v96
    %3295 = vmatprep.subr.mxu0 0.0
    %3296 = vmatpush1.msra.mxu0 %v95
    %3297 = vmatprep.subr.mxu0 0.0
    %3298 = vmatpush1.msra.mxu0 %v94
    %3299 = vmatprep.subr.mxu0 0.0
    %3300 = vmatpush2.msra.mxu0 0.0
    %3301 = vmatprep.subr.mxu0 0.0
    %3302 = vmatpush2.msra.mxu0 0.0
    %3303 = vmatprep.subr.mxu0 0.0
    %3304 = vmatpush2.msra.mxu0 0.0
    %3305 = vmatprep.subr.mxu0 0.0
    %3306 = vmatpush2.msra.mxu0 0.0
    %3307 = vmatprep.subr.mxu0 0.0
    %3308 = vmatpush2.msra.mxu0 0.0
    %3309 = vmatprep.subr.mxu0 0.0
    %3310 = vmatpush2.msra.mxu0 0.0
    %3311 = vmatprep.subr.mxu0 0.0
    %3312 = vmatpush2.msra.mxu0 0.0
    %3313 = vmatprep.subr.mxu0 0.0
    %3314 = vmatpush2.msra.mxu0 0.0
    %3315 = vmatprep.subr.mxu0 0.0
    %3316 = vmatpush2.msra.mxu0 0.0
    %3317 = vmatprep.subr.mxu0 0.0
    %3318 = vmatpush2.msra.mxu0 0.0
    %3319 = vmatprep.subr.mxu0 0.0
    %3320 = vmatpush2.msra.mxu0 0.0
    %3321 = vmatprep.subr.mxu0 0.0
    %3322 = vmatpush2.msra.mxu0 0.0
    %3323 = vmatprep.subr.mxu0 0.0
    %3324 = vmatpush2.msra.mxu0 0.0
    %3325 = vmatprep.subr.mxu0 0.0
    %3326 = vmatpush2.msra.mxu0 0.0
    %3327 = vmatprep.subr.mxu0 0.0
    %3328 = vmatpush2.msra.mxu0 0.0
    %3329 = vmatprep.subr.mxu0 0.0
    %3330 = vmatpush2.msra.mxu0 0.0
    %3331 = vmatprep.mubr.f32.mxu0 0.0
    %3332 = vmatmul.mubr.f32.gmra.mxu0 %v3265
    %v3333 = vpop.f32.mrf.mxu0
    %v3334 = vadd.f32 %v142, %v3333
    %v3335 = vpop.f32.mrf.mxu0
    %3336 = vdwg.mxu0
    %v3337 = vxor.u32 %v3334, 2147483648
    %v3338 = vmul.f32 %v3337, 1.442695
    %v3339 = vpow.pop %v3338
    %v3340 = vadd.f32 %v3339, 1.0
    %v3341 = vrcp.pop %v3340
    %v3342 = vmul.f32 1.0, %v3341
    %v3343 = vmul.f32 %v3263, %v3342
    %v3344 = vsub.f32 1.0, %v3342
    %v3345 = vmul.f32 %v3263, %v3344
    %v3346 = vadd.f32 %v3261, %v3343
    %v3348 = vsel %vm537, %v3346, 0
    %3350 = vmatprep.subr.mxu0 0.0
    %3351 = vmatpush1.msra.mxu0 0.0
    %3352 = vmatprep.subr.mxu0 0.0
    %3353 = vmatpush1.msra.mxu0 0.0
    %3354 = vmatprep.subr.mxu0 0.0
    %3355 = vmatpush1.msra.mxu0 0.0
    %3356 = vmatprep.subr.mxu0 0.0
    %3357 = vmatpush1.msra.mxu0 0.0
    %3358 = vmatprep.subr.mxu0 0.0
    %3359 = vmatpush1.msra.mxu0 0.0
    %3360 = vmatprep.subr.mxu0 0.0
    %3361 = vmatpush1.msra.mxu0 0.0
    %3362 = vmatprep.subr.mxu0 0.0
    %3363 = vmatpush1.msra.mxu0 0.0
    %3364 = vmatprep.subr.mxu0 0.0
    %3365 = vmatpush1.msra.mxu0 0.0
    %3366 = vmatprep.subr.mxu0 0.0
    %3367 = vmatpush1.msra.mxu0 0.0
    %3368 = vmatprep.subr.mxu0 0.0
    %3369 = vmatpush1.msra.mxu0 0.0
    %3370 = vmatprep.subr.mxu0 0.0
    %3371 = vmatpush1.msra.mxu0 0.0
    %3372 = vmatprep.subr.mxu0 0.0
    %3373 = vmatpush1.msra.mxu0 0.0
    %3374 = vmatprep.subr.mxu0 0.0
    %3375 = vmatpush1.msra.mxu0 %v101
    %3376 = vmatprep.subr.mxu0 0.0
    %3377 = vmatpush1.msra.mxu0 %v100
    %3378 = vmatprep.subr.mxu0 0.0
    %3379 = vmatpush1.msra.mxu0 %v99
    %3380 = vmatprep.subr.mxu0 0.0
    %3381 = vmatpush1.msra.mxu0 %v98
    %3382 = vmatprep.subr.mxu0 0.0
    %3383 = vmatpush2.msra.mxu0 0.0
    %3384 = vmatprep.subr.mxu0 0.0
    %3385 = vmatpush2.msra.mxu0 0.0
    %3386 = vmatprep.subr.mxu0 0.0
    %3387 = vmatpush2.msra.mxu0 0.0
    %3388 = vmatprep.subr.mxu0 0.0
    %3389 = vmatpush2.msra.mxu0 0.0
    %3390 = vmatprep.subr.mxu0 0.0
    %3391 = vmatpush2.msra.mxu0 0.0
    %3392 = vmatprep.subr.mxu0 0.0
    %3393 = vmatpush2.msra.mxu0 0.0
    %3394 = vmatprep.subr.mxu0 0.0
    %3395 = vmatpush2.msra.mxu0 0.0
    %3396 = vmatprep.subr.mxu0 0.0
    %3397 = vmatpush2.msra.mxu0 0.0
    %3398 = vmatprep.subr.mxu0 0.0
    %3399 = vmatpush2.msra.mxu0 0.0
    %3400 = vmatprep.subr.mxu0 0.0
    %3401 = vmatpush2.msra.mxu0 0.0
    %3402 = vmatprep.subr.mxu0 0.0
    %3403 = vmatpush2.msra.mxu0 0.0
    %3404 = vmatprep.subr.mxu0 0.0
    %3405 = vmatpush2.msra.mxu0 0.0
    %3406 = vmatprep.subr.mxu0 0.0
    %3407 = vmatpush2.msra.mxu0 0.0
    %3408 = vmatprep.subr.mxu0 0.0
    %3409 = vmatpush2.msra.mxu0 0.0
    %3410 = vmatprep.subr.mxu0 0.0
    %3411 = vmatpush2.msra.mxu0 0.0
    %3412 = vmatprep.subr.mxu0 0.0
    %3413 = vmatpush2.msra.mxu0 0.0
    %3414 = vmatprep.mubr.f32.mxu0 0.0
    %3415 = vmatmul.mubr.f32.gmra.mxu0 %v3348
    %v3416 = vpop.f32.mrf.mxu0
    %v3417 = vadd.f32 %v149, %v3416
    %v3418 = vpop.f32.mrf.mxu0
    %3419 = vdwg.mxu0
    %v3420 = vmax.f32 %v3417, 0.0
    %v3421 = vsel %vm537, %v3420, 0.0
    %3422 = vadd.xlane.f32.xlu0 %v3421
    %v3423 = vpop.xlane.xlu0 %3422
    %v3424 = vmul.f32 %v3420, %v3420
    %v3425 = vsel %vm537, %v3424, 0.0
    %3426 = vadd.xlane.f32.xlu0 %v3425
    %v3427 = vpop.xlane.xlu0 %3426
    %v3428 = vmul.f32 %v3423, 0.03125
    %v3429 = vmul.f32 %v3427, 0.03125
    %v3430 = vmul.f32 %v3428, %v3428
    %v3431 = vsub.f32 %v3429, %v3430
    %v3432 = vsub.f32 %v3420, %v3428
    %v3433 = vadd.f32 %v3431, 1e-05
    %v3434 = vrsqrt.pop %v3433
    %v3435 = vmul.f32 %v3432, %v3434
    %v3436 = vmul.f32 %v3435, %v156
    %v3437 = vadd.f32 %v3436, %v163
    %s3438 = scalar_lea.vmem [#allocation3], 48
    %3439 = vst.msk [vmem:[%s3438] sm:$0xff] %vm537, %v3437
    %s3440 = scalar_lea.vmem %s0, 56
    %v3441 = vld [vmem:[%s3440] sm:$0xff]
    %s3442 = scalar_lea.vmem [#allocation2], 56
    %v3443 = vld [vmem:[%s3442] sm:$0xff]
    %v3444 = vsub.f32 %v3441, %v3443
    %v3445 = vadd.f32 %v3089, %v3444
    %v3447 = vsel %vm182, %v3445, 0
    %3449 = vmatprep.subr.mxu0 0.0
    %3450 = vmatpush1.msra.mxu0 0.0
    %3451 = vmatprep.subr.mxu0 0.0
    %3452 = vmatpush1.msra.mxu0 0.0
    %3453 = vmatprep.subr.mxu0 0.0
    %3454 = vmatpush1.msra.mxu0 0.0
    %3455 = vmatprep.subr.mxu0 0.0
    %3456 = vmatpush1.msra.mxu0 0.0
    %3457 = vmatprep.subr.mxu0 0.0
    %3458 = vmatpush1.msra.mxu0 0.0
    %3459 = vmatprep.subr.mxu0 0.0
    %3460 = vmatpush1.msra.mxu0 0.0
    %3461 = vmatprep.subr.mxu0 0.0
    %3462 = vmatpush1.msra.mxu0 0.0
    %3463 = vmatprep.subr.mxu0 0.0
    %3464 = vmatpush1.msra.mxu0 0.0
    %3465 = vmatprep.subr.mxu0 0.0
    %3466 = vmatpush1.msra.mxu0 0.0
    %3467 = vmatprep.subr.mxu0 0.0
    %3468 = vmatpush1.msra.mxu0 0.0
    %3469 = vmatprep.subr.mxu0 0.0
    %3470 = vmatpush1.msra.mxu0 0.0
    %3471 = vmatprep.subr.mxu0 0.0
    %3472 = vmatpush1.msra.mxu0 0.0
    %3473 = vmatprep.subr.mxu0 0.0
    %3474 = vmatpush1.msra.mxu0 0.0
    %3475 = vmatprep.subr.mxu0 0.0
    %3476 = vmatpush1.msra.mxu0 0.0
    %3477 = vmatprep.subr.mxu0 0.0
    %3478 = vmatpush1.msra.mxu0 %v87
    %3479 = vmatprep.subr.mxu0 0.0
    %3480 = vmatpush1.msra.mxu0 %v86
    %3481 = vmatprep.subr.mxu0 0.0
    %3482 = vmatpush2.msra.mxu0 0.0
    %3483 = vmatprep.subr.mxu0 0.0
    %3484 = vmatpush2.msra.mxu0 0.0
    %3485 = vmatprep.subr.mxu0 0.0
    %3486 = vmatpush2.msra.mxu0 0.0
    %3487 = vmatprep.subr.mxu0 0.0
    %3488 = vmatpush2.msra.mxu0 0.0
    %3489 = vmatprep.subr.mxu0 0.0
    %3490 = vmatpush2.msra.mxu0 0.0
    %3491 = vmatprep.subr.mxu0 0.0
    %3492 = vmatpush2.msra.mxu0 0.0
    %3493 = vmatprep.subr.mxu0 0.0
    %3494 = vmatpush2.msra.mxu0 0.0
    %3495 = vmatprep.subr.mxu0 0.0
    %3496 = vmatpush2.msra.mxu0 0.0
    %3497 = vmatprep.subr.mxu0 0.0
    %3498 = vmatpush2.msra.mxu0 0.0
    %3499 = vmatprep.subr.mxu0 0.0
    %3500 = vmatpush2.msra.mxu0 0.0
    %3501 = vmatprep.subr.mxu0 0.0
    %3502 = vmatpush2.msra.mxu0 0.0
    %3503 = vmatprep.subr.mxu0 0.0
    %3504 = vmatpush2.msra.mxu0 0.0
    %3505 = vmatprep.subr.mxu0 0.0
    %3506 = vmatpush2.msra.mxu0 0.0
    %3507 = vmatprep.subr.mxu0 0.0
    %3508 = vmatpush2.msra.mxu0 0.0
    %3509 = vmatprep.subr.mxu0 0.0
    %3510 = vmatpush2.msra.mxu0 0.0
    %3511 = vmatprep.subr.mxu0 0.0
    %3512 = vmatpush2.msra.mxu0 0.0
    %3513 = vmatprep.mubr.f32.mxu0 0.0
    %3514 = vmatmul.mubr.f32.gmra.mxu0 %v3447
    %v3515 = vpop.f32.mrf.mxu0
    %v3516 = vadd.f32 %v107, %v3515
    %v3517 = vpop.f32.mrf.mxu0
    %3518 = vdwg.mxu0
    %v3519 = vxor.u32 %v3516, 2147483648
    %v3520 = vmul.f32 %v3519, 1.442695
    %v3521 = vpow.pop %v3520
    %v3522 = vadd.f32 %v3521, 1.0
    %v3523 = vrcp.pop %v3522
    %v3524 = vmul.f32 1.0, %v3523
    %v3525 = vmul.f32 %v3445, %v3524
    %v3526 = vadd.f32 %v3443, %v3525
    %v3528 = vsel %vm182, %v3526, 0
    %3530 = vmatprep.subr.mxu0 0.0
    %3531 = vmatpush1.msra.mxu0 0.0
    %3532 = vmatprep.subr.mxu0 0.0
    %3533 = vmatpush1.msra.mxu0 0.0
    %3534 = vmatprep.subr.mxu0 0.0
    %3535 = vmatpush1.msra.mxu0 0.0
    %3536 = vmatprep.subr.mxu0 0.0
    %3537 = vmatpush1.msra.mxu0 0.0
    %3538 = vmatprep.subr.mxu0 0.0
    %3539 = vmatpush1.msra.mxu0 0.0
    %3540 = vmatprep.subr.mxu0 0.0
    %3541 = vmatpush1.msra.mxu0 0.0
    %3542 = vmatprep.subr.mxu0 0.0
    %3543 = vmatpush1.msra.mxu0 0.0
    %3544 = vmatprep.subr.mxu0 0.0
    %3545 = vmatpush1.msra.mxu0 0.0
    %3546 = vmatprep.subr.mxu0 0.0
    %3547 = vmatpush1.msra.mxu0 0.0
    %3548 = vmatprep.subr.mxu0 0.0
    %3549 = vmatpush1.msra.mxu0 0.0
    %3550 = vmatprep.subr.mxu0 0.0
    %3551 = vmatpush1.msra.mxu0 0.0
    %3552 = vmatprep.subr.mxu0 0.0
    %3553 = vmatpush1.msra.mxu0 0.0
    %3554 = vmatprep.subr.mxu0 0.0
    %3555 = vmatpush1.msra.mxu0 0.0
    %3556 = vmatprep.subr.mxu0 0.0
    %3557 = vmatpush1.msra.mxu0 0.0
    %3558 = vmatprep.subr.mxu0 0.0
    %3559 = vmatpush1.msra.mxu0 %v89
    %3560 = vmatprep.subr.mxu0 0.0
    %3561 = vmatpush1.msra.mxu0 %v88
    %3562 = vmatprep.subr.mxu0 0.0
    %3563 = vmatpush2.msra.mxu0 0.0
    %3564 = vmatprep.subr.mxu0 0.0
    %3565 = vmatpush2.msra.mxu0 0.0
    %3566 = vmatprep.subr.mxu0 0.0
    %3567 = vmatpush2.msra.mxu0 0.0
    %3568 = vmatprep.subr.mxu0 0.0
    %3569 = vmatpush2.msra.mxu0 0.0
    %3570 = vmatprep.subr.mxu0 0.0
    %3571 = vmatpush2.msra.mxu0 0.0
    %3572 = vmatprep.subr.mxu0 0.0
    %3573 = vmatpush2.msra.mxu0 0.0
    %3574 = vmatprep.subr.mxu0 0.0
    %3575 = vmatpush2.msra.mxu0 0.0
    %3576 = vmatprep.subr.mxu0 0.0
    %3577 = vmatpush2.msra.mxu0 0.0
    %3578 = vmatprep.subr.mxu0 0.0
    %3579 = vmatpush2.msra.mxu0 0.0
    %3580 = vmatprep.subr.mxu0 0.0
    %3581 = vmatpush2.msra.mxu0 0.0
    %3582 = vmatprep.subr.mxu0 0.0
    %3583 = vmatpush2.msra.mxu0 0.0
    %3584 = vmatprep.subr.mxu0 0.0
    %3585 = vmatpush2.msra.mxu0 0.0
    %3586 = vmatprep.subr.mxu0 0.0
    %3587 = vmatpush2.msra.mxu0 0.0
    %3588 = vmatprep.subr.mxu0 0.0
    %3589 = vmatpush2.msra.mxu0 0.0
    %3590 = vmatprep.subr.mxu0 0.0
    %3591 = vmatpush2.msra.mxu0 0.0
    %3592 = vmatprep.subr.mxu0 0.0
    %3593 = vmatpush2.msra.mxu0 0.0
    %3594 = vmatprep.mubr.f32.mxu0 0.0
    %3595 = vmatmul.mubr.f32.gmra.mxu0 %v3528
    %v3596 = vpop.f32.mrf.mxu0
    %v3597 = vadd.f32 %v114, %v3596
    %v3598 = vpop.f32.mrf.mxu0
    %3599 = vdwg.mxu0
    %v3600 = vmax.f32 %v3597, 0.0
    %v3601 = vsel %vm537, %v3600, 0.0
    %3602 = vadd.xlane.f32.xlu0 %v3601
    %v3603 = vpop.xlane.xlu0 %3602
    %v3604 = vmul.f32 %v3600, %v3600
    %v3605 = vsel %vm537, %v3604, 0.0
    %3606 = vadd.xlane.f32.xlu0 %v3605
    %v3607 = vpop.xlane.xlu0 %3606
    %v3608 = vmul.f32 %v3603, 0.03125
    %v3609 = vmul.f32 %v3607, 0.03125
    %v3610 = vmul.f32 %v3608, %v3608
    %v3611 = vsub.f32 %v3609, %v3610
    %v3612 = vsub.f32 %v3600, %v3608
    %v3613 = vadd.f32 %v3611, 1e-05
    %v3614 = vrsqrt.pop %v3613
    %v3615 = vmul.f32 %v3612, %v3614
    %v3616 = vmul.f32 %v3615, %v121
    %v3617 = vadd.f32 %v3616, %v128
    %v3619 = vsel %vm537, %v3617, 0
    %3621 = vmatprep.subr.mxu0 0.0
    %3622 = vmatpush1.msra.mxu0 0.0
    %3623 = vmatprep.subr.mxu0 0.0
    %3624 = vmatpush1.msra.mxu0 0.0
    %3625 = vmatprep.subr.mxu0 0.0
    %3626 = vmatpush1.msra.mxu0 0.0
    %3627 = vmatprep.subr.mxu0 0.0
    %3628 = vmatpush1.msra.mxu0 0.0
    %3629 = vmatprep.subr.mxu0 0.0
    %3630 = vmatpush1.msra.mxu0 0.0
    %3631 = vmatprep.subr.mxu0 0.0
    %3632 = vmatpush1.msra.mxu0 0.0
    %3633 = vmatprep.subr.mxu0 0.0
    %3634 = vmatpush1.msra.mxu0 0.0
    %3635 = vmatprep.subr.mxu0 0.0
    %3636 = vmatpush1.msra.mxu0 0.0
    %3637 = vmatprep.subr.mxu0 0.0
    %3638 = vmatpush1.msra.mxu0 0.0
    %3639 = vmatprep.subr.mxu0 0.0
    %3640 = vmatpush1.msra.mxu0 0.0
    %3641 = vmatprep.subr.mxu0 0.0
    %3642 = vmatpush1.msra.mxu0 0.0
    %3643 = vmatprep.subr.mxu0 0.0
    %3644 = vmatpush1.msra.mxu0 0.0
    %3645 = vmatprep.subr.mxu0 0.0
    %3646 = vmatpush1.msra.mxu0 %v93
    %3647 = vmatprep.subr.mxu0 0.0
    %3648 = vmatpush1.msra.mxu0 %v92
    %3649 = vmatprep.subr.mxu0 0.0
    %3650 = vmatpush1.msra.mxu0 %v91
    %3651 = vmatprep.subr.mxu0 0.0
    %3652 = vmatpush1.msra.mxu0 %v90
    %3653 = vmatprep.subr.mxu0 0.0
    %3654 = vmatpush2.msra.mxu0 0.0
    %3655 = vmatprep.subr.mxu0 0.0
    %3656 = vmatpush2.msra.mxu0 0.0
    %3657 = vmatprep.subr.mxu0 0.0
    %3658 = vmatpush2.msra.mxu0 0.0
    %3659 = vmatprep.subr.mxu0 0.0
    %3660 = vmatpush2.msra.mxu0 0.0
    %3661 = vmatprep.subr.mxu0 0.0
    %3662 = vmatpush2.msra.mxu0 0.0
    %3663 = vmatprep.subr.mxu0 0.0
    %3664 = vmatpush2.msra.mxu0 0.0
    %3665 = vmatprep.subr.mxu0 0.0
    %3666 = vmatpush2.msra.mxu0 0.0
    %3667 = vmatprep.subr.mxu0 0.0
    %3668 = vmatpush2.msra.mxu0 0.0
    %3669 = vmatprep.subr.mxu0 0.0
    %3670 = vmatpush2.msra.mxu0 0.0
    %3671 = vmatprep.subr.mxu0 0.0
    %3672 = vmatpush2.msra.mxu0 0.0
    %3673 = vmatprep.subr.mxu0 0.0
    %3674 = vmatpush2.msra.mxu0 0.0
    %3675 = vmatprep.subr.mxu0 0.0
    %3676 = vmatpush2.msra.mxu0 0.0
    %3677 = vmatprep.subr.mxu0 0.0
    %3678 = vmatpush2.msra.mxu0 0.0
    %3679 = vmatprep.subr.mxu0 0.0
    %3680 = vmatpush2.msra.mxu0 0.0
    %3681 = vmatprep.subr.mxu0 0.0
    %3682 = vmatpush2.msra.mxu0 0.0
    %3683 = vmatprep.subr.mxu0 0.0
    %3684 = vmatpush2.msra.mxu0 0.0
    %3685 = vmatprep.mubr.f32.mxu0 0.0
    %3686 = vmatmul.mubr.f32.gmra.mxu0 %v3619
    %v3687 = vpop.f32.mrf.mxu0
    %v3688 = vadd.f32 %v135, %v3687
    %v3689 = vpop.f32.mrf.mxu0
    %3690 = vdwg.mxu0
    %v3691 = vxor.u32 %v3688, 2147483648
    %v3692 = vmul.f32 %v3691, 1.442695
    %v3693 = vpow.pop %v3692
    %v3694 = vadd.f32 %v3693, 1.0
    %v3695 = vrcp.pop %v3694
    %v3696 = vmul.f32 1.0, %v3695
    %v3697 = vmul.f32 %v3617, %v3696
    %v3698 = vsub.f32 %v3617, %v3697
    %v3699 = vadd.f32 %v3345, %v3698
    %v3701 = vsel %vm537, %v3699, 0
    %3703 = vmatprep.subr.mxu0 0.0
    %3704 = vmatpush1.msra.mxu0 0.0
    %3705 = vmatprep.subr.mxu0 0.0
    %3706 = vmatpush1.msra.mxu0 0.0
    %3707 = vmatprep.subr.mxu0 0.0
    %3708 = vmatpush1.msra.mxu0 0.0
    %3709 = vmatprep.subr.mxu0 0.0
    %3710 = vmatpush1.msra.mxu0 0.0
    %3711 = vmatprep.subr.mxu0 0.0
    %3712 = vmatpush1.msra.mxu0 0.0
    %3713 = vmatprep.subr.mxu0 0.0
    %3714 = vmatpush1.msra.mxu0 0.0
    %3715 = vmatprep.subr.mxu0 0.0
    %3716 = vmatpush1.msra.mxu0 0.0
    %3717 = vmatprep.subr.mxu0 0.0
    %3718 = vmatpush1.msra.mxu0 0.0
    %3719 = vmatprep.subr.mxu0 0.0
    %3720 = vmatpush1.msra.mxu0 0.0
    %3721 = vmatprep.subr.mxu0 0.0
    %3722 = vmatpush1.msra.mxu0 0.0
    %3723 = vmatprep.subr.mxu0 0.0
    %3724 = vmatpush1.msra.mxu0 0.0
    %3725 = vmatprep.subr.mxu0 0.0
    %3726 = vmatpush1.msra.mxu0 0.0
    %3727 = vmatprep.subr.mxu0 0.0
    %3728 = vmatpush1.msra.mxu0 %v97
    %3729 = vmatprep.subr.mxu0 0.0
    %3730 = vmatpush1.msra.mxu0 %v96
    %3731 = vmatprep.subr.mxu0 0.0
    %3732 = vmatpush1.msra.mxu0 %v95
    %3733 = vmatprep.subr.mxu0 0.0
    %3734 = vmatpush1.msra.mxu0 %v94
    %3735 = vmatprep.subr.mxu0 0.0
    %3736 = vmatpush2.msra.mxu0 0.0
    %3737 = vmatprep.subr.mxu0 0.0
    %3738 = vmatpush2.msra.mxu0 0.0
    %3739 = vmatprep.subr.mxu0 0.0
    %3740 = vmatpush2.msra.mxu0 0.0
    %3741 = vmatprep.subr.mxu0 0.0
    %3742 = vmatpush2.msra.mxu0 0.0
    %3743 = vmatprep.subr.mxu0 0.0
    %3744 = vmatpush2.msra.mxu0 0.0
    %3745 = vmatprep.subr.mxu0 0.0
    %3746 = vmatpush2.msra.mxu0 0.0
    %3747 = vmatprep.subr.mxu0 0.0
    %3748 = vmatpush2.msra.mxu0 0.0
    %3749 = vmatprep.subr.mxu0 0.0
    %3750 = vmatpush2.msra.mxu0 0.0
    %3751 = vmatprep.subr.mxu0 0.0
    %3752 = vmatpush2.msra.mxu0 0.0
    %3753 = vmatprep.subr.mxu0 0.0
    %3754 = vmatpush2.msra.mxu0 0.0
    %3755 = vmatprep.subr.mxu0 0.0
    %3756 = vmatpush2.msra.mxu0 0.0
    %3757 = vmatprep.subr.mxu0 0.0
    %3758 = vmatpush2.msra.mxu0 0.0
    %3759 = vmatprep.subr.mxu0 0.0
    %3760 = vmatpush2.msra.mxu0 0.0
    %3761 = vmatprep.subr.mxu0 0.0
    %3762 = vmatpush2.msra.mxu0 0.0
    %3763 = vmatprep.subr.mxu0 0.0
    %3764 = vmatpush2.msra.mxu0 0.0
    %3765 = vmatprep.subr.mxu0 0.0
    %3766 = vmatpush2.msra.mxu0 0.0
    %3767 = vmatprep.mubr.f32.mxu0 0.0
    %3768 = vmatmul.mubr.f32.gmra.mxu0 %v3701
    %v3769 = vpop.f32.mrf.mxu0
    %v3770 = vadd.f32 %v142, %v3769
    %v3771 = vpop.f32.mrf.mxu0
    %3772 = vdwg.mxu0
    %v3773 = vxor.u32 %v3770, 2147483648
    %v3774 = vmul.f32 %v3773, 1.442695
    %v3775 = vpow.pop %v3774
    %v3776 = vadd.f32 %v3775, 1.0
    %v3777 = vrcp.pop %v3776
    %v3778 = vmul.f32 1.0, %v3777
    %v3779 = vmul.f32 %v3699, %v3778
    %v3780 = vadd.f32 %v3697, %v3779
    %v3782 = vsel %vm537, %v3780, 0
    %3784 = vmatprep.subr.mxu0 0.0
    %3785 = vmatpush1.msra.mxu0 0.0
    %3786 = vmatprep.subr.mxu0 0.0
    %3787 = vmatpush1.msra.mxu0 0.0
    %3788 = vmatprep.subr.mxu0 0.0
    %3789 = vmatpush1.msra.mxu0 0.0
    %3790 = vmatprep.subr.mxu0 0.0
    %3791 = vmatpush1.msra.mxu0 0.0
    %3792 = vmatprep.subr.mxu0 0.0
    %3793 = vmatpush1.msra.mxu0 0.0
    %3794 = vmatprep.subr.mxu0 0.0
    %3795 = vmatpush1.msra.mxu0 0.0
    %3796 = vmatprep.subr.mxu0 0.0
    %3797 = vmatpush1.msra.mxu0 0.0
    %3798 = vmatprep.subr.mxu0 0.0
    %3799 = vmatpush1.msra.mxu0 0.0
    %3800 = vmatprep.subr.mxu0 0.0
    %3801 = vmatpush1.msra.mxu0 0.0
    %3802 = vmatprep.subr.mxu0 0.0
    %3803 = vmatpush1.msra.mxu0 0.0
    %3804 = vmatprep.subr.mxu0 0.0
    %3805 = vmatpush1.msra.mxu0 0.0
    %3806 = vmatprep.subr.mxu0 0.0
    %3807 = vmatpush1.msra.mxu0 0.0
    %3808 = vmatprep.subr.mxu0 0.0
    %3809 = vmatpush1.msra.mxu0 %v101
    %3810 = vmatprep.subr.mxu0 0.0
    %3811 = vmatpush1.msra.mxu0 %v100
    %3812 = vmatprep.subr.mxu0 0.0
    %3813 = vmatpush1.msra.mxu0 %v99
    %3814 = vmatprep.subr.mxu0 0.0
    %3815 = vmatpush1.msra.mxu0 %v98
    %3816 = vmatprep.subr.mxu0 0.0
    %3817 = vmatpush2.msra.mxu0 0.0
    %3818 = vmatprep.subr.mxu0 0.0
    %3819 = vmatpush2.msra.mxu0 0.0
    %3820 = vmatprep.subr.mxu0 0.0
    %3821 = vmatpush2.msra.mxu0 0.0
    %3822 = vmatprep.subr.mxu0 0.0
    %3823 = vmatpush2.msra.mxu0 0.0
    %3824 = vmatprep.subr.mxu0 0.0
    %3825 = vmatpush2.msra.mxu0 0.0
    %3826 = vmatprep.subr.mxu0 0.0
    %3827 = vmatpush2.msra.mxu0 0.0
    %3828 = vmatprep.subr.mxu0 0.0
    %3829 = vmatpush2.msra.mxu0 0.0
    %3830 = vmatprep.subr.mxu0 0.0
    %3831 = vmatpush2.msra.mxu0 0.0
    %3832 = vmatprep.subr.mxu0 0.0
    %3833 = vmatpush2.msra.mxu0 0.0
    %3834 = vmatprep.subr.mxu0 0.0
    %3835 = vmatpush2.msra.mxu0 0.0
    %3836 = vmatprep.subr.mxu0 0.0
    %3837 = vmatpush2.msra.mxu0 0.0
    %3838 = vmatprep.subr.mxu0 0.0
    %3839 = vmatpush2.msra.mxu0 0.0
    %3840 = vmatprep.subr.mxu0 0.0
    %3841 = vmatpush2.msra.mxu0 0.0
    %3842 = vmatprep.subr.mxu0 0.0
    %3843 = vmatpush2.msra.mxu0 0.0
    %3844 = vmatprep.subr.mxu0 0.0
    %3845 = vmatpush2.msra.mxu0 0.0
    %3846 = vmatprep.subr.mxu0 0.0
    %3847 = vmatpush2.msra.mxu0 0.0
    %3848 = vmatprep.mubr.f32.mxu0 0.0
    %3849 = vmatmul.mubr.f32.gmra.mxu0 %v3782
    %v3850 = vpop.f32.mrf.mxu0
    %v3851 = vadd.f32 %v149, %v3850
    %v3852 = vpop.f32.mrf.mxu0
    %3853 = vdwg.mxu0
    %v3854 = vmax.f32 %v3851, 0.0
    %v3855 = vsel %vm537, %v3854, 0.0
    %3856 = vadd.xlane.f32.xlu0 %v3855
    %v3857 = vpop.xlane.xlu0 %3856
    %v3858 = vmul.f32 %v3854, %v3854
    %v3859 = vsel %vm537, %v3858, 0.0
    %3860 = vadd.xlane.f32.xlu0 %v3859
    %v3861 = vpop.xlane.xlu0 %3860
    %v3862 = vmul.f32 %v3857, 0.03125
    %v3863 = vmul.f32 %v3861, 0.03125
    %v3864 = vmul.f32 %v3862, %v3862
    %v3865 = vsub.f32 %v3863, %v3864
    %v3866 = vsub.f32 %v3854, %v3862
    %v3867 = vadd.f32 %v3865, 1e-05
    %v3868 = vrsqrt.pop %v3867
    %v3869 = vmul.f32 %v3866, %v3868
    %v3870 = vmul.f32 %v3869, %v156
    %v3871 = vadd.f32 %v3870, %v163
    %s3872 = scalar_lea.vmem [#allocation3], 56
    %3873 = vst.msk [vmem:[%s3872] sm:$0xff] %vm537, %v3871
    %v3874 = vld [vmem:[#allocation3] sm:$0xff]
    %v3875 = vld [vmem:[#allocation3 + $0x8] sm:$0xff]
    %v3876 = vld [vmem:[#allocation3 + $0x10] sm:$0xff]
    %v3877 = vld [vmem:[#allocation3 + $0x18] sm:$0xff]
    %v3878 = vld [vmem:[#allocation3 + $0x20] sm:$0xff]
    %v3879 = vld [vmem:[#allocation3 + $0x28] sm:$0xff]
    %v3880 = vld [vmem:[#allocation3 + $0x30] sm:$0xff]
    %v3881 = vld [vmem:[#allocation3 + $0x38] sm:$0xff]
    %v3882 = vld [vmem:[%s17] sm:$0xff]
    %v3883 = vld [vmem:[%s17 + $0x8] sm:$0xff]
    %v3884 = vld [vmem:[%s17 + $0x10] sm:$0xff]
    %v3885 = vld [vmem:[%s17 + $0x18] sm:$0xff]
    %v3886 = vld [vmem:[#allocation6] sm:$0x1]
    %v3888 = vlaneseq
    %v3889 = vshrl.u32 %v3888, 7
    %v3890 = vsub.s32 0, %v3889
    %v3891 = vrot.slane %v3886, %v3890
    %v3894 = vsel %vm537, %v3874, 0
    %v3897 = vsel %vm537, %v3875, 0
    %v3900 = vsel %vm537, %v3876, 0
    %v3903 = vsel %vm537, %v3877, 0
    %v3906 = vsel %vm537, %v3878, 0
    %v3909 = vsel %vm537, %v3879, 0
    %v3912 = vsel %vm537, %v3880, 0
    %v3915 = vsel %vm537, %v3881, 0
    %3917 = vmatprep.subr.mxu0 0.0
    %3918 = vmatpush1.msra.mxu0 0.0
    %3919 = vmatprep.subr.mxu0 0.0
    %3920 = vmatpush1.msra.mxu0 0.0
    %3921 = vmatprep.subr.mxu0 0.0
    %3922 = vmatpush1.msra.mxu0 0.0
    %3923 = vmatprep.subr.mxu0 0.0
    %3924 = vmatpush1.msra.mxu0 0.0
    %3925 = vmatprep.subr.mxu0 0.0
    %3926 = vmatpush1.msra.mxu0 0.0
    %3927 = vmatprep.subr.mxu0 0.0
    %3928 = vmatpush1.msra.mxu0 0.0
    %3929 = vmatprep.subr.mxu0 0.0
    %3930 = vmatpush1.msra.mxu0 0.0
    %3931 = vmatprep.subr.mxu0 0.0
    %3932 = vmatpush1.msra.mxu0 0.0
    %3933 = vmatprep.subr.mxu0 0.0
    %3934 = vmatpush1.msra.mxu0 0.0
    %3935 = vmatprep.subr.mxu0 0.0
    %3936 = vmatpush1.msra.mxu0 0.0
    %3937 = vmatprep.subr.mxu0 0.0
    %3938 = vmatpush1.msra.mxu0 0.0
    %3939 = vmatprep.subr.mxu0 0.0
    %3940 = vmatpush1.msra.mxu0 0.0
    %3941 = vmatprep.subr.mxu0 0.0
    %3942 = vmatpush1.msra.mxu0 %v3885
    %3943 = vmatprep.subr.mxu0 0.0
    %3944 = vmatpush1.msra.mxu0 %v3884
    %3945 = vmatprep.subr.mxu0 0.0
    %3946 = vmatpush1.msra.mxu0 %v3883
    %3947 = vmatprep.subr.mxu0 0.0
    %3948 = vmatpush1.msra.mxu0 %v3882
    %3949 = vmatprep.subr.mxu0 0.0
    %3950 = vmatpush2.msra.mxu0 0.0
    %3951 = vmatprep.subr.mxu0 0.0
    %3952 = vmatpush2.msra.mxu0 0.0
    %3953 = vmatprep.subr.mxu0 0.0
    %3954 = vmatpush2.msra.mxu0 0.0
    %3955 = vmatprep.subr.mxu0 0.0
    %3956 = vmatpush2.msra.mxu0 0.0
    %3957 = vmatprep.subr.mxu0 0.0
    %3958 = vmatpush2.msra.mxu0 0.0
    %3959 = vmatprep.subr.mxu0 0.0
    %3960 = vmatpush2.msra.mxu0 0.0
    %3961 = vmatprep.subr.mxu0 0.0
    %3962 = vmatpush2.msra.mxu0 0.0
    %3963 = vmatprep.subr.mxu0 0.0
    %3964 = vmatpush2.msra.mxu0 0.0
    %3965 = vmatprep.subr.mxu0 0.0
    %3966 = vmatpush2.msra.mxu0 0.0
    %3967 = vmatprep.subr.mxu0 0.0
    %3968 = vmatpush2.msra.mxu0 0.0
    %3969 = vmatprep.subr.mxu0 0.0
    %3970 = vmatpush2.msra.mxu0 0.0
    %3971 = vmatprep.subr.mxu0 0.0
    %3972 = vmatpush2.msra.mxu0 0.0
    %3973 = vmatprep.subr.mxu0 0.0
    %3974 = vmatpush2.msra.mxu0 0.0
    %3975 = vmatprep.subr.mxu0 0.0
    %3976 = vmatpush2.msra.mxu0 0.0
    %3977 = vmatprep.subr.mxu0 0.0
    %3978 = vmatpush2.msra.mxu0 0.0
    %3979 = vmatprep.subr.mxu0 0.0
    %3980 = vmatpush2.msra.mxu0 0.0
    %3981 = vmatprep.mubr.f32.mxu0 0.0
    %3982 = vmatmul.mubr.f32.gmra.mxu0 %v3894
    %v3983 = vpop.f32.mrf.mxu0
    %v3984 = vadd.f32 %v3891, %v3983
    %v3985 = vpop.f32.mrf.mxu0
    %3986 = vmatprep.mubr.f32.mxu0 0.0
    %3987 = vmatmul.mubr.f32.gmra.mxu0 %v3897
    %v3988 = vpop.f32.mrf.mxu0
    %v3989 = vadd.f32 %v3891, %v3988
    %v3990 = vpop.f32.mrf.mxu0
    %3991 = vmatprep.mubr.f32.mxu0 0.0
    %3992 = vmatmul.mubr.f32.gmra.mxu0 %v3900
    %v3993 = vpop.f32.mrf.mxu0
    %v3994 = vadd.f32 %v3891, %v3993
    %v3995 = vpop.f32.mrf.mxu0
    %3996 = vmatprep.mubr.f32.mxu0 0.0
    %3997 = vmatmul.mubr.f32.gmra.mxu0 %v3903
    %v3998 = vpop.f32.mrf.mxu0
    %v3999 = vadd.f32 %v3891, %v3998
    %v4000 = vpop.f32.mrf.mxu0
    %4001 = vmatprep.mubr.f32.mxu0 0.0
    %4002 = vmatmul.mubr.f32.gmra.mxu0 %v3906
    %v4003 = vpop.f32.mrf.mxu0
    %v4004 = vadd.f32 %v3891, %v4003
    %v4005 = vpop.f32.mrf.mxu0
    %4006 = vmatprep.mubr.f32.mxu0 0.0
    %4007 = vmatmul.mubr.f32.gmra.mxu0 %v3909
    %v4008 = vpop.f32.mrf.mxu0
    %v4009 = vadd.f32 %v3891, %v4008
    %v4010 = vpop.f32.mrf.mxu0
    %4011 = vmatprep.mubr.f32.mxu0 0.0
    %4012 = vmatmul.mubr.f32.gmra.mxu0 %v3912
    %v4013 = vpop.f32.mrf.mxu0
    %v4014 = vadd.f32 %v3891, %v4013
    %v4015 = vpop.f32.mrf.mxu0
    %4016 = vmatprep.mubr.f32.mxu0 0.0
    %4017 = vmatmul.mubr.f32.gmra.mxu0 %v3915
    %v4018 = vpop.f32.mrf.mxu0
    %v4019 = vadd.f32 %v3891, %v4018
    %v4020 = vpop.f32.mrf.mxu0
    %4021 = vdwg.mxu0
    %vm4022 = vcmask 64512
    %4023 = vst.msk [vmem:[%s19] sm:$0xff] %vm4022, %v3984
    %4024 = vst.msk [vmem:[%s19 + $0x8] sm:$0xff] %vm4022, %v3989
    %4025 = vst.msk [vmem:[%s19 + $0x10] sm:$0xff] %vm4022, %v3994
    %4026 = vst.msk [vmem:[%s19 + $0x18] sm:$0xff] %vm4022, %v3999
    %4027 = vst.msk [vmem:[%s19 + $0x20] sm:$0xff] %vm4022, %v4004
    %4028 = vst.msk [vmem:[%s19 + $0x28] sm:$0xff] %vm4022, %v4009
    %4029 = vst.msk [vmem:[%s19 + $0x30] sm:$0xff] %vm4022, %v4014
    %4030 = vst.msk [vmem:[%s19 + $0x38] sm:$0xff] %vm4022, %v4019
    // Predicated region
    $region86: #{delayed_mlp_forward.1} parent=1 // pred_check
      _
    $region87: #{delayed_mlp_forward.1} parent=1 // pred_check_branch
      %4032 = sbr.rel (0) target = $region89
    $region88: #{delayed_mlp_forward.1} parent=1 // pred_region
      _
    $region89: #{delayed_mlp_forward.1} parent=1 // pred_fallthru
      _
    // Predicated region
    $region90: #{delayed_mlp_forward.1} parent=1 // pred_check
      _
    $region91: #{delayed_mlp_forward.1} parent=1 // pred_check_branch
      %4034 = sbr.rel (0) target = $region93
    $region92: #{delayed_mlp_forward.1} parent=1 // pred_region
      _
    $region93: #{delayed_mlp_forward.1} parent=1 // pred_fallthru
      _
    %4035 = vsyncpa [#allocation5], 1
    %4036 = vsyncpa [#allocation7], 1

</llo_original>
